<compile_context>
chip_gen: v6e
topology: v6e:2x2x1
jax: 0.10.0
libtpu: 0.0.40
codegen_flags: <defaults>
</compile_context>

<pallas_src>
import functools

import numpy as np
import jax
import jax.numpy as jnp
from jax import lax
from jax.experimental import pallas as pl
from jax.experimental.pallas import tpu as pltpu


def _gauss_taps_1d(size, sigma):
    """Normalized 1-D taps whose outer product equals the torch 3-D window."""
    t = np.arange(-size // 2 + 1, size // 2 + 1, dtype=np.float64)
    g = np.exp(-(t * t) / (3.0 * sigma * sigma))
    g = g / g.sum()
    return tuple(float(v) for v in g)


def _conv1d_valid(x, taps, axis):
    """Valid 1-D convolution along `axis` as a static shifted-slice sum (VPU)."""
    n = len(taps)
    ax = axis % x.ndim
    out = x.shape[ax] - n + 1

    def window(k):
        idx = [slice(None)] * x.ndim
        idx[ax] = slice(k, k + out)
        return x[tuple(idx)]

    acc = taps[0] * window(0)
    for k in range(1, n):
        acc = acc + taps[k] * window(k)
    return acc


def _gauss3d_valid(x, taps):
    """Separable 3-D Gaussian 'valid' convolution over the last three axes.

    D first (cross-vreg offsets, cheap) on the full volume; W (lane shifts,
    expensive) last on the smallest volume.
    """
    x = _conv1d_valid(x, taps, axis=-3)   # D
    x = _conv1d_valid(x, taps, axis=-2)   # H (sublanes)
    x = _conv1d_valid(x, taps, axis=-1)   # W (lanes)
    return x


def _image_ae_loss_kernel(img_ref, org_ref, out_ref, *, taps, c1, c2):
    # Block shape is (1, 1, D, H, W): drop the singleton batch/channel dims and
    # cast to f32 in-kernel (inputs may arrive in a narrower dtype).
    a = img_ref[0, 0].astype(jnp.float32)   # (D, H, W)
    b = org_ref[0, 0].astype(jnp.float32)

    # ---- MSE + TV partial sums (on r = img - org) --------------------------
    r = a - b
    sq_sum = jnp.sum(r * r)
    dd = r[1:, :, :] - r[:-1, :, :]
    tv_d = jnp.sum(dd * dd)
    dh = r[:, 1:, :] - r[:, :-1, :]
    tv_h = jnp.sum(dh * dh)
    dw = r[:, :, 1:] - r[:, :, :-1]
    tv_w = jnp.sum(dw * dw)

    # ---- SSIM partial sum: blur the 5 needed fields in one separable pass ---
    stacked = jnp.stack([a, b, a * a, b * b, a * b], axis=0)   # (5, D, H, W)
    g = _gauss3d_valid(stacked, taps)                          # (5, Do, Ho, Wo)
    mu1, mu2 = g[0], g[1]
    mu1_sq = mu1 * mu1
    mu2_sq = mu2 * mu2
    mu1_mu2 = mu1 * mu2
    sigma1_sq = g[2] - mu1_sq
    sigma2_sq = g[3] - mu2_sq
    sigma1_2 = g[4] - mu1_mu2
    ssim_map = ((2.0 * mu1_mu2 + c1) * (2.0 * sigma1_2 + c2)) / (
        (mu1_sq + mu2_sq + c1) * (sigma1_sq + sigma2_sq + c2))
    ssim_sum = jnp.sum(ssim_map)

    # ---- Emit partial sums as one lane-dense (8, 128) tile ------------------
    row = lax.broadcasted_iota(jnp.int32, (8, 128), 0)
    out = jnp.where(row == 0, sq_sum, 0.0)
    out = out + jnp.where(row == 1, tv_d, 0.0)
    out = out + jnp.where(row == 2, tv_h, 0.0)
    out = out + jnp.where(row == 3, tv_w, 0.0)
    out = out + jnp.where(row == 4, ssim_sum, 0.0)
    out_ref[0] = out.astype(jnp.float32)


def image_ae_loss(img, org, *, k1=0.01, k2=0.03, L=2, window_size=11, sigma=1.5):
    """Pallas implementation of ImageAELoss.forward(img, org). Inputs NCDHW."""
    assert img.shape == org.shape
    N, C, D, H, W = img.shape
    # SSIM's conv3d uses a single-channel 11^3 window, which requires C == 1
    # (the original torch module would error otherwise).
    assert C == 1, "ImageAELoss's SSIM term requires single-channel NCDHW input"
    assert min(D, H, W) >= window_size

    taps = _gauss_taps_1d(window_size, sigma)
    c1 = float((k1 * L) ** 2)
    c2 = float((k2 * L) ** 2)
    kernel = functools.partial(_image_ae_loss_kernel, taps=taps, c1=c1, c2=c2)

    # TODO(synk): for volumes whose single (D, H, W) block exceeds scoped VMEM
    # (e.g. v7x's 64 MiB), add a second grid axis over D with a
    # (window_size - 1)-voxel halo; at the sizes used here one batch element
    # per grid step fits comfortably.
    partials = pl.pallas_call(
        kernel,
        out_shape=jax.ShapeDtypeStruct((N, 8, 128), jnp.float32),
        grid=(N,),
        in_specs=[
            pl.BlockSpec((1, 1, D, H, W), lambda n: (n, 0, 0, 0, 0)),
            pl.BlockSpec((1, 1, D, H, W), lambda n: (n, 0, 0, 0, 0)),
        ],
        out_specs=pl.BlockSpec((1, 8, 128), lambda n: (n, 0, 0)),
        compiler_params=pltpu.CompilerParams(
            dimension_semantics=("parallel",)),
    )(img, org)

    p = partials[:, :, 0]                    # (N, 8) per-sample partial sums
    sq_sum = jnp.sum(p[:, 0])
    tv_d = jnp.sum(p[:, 1])
    tv_h = jnp.sum(p[:, 2])
    tv_w = jnp.sum(p[:, 3])
    ssim_sum = jnp.sum(p[:, 4])

    mse = sq_sum / (N * C * D * H * W)
    tv = (tv_d / (N * C * (D - 1) * H * W)
          + tv_h / (N * C * D * (H - 1) * W)
          + tv_w / (N * C * D * H * (W - 1)))
    Do, Ho, Wo = D - window_size + 1, H - window_size + 1, W - window_size + 1
    ssim = 1.0 - ssim_sum / (N * C * Do * Ho * Wo)
    return 40.0 * mse + 20.0 * tv + ssim


# ---------------- pure-JAX reference (for verification only) ----------------
def _ref_image_ae_loss(img, org, k1=0.01, k2=0.03, L=2, window_size=11, sigma=1.5):
    img = img.astype(jnp.float32)
    org = org.astype(jnp.float32)

    mse = jnp.mean((img - org) ** 2)

    r = img - org
    tv = (jnp.mean((r[:, :, 1:] - r[:, :, :-1]) ** 2)
          + jnp.mean((r[:, :, :, 1:] - r[:, :, :, :-1]) ** 2)
          + jnp.mean((r[:, :, :, :, 1:] - r[:, :, :, :, :-1]) ** 2))

    x, y, z = np.mgrid[-window_size // 2 + 1:window_size // 2 + 1,
                       -window_size // 2 + 1:window_size // 2 + 1,
                       -window_size // 2 + 1:window_size // 2 + 1]
    g = np.exp(-((x ** 2 + y ** 2 + z ** 2) / (3.0 * sigma ** 2))).astype(np.float32)
    w = jnp.asarray(g / g.sum(), jnp.float32)[None, None]

    def conv(v):
        return lax.conv_general_dilated(
            v, w, window_strides=(1, 1, 1), padding=[(0, 0)] * 3,
            dimension_numbers=("NCDHW", "OIDHW", "NCDHW"))

    mu1, mu2 = conv(img), conv(org)
    mu1_sq, mu2_sq, mu1_mu2 = mu1 * mu1, mu2 * mu2, mu1 * mu2
    s1 = conv(img * img) - mu1_sq
    s2 = conv(org * org) - mu2_sq
    s12 = conv(img * org) - mu1_mu2
    c1 = (k1 * L) ** 2
    c2 = (k2 * L) ** 2
    ssim_map = (2 * mu1_mu2 + c1) * (2 * s12 + c2) / (
        (mu1_sq + mu2_sq + c1) * (s1 + s2 + c2))
    ssim = 1.0 - jnp.mean(ssim_map)
    return 40.0 * mse + 20.0 * tv + ssim


if __name__ == "__main__":
    key = jax.random.PRNGKey(0)
    ka, kb = jax.random.split(key)
    # NCDHW, C=1 (required by the SSIM window); W=128 lane-dense, H=16 sublane-aligned.
    shape = (2, 1, 16, 16, 128)
    img = jax.random.uniform(ka, shape, dtype=jnp.float32)
    org = jax.random.uniform(kb, shape, dtype=jnp.float32)

    loss = jax.block_until_ready(image_ae_loss(img, org))
    ref = jax.block_until_ready(_ref_image_ae_loss(img, org))
    assert np.allclose(np.asarray(loss), np.asarray(ref), rtol=2e-3, atol=2e-3), \
        f"mismatch: pallas={loss} ref={ref}"

    print("KERNEL_OK")
</pallas_src>

<mosaic_0001>
module attributes {stable_mosaic.version = 11 : i64} {
  func.func @_image_ae_loss_kernel(%arg0: i32, %arg1: memref<1x1x16x16x128xf32, #tpu.memory_space<vmem>>, %arg2: memref<1x1x16x16x128xf32, #tpu.memory_space<vmem>>, %arg3: memref<1x8x128xf32, #tpu.memory_space<vmem>>) attributes {dimension_semantics = [#tpu.dimension_semantics<parallel>], iteration_bounds = array<i64: 2>, scalar_prefetch = 0 : i64, scratch_operands = 0 : i64, tpu.core_type = #tpu.core_type<tc>, window_params = [{transform_indices = @transform_0, window_bounds = array<i64: 1, 1, 16, 16, 128>}, {transform_indices = @transform_1, window_bounds = array<i64: 1, 1, 16, 16, 128>}, {transform_indices = @transform_2, window_bounds = array<i64: 1, 8, 128>}]} {
    %c0 = arith.constant 0 : index
    %c0_0 = arith.constant 0 : index
    %c0_1 = arith.constant 0 : index
    %c0_2 = arith.constant 0 : index
    %c0_3 = arith.constant 0 : index
    %0 = vector.load %arg1[%c0, %c0_0, %c0_1, %c0_2, %c0_3] : memref<1x1x16x16x128xf32, #tpu.memory_space<vmem>>, vector<1x1x16x16x128xf32>
    %1 = vector.shape_cast %0 : vector<1x1x16x16x128xf32> to vector<16x16x128xf32>
    %c0_4 = arith.constant 0 : index
    %c0_5 = arith.constant 0 : index
    %c0_6 = arith.constant 0 : index
    %c0_7 = arith.constant 0 : index
    %c0_8 = arith.constant 0 : index
    %2 = vector.load %arg2[%c0_4, %c0_5, %c0_6, %c0_7, %c0_8] : memref<1x1x16x16x128xf32, #tpu.memory_space<vmem>>, vector<1x1x16x16x128xf32>
    %3 = vector.shape_cast %2 : vector<1x1x16x16x128xf32> to vector<16x16x128xf32>
    %4 = arith.subf %1, %3 : vector<16x16x128xf32>
    %5 = arith.mulf %4, %4 : vector<16x16x128xf32>
    %6 = vector.shape_cast %5 : vector<16x16x128xf32> to vector<1x16x16x128xf32>
    %cst = arith.constant dense<0.000000e+00> : vector<1xf32>
    %7 = vector.multi_reduction <add>, %6, %cst [1, 2, 3] : vector<1x16x16x128xf32> to vector<1xf32>
    %8 = vector.shape_cast %7 : vector<1xf32> to vector<1x1x1x1xf32>
    %9 = vector.extract %8[0, 0, 0, 0] : f32 from vector<1x1x1x1xf32>
    %10 = vector.extract_strided_slice %4 {offsets = [1, 0, 0], sizes = [15, 16, 128], strides = [1, 1, 1]} : vector<16x16x128xf32> to vector<15x16x128xf32>
    %11 = vector.extract_strided_slice %4 {offsets = [0, 0, 0], sizes = [15, 16, 128], strides = [1, 1, 1]} : vector<16x16x128xf32> to vector<15x16x128xf32>
    %12 = arith.subf %10, %11 : vector<15x16x128xf32>
    %13 = arith.mulf %12, %12 : vector<15x16x128xf32>
    %14 = vector.shape_cast %13 : vector<15x16x128xf32> to vector<1x15x16x128xf32>
    %cst_9 = arith.constant dense<0.000000e+00> : vector<1xf32>
    %15 = vector.multi_reduction <add>, %14, %cst_9 [1, 2, 3] : vector<1x15x16x128xf32> to vector<1xf32>
    %16 = vector.shape_cast %15 : vector<1xf32> to vector<1x1x1x1xf32>
    %17 = vector.extract %16[0, 0, 0, 0] : f32 from vector<1x1x1x1xf32>
    %18 = vector.extract_strided_slice %4 {offsets = [0, 1, 0], sizes = [16, 15, 128], strides = [1, 1, 1]} : vector<16x16x128xf32> to vector<16x15x128xf32>
    %19 = vector.extract_strided_slice %4 {offsets = [0, 0, 0], sizes = [16, 15, 128], strides = [1, 1, 1]} : vector<16x16x128xf32> to vector<16x15x128xf32>
    %20 = arith.subf %18, %19 : vector<16x15x128xf32>
    %21 = arith.mulf %20, %20 : vector<16x15x128xf32>
    %22 = vector.shape_cast %21 : vector<16x15x128xf32> to vector<1x16x15x128xf32>
    %cst_10 = arith.constant dense<0.000000e+00> : vector<1xf32>
    %23 = vector.multi_reduction <add>, %22, %cst_10 [1, 2, 3] : vector<1x16x15x128xf32> to vector<1xf32>
    %24 = vector.shape_cast %23 : vector<1xf32> to vector<1x1x1x1xf32>
    %25 = vector.extract %24[0, 0, 0, 0] : f32 from vector<1x1x1x1xf32>
    %26 = vector.extract_strided_slice %4 {offsets = [0, 0, 1], sizes = [16, 16, 127], strides = [1, 1, 1]} : vector<16x16x128xf32> to vector<16x16x127xf32>
    %27 = vector.extract_strided_slice %4 {offsets = [0, 0, 0], sizes = [16, 16, 127], strides = [1, 1, 1]} : vector<16x16x128xf32> to vector<16x16x127xf32>
    %28 = arith.subf %26, %27 : vector<16x16x127xf32>
    %29 = arith.mulf %28, %28 : vector<16x16x127xf32>
    %30 = vector.shape_cast %29 : vector<16x16x127xf32> to vector<1x16x16x127xf32>
    %cst_11 = arith.constant dense<0.000000e+00> : vector<1xf32>
    %31 = vector.multi_reduction <add>, %30, %cst_11 [1, 2, 3] : vector<1x16x16x127xf32> to vector<1xf32>
    %32 = vector.shape_cast %31 : vector<1xf32> to vector<1x1x1x1xf32>
    %33 = vector.extract %32[0, 0, 0, 0] : f32 from vector<1x1x1x1xf32>
    %34 = arith.mulf %1, %1 : vector<16x16x128xf32>
    %35 = arith.mulf %3, %3 : vector<16x16x128xf32>
    %36 = arith.mulf %1, %3 : vector<16x16x128xf32>
    %37 = vector.shape_cast %1 : vector<16x16x128xf32> to vector<1x16x16x128xf32>
    %38 = vector.shape_cast %3 : vector<16x16x128xf32> to vector<1x16x16x128xf32>
    %39 = vector.shape_cast %34 : vector<16x16x128xf32> to vector<1x16x16x128xf32>
    %40 = vector.shape_cast %35 : vector<16x16x128xf32> to vector<1x16x16x128xf32>
    %41 = vector.shape_cast %36 : vector<16x16x128xf32> to vector<1x16x16x128xf32>
    %42 = tpu.concatenate %37, %38, %39, %40, %41 in 0 : vector<1x16x16x128xf32>, vector<1x16x16x128xf32>, vector<1x16x16x128xf32>, vector<1x16x16x128xf32>, vector<1x16x16x128xf32> -> vector<5x16x16x128xf32>
    %43 = vector.extract_strided_slice %42 {offsets = [0, 0, 0, 0], sizes = [5, 6, 16, 128], strides = [1, 1, 1, 1]} : vector<5x16x16x128xf32> to vector<5x6x16x128xf32>
    %cst_12 = arith.constant 0.00536210556 : f32
    %44 = vector.broadcast %cst_12 : f32 to vector<5x6x16x128xf32>
    %45 = arith.mulf %44, %43 : vector<5x6x16x128xf32>
    %46 = vector.extract_strided_slice %42 {offsets = [0, 1, 0, 0], sizes = [5, 6, 16, 128], strides = [1, 1, 1, 1]} : vector<5x16x16x128xf32> to vector<5x6x16x128xf32>
    %cst_13 = arith.constant 0.0203420483 : f32
    %47 = vector.broadcast %cst_13 : f32 to vector<5x6x16x128xf32>
    %48 = arith.mulf %47, %46 : vector<5x6x16x128xf32>
    %49 = arith.addf %45, %48 : vector<5x6x16x128xf32>
    %50 = vector.extract_strided_slice %42 {offsets = [0, 2, 0, 0], sizes = [5, 6, 16, 128], strides = [1, 1, 1, 1]} : vector<5x16x16x128xf32> to vector<5x6x16x128xf32>
    %cst_14 = arith.constant 0.0573817976 : f32
    %51 = vector.broadcast %cst_14 : f32 to vector<5x6x16x128xf32>
    %52 = arith.mulf %51, %50 : vector<5x6x16x128xf32>
    %53 = arith.addf %49, %52 : vector<5x6x16x128xf32>
    %54 = vector.extract_strided_slice %42 {offsets = [0, 3, 0, 0], sizes = [5, 6, 16, 128], strides = [1, 1, 1, 1]} : vector<5x16x16x128xf32> to vector<5x6x16x128xf32>
    %cst_15 = arith.constant 0.120357662 : f32
    %55 = vector.broadcast %cst_15 : f32 to vector<5x6x16x128xf32>
    %56 = arith.mulf %55, %54 : vector<5x6x16x128xf32>
    %57 = arith.addf %53, %56 : vector<5x6x16x128xf32>
    %58 = vector.extract_strided_slice %42 {offsets = [0, 4, 0, 0], sizes = [5, 6, 16, 128], strides = [1, 1, 1, 1]} : vector<5x16x16x128xf32> to vector<5x6x16x128xf32>
    %cst_16 = arith.constant 0.18771264 : f32
    %59 = vector.broadcast %cst_16 : f32 to vector<5x6x16x128xf32>
    %60 = arith.mulf %59, %58 : vector<5x6x16x128xf32>
    %61 = arith.addf %57, %60 : vector<5x6x16x128xf32>
    %62 = vector.extract_strided_slice %42 {offsets = [0, 5, 0, 0], sizes = [5, 6, 16, 128], strides = [1, 1, 1, 1]} : vector<5x16x16x128xf32> to vector<5x6x16x128xf32>
    %cst_17 = arith.constant 0.217687473 : f32
    %63 = vector.broadcast %cst_17 : f32 to vector<5x6x16x128xf32>
    %64 = arith.mulf %63, %62 : vector<5x6x16x128xf32>
    %65 = arith.addf %61, %64 : vector<5x6x16x128xf32>
    %66 = vector.extract_strided_slice %42 {offsets = [0, 6, 0, 0], sizes = [5, 6, 16, 128], strides = [1, 1, 1, 1]} : vector<5x16x16x128xf32> to vector<5x6x16x128xf32>
    %cst_18 = arith.constant 0.18771264 : f32
    %67 = vector.broadcast %cst_18 : f32 to vector<5x6x16x128xf32>
    %68 = arith.mulf %67, %66 : vector<5x6x16x128xf32>
    %69 = arith.addf %65, %68 : vector<5x6x16x128xf32>
    %70 = vector.extract_strided_slice %42 {offsets = [0, 7, 0, 0], sizes = [5, 6, 16, 128], strides = [1, 1, 1, 1]} : vector<5x16x16x128xf32> to vector<5x6x16x128xf32>
    %cst_19 = arith.constant 0.120357662 : f32
    %71 = vector.broadcast %cst_19 : f32 to vector<5x6x16x128xf32>
    %72 = arith.mulf %71, %70 : vector<5x6x16x128xf32>
    %73 = arith.addf %69, %72 : vector<5x6x16x128xf32>
    %74 = vector.extract_strided_slice %42 {offsets = [0, 8, 0, 0], sizes = [5, 6, 16, 128], strides = [1, 1, 1, 1]} : vector<5x16x16x128xf32> to vector<5x6x16x128xf32>
    %cst_20 = arith.constant 0.0573817976 : f32
    %75 = vector.broadcast %cst_20 : f32 to vector<5x6x16x128xf32>
    %76 = arith.mulf %75, %74 : vector<5x6x16x128xf32>
    %77 = arith.addf %73, %76 : vector<5x6x16x128xf32>
    %78 = vector.extract_strided_slice %42 {offsets = [0, 9, 0, 0], sizes = [5, 6, 16, 128], strides = [1, 1, 1, 1]} : vector<5x16x16x128xf32> to vector<5x6x16x128xf32>
    %cst_21 = arith.constant 0.0203420483 : f32
    %79 = vector.broadcast %cst_21 : f32 to vector<5x6x16x128xf32>
    %80 = arith.mulf %79, %78 : vector<5x6x16x128xf32>
    %81 = arith.addf %77, %80 : vector<5x6x16x128xf32>
    %82 = vector.extract_strided_slice %42 {offsets = [0, 10, 0, 0], sizes = [5, 6, 16, 128], strides = [1, 1, 1, 1]} : vector<5x16x16x128xf32> to vector<5x6x16x128xf32>
    %cst_22 = arith.constant 0.00536210556 : f32
    %83 = vector.broadcast %cst_22 : f32 to vector<5x6x16x128xf32>
    %84 = arith.mulf %83, %82 : vector<5x6x16x128xf32>
    %85 = arith.addf %81, %84 : vector<5x6x16x128xf32>
    %86 = vector.extract_strided_slice %85 {offsets = [0, 0, 0, 0], sizes = [5, 6, 6, 128], strides = [1, 1, 1, 1]} : vector<5x6x16x128xf32> to vector<5x6x6x128xf32>
    %cst_23 = arith.constant 0.00536210556 : f32
    %87 = vector.broadcast %cst_23 : f32 to vector<5x6x6x128xf32>
    %88 = arith.mulf %87, %86 : vector<5x6x6x128xf32>
    %89 = vector.extract_strided_slice %85 {offsets = [0, 0, 1, 0], sizes = [5, 6, 6, 128], strides = [1, 1, 1, 1]} : vector<5x6x16x128xf32> to vector<5x6x6x128xf32>
    %cst_24 = arith.constant 0.0203420483 : f32
    %90 = vector.broadcast %cst_24 : f32 to vector<5x6x6x128xf32>
    %91 = arith.mulf %90, %89 : vector<5x6x6x128xf32>
    %92 = arith.addf %88, %91 : vector<5x6x6x128xf32>
    %93 = vector.extract_strided_slice %85 {offsets = [0, 0, 2, 0], sizes = [5, 6, 6, 128], strides = [1, 1, 1, 1]} : vector<5x6x16x128xf32> to vector<5x6x6x128xf32>
    %cst_25 = arith.constant 0.0573817976 : f32
    %94 = vector.broadcast %cst_25 : f32 to vector<5x6x6x128xf32>
    %95 = arith.mulf %94, %93 : vector<5x6x6x128xf32>
    %96 = arith.addf %92, %95 : vector<5x6x6x128xf32>
    %97 = vector.extract_strided_slice %85 {offsets = [0, 0, 3, 0], sizes = [5, 6, 6, 128], strides = [1, 1, 1, 1]} : vector<5x6x16x128xf32> to vector<5x6x6x128xf32>
    %cst_26 = arith.constant 0.120357662 : f32
    %98 = vector.broadcast %cst_26 : f32 to vector<5x6x6x128xf32>
    %99 = arith.mulf %98, %97 : vector<5x6x6x128xf32>
    %100 = arith.addf %96, %99 : vector<5x6x6x128xf32>
    %101 = vector.extract_strided_slice %85 {offsets = [0, 0, 4, 0], sizes = [5, 6, 6, 128], strides = [1, 1, 1, 1]} : vector<5x6x16x128xf32> to vector<5x6x6x128xf32>
    %cst_27 = arith.constant 0.18771264 : f32
    %102 = vector.broadcast %cst_27 : f32 to vector<5x6x6x128xf32>
    %103 = arith.mulf %102, %101 : vector<5x6x6x128xf32>
    %104 = arith.addf %100, %103 : vector<5x6x6x128xf32>
    %105 = vector.extract_strided_slice %85 {offsets = [0, 0, 5, 0], sizes = [5, 6, 6, 128], strides = [1, 1, 1, 1]} : vector<5x6x16x128xf32> to vector<5x6x6x128xf32>
    %cst_28 = arith.constant 0.217687473 : f32
    %106 = vector.broadcast %cst_28 : f32 to vector<5x6x6x128xf32>
    %107 = arith.mulf %106, %105 : vector<5x6x6x128xf32>
    %108 = arith.addf %104, %107 : vector<5x6x6x128xf32>
    %109 = vector.extract_strided_slice %85 {offsets = [0, 0, 6, 0], sizes = [5, 6, 6, 128], strides = [1, 1, 1, 1]} : vector<5x6x16x128xf32> to vector<5x6x6x128xf32>
    %cst_29 = arith.constant 0.18771264 : f32
    %110 = vector.broadcast %cst_29 : f32 to vector<5x6x6x128xf32>
    %111 = arith.mulf %110, %109 : vector<5x6x6x128xf32>
    %112 = arith.addf %108, %111 : vector<5x6x6x128xf32>
    %113 = vector.extract_strided_slice %85 {offsets = [0, 0, 7, 0], sizes = [5, 6, 6, 128], strides = [1, 1, 1, 1]} : vector<5x6x16x128xf32> to vector<5x6x6x128xf32>
    %cst_30 = arith.constant 0.120357662 : f32
    %114 = vector.broadcast %cst_30 : f32 to vector<5x6x6x128xf32>
    %115 = arith.mulf %114, %113 : vector<5x6x6x128xf32>
    %116 = arith.addf %112, %115 : vector<5x6x6x128xf32>
    %117 = vector.extract_strided_slice %85 {offsets = [0, 0, 8, 0], sizes = [5, 6, 6, 128], strides = [1, 1, 1, 1]} : vector<5x6x16x128xf32> to vector<5x6x6x128xf32>
    %cst_31 = arith.constant 0.0573817976 : f32
    %118 = vector.broadcast %cst_31 : f32 to vector<5x6x6x128xf32>
    %119 = arith.mulf %118, %117 : vector<5x6x6x128xf32>
    %120 = arith.addf %116, %119 : vector<5x6x6x128xf32>
    %121 = vector.extract_strided_slice %85 {offsets = [0, 0, 9, 0], sizes = [5, 6, 6, 128], strides = [1, 1, 1, 1]} : vector<5x6x16x128xf32> to vector<5x6x6x128xf32>
    %cst_32 = arith.constant 0.0203420483 : f32
    %122 = vector.broadcast %cst_32 : f32 to vector<5x6x6x128xf32>
    %123 = arith.mulf %122, %121 : vector<5x6x6x128xf32>
    %124 = arith.addf %120, %123 : vector<5x6x6x128xf32>
    %125 = vector.extract_strided_slice %85 {offsets = [0, 0, 10, 0], sizes = [5, 6, 6, 128], strides = [1, 1, 1, 1]} : vector<5x6x16x128xf32> to vector<5x6x6x128xf32>
    %cst_33 = arith.constant 0.00536210556 : f32
    %126 = vector.broadcast %cst_33 : f32 to vector<5x6x6x128xf32>
    %127 = arith.mulf %126, %125 : vector<5x6x6x128xf32>
    %128 = arith.addf %124, %127 : vector<5x6x6x128xf32>
    %129 = vector.extract_strided_slice %128 {offsets = [0, 0, 0, 0], sizes = [5, 6, 6, 118], strides = [1, 1, 1, 1]} : vector<5x6x6x128xf32> to vector<5x6x6x118xf32>
    %cst_34 = arith.constant 0.00536210556 : f32
    %130 = vector.broadcast %cst_34 : f32 to vector<5x6x6x118xf32>
    %131 = arith.mulf %130, %129 : vector<5x6x6x118xf32>
    %132 = vector.extract_strided_slice %128 {offsets = [0, 0, 0, 1], sizes = [5, 6, 6, 118], strides = [1, 1, 1, 1]} : vector<5x6x6x128xf32> to vector<5x6x6x118xf32>
    %cst_35 = arith.constant 0.0203420483 : f32
    %133 = vector.broadcast %cst_35 : f32 to vector<5x6x6x118xf32>
    %134 = arith.mulf %133, %132 : vector<5x6x6x118xf32>
    %135 = arith.addf %131, %134 : vector<5x6x6x118xf32>
    %136 = vector.extract_strided_slice %128 {offsets = [0, 0, 0, 2], sizes = [5, 6, 6, 118], strides = [1, 1, 1, 1]} : vector<5x6x6x128xf32> to vector<5x6x6x118xf32>
    %cst_36 = arith.constant 0.0573817976 : f32
    %137 = vector.broadcast %cst_36 : f32 to vector<5x6x6x118xf32>
    %138 = arith.mulf %137, %136 : vector<5x6x6x118xf32>
    %139 = arith.addf %135, %138 : vector<5x6x6x118xf32>
    %140 = vector.extract_strided_slice %128 {offsets = [0, 0, 0, 3], sizes = [5, 6, 6, 118], strides = [1, 1, 1, 1]} : vector<5x6x6x128xf32> to vector<5x6x6x118xf32>
    %cst_37 = arith.constant 0.120357662 : f32
    %141 = vector.broadcast %cst_37 : f32 to vector<5x6x6x118xf32>
    %142 = arith.mulf %141, %140 : vector<5x6x6x118xf32>
    %143 = arith.addf %139, %142 : vector<5x6x6x118xf32>
    %144 = vector.extract_strided_slice %128 {offsets = [0, 0, 0, 4], sizes = [5, 6, 6, 118], strides = [1, 1, 1, 1]} : vector<5x6x6x128xf32> to vector<5x6x6x118xf32>
    %cst_38 = arith.constant 0.18771264 : f32
    %145 = vector.broadcast %cst_38 : f32 to vector<5x6x6x118xf32>
    %146 = arith.mulf %145, %144 : vector<5x6x6x118xf32>
    %147 = arith.addf %143, %146 : vector<5x6x6x118xf32>
    %148 = vector.extract_strided_slice %128 {offsets = [0, 0, 0, 5], sizes = [5, 6, 6, 118], strides = [1, 1, 1, 1]} : vector<5x6x6x128xf32> to vector<5x6x6x118xf32>
    %cst_39 = arith.constant 0.217687473 : f32
    %149 = vector.broadcast %cst_39 : f32 to vector<5x6x6x118xf32>
    %150 = arith.mulf %149, %148 : vector<5x6x6x118xf32>
    %151 = arith.addf %147, %150 : vector<5x6x6x118xf32>
    %152 = vector.extract_strided_slice %128 {offsets = [0, 0, 0, 6], sizes = [5, 6, 6, 118], strides = [1, 1, 1, 1]} : vector<5x6x6x128xf32> to vector<5x6x6x118xf32>
    %cst_40 = arith.constant 0.18771264 : f32
    %153 = vector.broadcast %cst_40 : f32 to vector<5x6x6x118xf32>
    %154 = arith.mulf %153, %152 : vector<5x6x6x118xf32>
    %155 = arith.addf %151, %154 : vector<5x6x6x118xf32>
    %156 = vector.extract_strided_slice %128 {offsets = [0, 0, 0, 7], sizes = [5, 6, 6, 118], strides = [1, 1, 1, 1]} : vector<5x6x6x128xf32> to vector<5x6x6x118xf32>
    %cst_41 = arith.constant 0.120357662 : f32
    %157 = vector.broadcast %cst_41 : f32 to vector<5x6x6x118xf32>
    %158 = arith.mulf %157, %156 : vector<5x6x6x118xf32>
    %159 = arith.addf %155, %158 : vector<5x6x6x118xf32>
    %160 = vector.extract_strided_slice %128 {offsets = [0, 0, 0, 8], sizes = [5, 6, 6, 118], strides = [1, 1, 1, 1]} : vector<5x6x6x128xf32> to vector<5x6x6x118xf32>
    %cst_42 = arith.constant 0.0573817976 : f32
    %161 = vector.broadcast %cst_42 : f32 to vector<5x6x6x118xf32>
    %162 = arith.mulf %161, %160 : vector<5x6x6x118xf32>
    %163 = arith.addf %159, %162 : vector<5x6x6x118xf32>
    %164 = vector.extract_strided_slice %128 {offsets = [0, 0, 0, 9], sizes = [5, 6, 6, 118], strides = [1, 1, 1, 1]} : vector<5x6x6x128xf32> to vector<5x6x6x118xf32>
    %cst_43 = arith.constant 0.0203420483 : f32
    %165 = vector.broadcast %cst_43 : f32 to vector<5x6x6x118xf32>
    %166 = arith.mulf %165, %164 : vector<5x6x6x118xf32>
    %167 = arith.addf %163, %166 : vector<5x6x6x118xf32>
    %168 = vector.extract_strided_slice %128 {offsets = [0, 0, 0, 10], sizes = [5, 6, 6, 118], strides = [1, 1, 1, 1]} : vector<5x6x6x128xf32> to vector<5x6x6x118xf32>
    %cst_44 = arith.constant 0.00536210556 : f32
    %169 = vector.broadcast %cst_44 : f32 to vector<5x6x6x118xf32>
    %170 = arith.mulf %169, %168 : vector<5x6x6x118xf32>
    %171 = arith.addf %167, %170 : vector<5x6x6x118xf32>
    %172 = vector.extract_strided_slice %171 {offsets = [0, 0, 0, 0], sizes = [1, 6, 6, 118], strides = [1, 1, 1, 1]} : vector<5x6x6x118xf32> to vector<1x6x6x118xf32>
    %173 = vector.shape_cast %172 : vector<1x6x6x118xf32> to vector<6x6x118xf32>
    %174 = vector.extract_strided_slice %171 {offsets = [1, 0, 0, 0], sizes = [1, 6, 6, 118], strides = [1, 1, 1, 1]} : vector<5x6x6x118xf32> to vector<1x6x6x118xf32>
    %175 = vector.shape_cast %174 : vector<1x6x6x118xf32> to vector<6x6x118xf32>
    %176 = arith.mulf %173, %173 : vector<6x6x118xf32>
    %177 = arith.mulf %175, %175 : vector<6x6x118xf32>
    %178 = arith.mulf %173, %175 : vector<6x6x118xf32>
    %179 = vector.extract_strided_slice %171 {offsets = [2, 0, 0, 0], sizes = [1, 6, 6, 118], strides = [1, 1, 1, 1]} : vector<5x6x6x118xf32> to vector<1x6x6x118xf32>
    %180 = vector.shape_cast %179 : vector<1x6x6x118xf32> to vector<6x6x118xf32>
    %181 = arith.subf %180, %176 : vector<6x6x118xf32>
    %182 = vector.extract_strided_slice %171 {offsets = [3, 0, 0, 0], sizes = [1, 6, 6, 118], strides = [1, 1, 1, 1]} : vector<5x6x6x118xf32> to vector<1x6x6x118xf32>
    %183 = vector.shape_cast %182 : vector<1x6x6x118xf32> to vector<6x6x118xf32>
    %184 = arith.subf %183, %177 : vector<6x6x118xf32>
    %185 = vector.extract_strided_slice %171 {offsets = [4, 0, 0, 0], sizes = [1, 6, 6, 118], strides = [1, 1, 1, 1]} : vector<5x6x6x118xf32> to vector<1x6x6x118xf32>
    %186 = vector.shape_cast %185 : vector<1x6x6x118xf32> to vector<6x6x118xf32>
    %187 = arith.subf %186, %178 : vector<6x6x118xf32>
    %cst_45 = arith.constant 2.000000e+00 : f32
    %188 = vector.broadcast %cst_45 : f32 to vector<6x6x118xf32>
    %189 = arith.mulf %188, %178 : vector<6x6x118xf32>
    %cst_46 = arith.constant 4.000000e-04 : f32
    %190 = vector.broadcast %cst_46 : f32 to vector<6x6x118xf32>
    %191 = arith.addf %189, %190 : vector<6x6x118xf32>
    %cst_47 = arith.constant 2.000000e+00 : f32
    %192 = vector.broadcast %cst_47 : f32 to vector<6x6x118xf32>
    %193 = arith.mulf %192, %187 : vector<6x6x118xf32>
    %cst_48 = arith.constant 3.600000e-03 : f32
    %194 = vector.broadcast %cst_48 : f32 to vector<6x6x118xf32>
    %195 = arith.addf %193, %194 : vector<6x6x118xf32>
    %196 = arith.mulf %191, %195 : vector<6x6x118xf32>
    %197 = arith.addf %176, %177 : vector<6x6x118xf32>
    %cst_49 = arith.constant 4.000000e-04 : f32
    %198 = vector.broadcast %cst_49 : f32 to vector<6x6x118xf32>
    %199 = arith.addf %197, %198 : vector<6x6x118xf32>
    %200 = arith.addf %181, %184 : vector<6x6x118xf32>
    %cst_50 = arith.constant 3.600000e-03 : f32
    %201 = vector.broadcast %cst_50 : f32 to vector<6x6x118xf32>
    %202 = arith.addf %200, %201 : vector<6x6x118xf32>
    %203 = arith.mulf %199, %202 : vector<6x6x118xf32>
    %204 = arith.divf %196, %203 : vector<6x6x118xf32>
    %205 = vector.shape_cast %204 : vector<6x6x118xf32> to vector<1x6x6x118xf32>
    %cst_51 = arith.constant dense<0.000000e+00> : vector<1xf32>
    %206 = vector.multi_reduction <add>, %205, %cst_51 [1, 2, 3] : vector<1x6x6x118xf32> to vector<1xf32>
    %207 = vector.shape_cast %206 : vector<1xf32> to vector<1x1x1x1xf32>
    %208 = vector.extract %207[0, 0, 0, 0] : f32 from vector<1x1x1x1xf32>
    %209 = tpu.iota {dimensions = array<i32: 0>} : vector<8x128xi32>
    %c0_i32 = arith.constant 0 : i32
    %210 = vector.broadcast %c0_i32 : i32 to vector<8x128xi32>
    %211 = arith.cmpi eq, %209, %210 : vector<8x128xi32>
    %cst_52 = arith.constant 0.000000e+00 : f32
    %212 = vector.broadcast %9 : f32 to vector<8x128xf32>
    %213 = vector.broadcast %cst_52 : f32 to vector<8x128xf32>
    %214 = arith.select %211, %212, %213 : vector<8x128xi1>, vector<8x128xf32>
    %c1_i32 = arith.constant 1 : i32
    %215 = vector.broadcast %c1_i32 : i32 to vector<8x128xi32>
    %216 = arith.cmpi eq, %209, %215 : vector<8x128xi32>
    %cst_53 = arith.constant 0.000000e+00 : f32
    %217 = vector.broadcast %17 : f32 to vector<8x128xf32>
    %218 = vector.broadcast %cst_53 : f32 to vector<8x128xf32>
    %219 = arith.select %216, %217, %218 : vector<8x128xi1>, vector<8x128xf32>
    %220 = arith.addf %214, %219 : vector<8x128xf32>
    %c2_i32 = arith.constant 2 : i32
    %221 = vector.broadcast %c2_i32 : i32 to vector<8x128xi32>
    %222 = arith.cmpi eq, %209, %221 : vector<8x128xi32>
    %cst_54 = arith.constant 0.000000e+00 : f32
    %223 = vector.broadcast %25 : f32 to vector<8x128xf32>
    %224 = vector.broadcast %cst_54 : f32 to vector<8x128xf32>
    %225 = arith.select %222, %223, %224 : vector<8x128xi1>, vector<8x128xf32>
    %226 = arith.addf %220, %225 : vector<8x128xf32>
    %c3_i32 = arith.constant 3 : i32
    %227 = vector.broadcast %c3_i32 : i32 to vector<8x128xi32>
    %228 = arith.cmpi eq, %209, %227 : vector<8x128xi32>
    %cst_55 = arith.constant 0.000000e+00 : f32
    %229 = vector.broadcast %33 : f32 to vector<8x128xf32>
    %230 = vector.broadcast %cst_55 : f32 to vector<8x128xf32>
    %231 = arith.select %228, %229, %230 : vector<8x128xi1>, vector<8x128xf32>
    %232 = arith.addf %226, %231 : vector<8x128xf32>
    %c4_i32 = arith.constant 4 : i32
    %233 = vector.broadcast %c4_i32 : i32 to vector<8x128xi32>
    %234 = arith.cmpi eq, %209, %233 : vector<8x128xi32>
    %cst_56 = arith.constant 0.000000e+00 : f32
    %235 = vector.broadcast %208 : f32 to vector<8x128xf32>
    %236 = vector.broadcast %cst_56 : f32 to vector<8x128xf32>
    %237 = arith.select %234, %235, %236 : vector<8x128xi1>, vector<8x128xf32>
    %238 = arith.addf %232, %237 : vector<8x128xf32>
    %c0_57 = arith.constant 0 : index
    %c0_58 = arith.constant 0 : index
    %c0_59 = arith.constant 0 : index
    %239 = vector.load %arg3[%c0_57, %c0_58, %c0_59] : memref<1x8x128xf32, #tpu.memory_space<vmem>>, vector<1x8x128xf32>
    %240 = vector.shape_cast %239 : vector<1x8x128xf32> to vector<8x128xf32>
    %241 = vector.shape_cast %238 : vector<8x128xf32> to vector<1x8x128xf32>
    tpu.vector_store %arg3[%c0_57, %c0_58, %c0_59], %241 {strides = array<i32>} : memref<1x8x128xf32, #tpu.memory_space<vmem>>, vector<1x8x128xf32>,
    return
  }
  func.func @transform_0(%arg0: i32) -> (i32, i32, i32, i32, i32) {
    %c0_i32 = arith.constant 0 : i32
    %c0_i32_0 = arith.constant 0 : i32
    %c0_i32_1 = arith.constant 0 : i32
    %c0_i32_2 = arith.constant 0 : i32
    %c0_i32_3 = arith.constant 0 : i32
    return %arg0, %c0_i32, %c0_i32_0, %c0_i32_1, %c0_i32_2 : i32, i32, i32, i32, i32
  }
  func.func @transform_1(%arg0: i32) -> (i32, i32, i32, i32, i32) {
    %c0_i32 = arith.constant 0 : i32
    %c0_i32_0 = arith.constant 0 : i32
    %c0_i32_1 = arith.constant 0 : i32
    %c0_i32_2 = arith.constant 0 : i32
    %c0_i32_3 = arith.constant 0 : i32
    return %arg0, %c0_i32, %c0_i32_0, %c0_i32_1, %c0_i32_2 : i32, i32, i32, i32, i32
  }
  func.func @transform_2(%arg0: i32) -> (i32, i32, i32) {
    %c0_i32 = arith.constant 0 : i32
    %c0_i32_0 = arith.constant 0 : i32
    %c0_i32_1 = arith.constant 0 : i32
    return %arg0, %c0_i32, %c0_i32_0 : i32, i32, i32
  }
}

</mosaic_0001>

<llo_original>
// kernel: tpu_custom_call.1
$region0: #{tpu_custom_call.1}
  #allocation0 [shape = 'u32[]', space=smem, size = 0x4, offset = 0x4, fixed_abs, tag = 'smem constant byte address 0x4 - core index']
  #allocation1 [shape = 'u32[144,128]{1,0:T(1,128)}', space=vmem, size = 0x12000, scoped, tag = 'internal scratch']
  %s0 = inlined_call_operand.hbm [shape: f32[2,1,16,16,128], index: 0, kind: input, shape index: {}]
  %s1 = inlined_call_operand.hbm [shape: f32[2,1,16,16,128], index: 1, kind: input, shape index: {}]
  %s2 = inlined_call_operand.hbm [shape: f32[2,8,128], index: 2, kind: output, shape index: {}]
  %s3 = sld [smem:[#allocation0]]
  $region49: #{tpu_custom_call.1} parent=0
    _
  %s5 = ssub.s32 1, %s3
  %s6 = scalar_select 0, %s5, %s3
  $region1: #{tpu_custom_call.1} parent=0
    #allocation2 [shape = 'u8[262144]{0}', space=vmem, size = 0x40000, scoped, tag = 'input window, operand 0']
    #allocation3 [shape = 's32[2]{0}', space=sflag, size = 0x8, scoped, tag = 'scoped memory for tpu_custom_call.1']
    #allocation4 [shape = 's32[2]{0}', space=sflag, size = 0x8, scoped, tag = 'scoped memory for tpu_custom_call.1']
    #allocation5 [shape = 'u8[262144]{0}', space=vmem, size = 0x40000, scoped, tag = 'input window, operand 1']
    #allocation6 [shape = 's32[2]{0}', space=sflag, size = 0x8, scoped, tag = 'scoped memory for tpu_custom_call.1']
    #allocation7 [shape = 'u8[8192]{0}', space=vmem, size = 0x2000, scoped, tag = 'output window, operand 0']
    %7 = vsyncpa [#allocation3], 0
    %s8 = scalar_lea.sflag [#allocation3], 1
    %9 = vsyncpa %s8, 0
    %10 = vsyncpa [#allocation6], 0
    %s11 = scalar_lea.sflag [#allocation6], 1
    %12 = vsyncpa %s11, 0
    %13 = vsyncpa [#allocation4], 0
    %s14 = scalar_lea.sflag [#allocation4], 1
    %15 = vsyncpa %s14, 0
    loop: start=0, step=1, limit=4
    $region2: #{tpu_custom_call.1} parent=1 // loop_pre_header
      _
    $region3: #{tpu_custom_call.1} parent=1 // loop_header
      %s17 = sphi 0, %s21
      %p18 = scmp.ge.s32.totalorder %s17, 4
      %s27 = sphi 0, %s29
      %s30 = sphi 0, %s27
      %s31 = sphi 0, %s30
      %s47 = sphi 0, %s31
      %s53 = sphi 0, %s55
      %s56 = sphi 0, %s53
      %s57 = sphi 0, %s56
      %s73 = sphi 0, %s57
      %s79 = sphi 0, %s81
      %s82 = sphi 0, %s79
      %s83 = sphi 0, %s82
      %s99 = sphi 0, %s83
    $region4: #{tpu_custom_call.1} parent=1 // loop_header_branch
      %20 = sbr.rel (%p18) target = $region8
    $region5: #{tpu_custom_call.1} parent=1 // loop_body
      %s22 = ssub.s32 %s17, 1
      %s23 = ssub.s32 %s17, 2
      %s24 = sadd.s32 %s17, 1
      %s25 = ssub.s32 %s17, %s24
      %p26 = scmp.eq.s32.totalorder %s25, 0
      %s28 = sadd.s32 %s27, 1
      %s29 = scalar_select %p26, %s27, %s28
      %p32 = pneg %p26
      %p33 = scmp.eq.s32.totalorder %s17, 1
      %p34 = por %p32, %p33
      %p35 = scmp.ne.s32.totalorder %s27, %s30
      %p36 = scmp.eq.s32.totalorder %s17, 0
      %p37 = por %p35, %p36
      %p38 = scmp.ne.s32.totalorder %s27, %s30
      %p39 = scmp.eq.s32.totalorder %s22, 1
      %p40 = por %p38, %p39
      %p41 = scmp.ne.s32.totalorder %s30, %s31
      %p42 = scmp.eq.s32.totalorder %s22, 0
      %p43 = por %p41, %p42
      %p44 = scmp.ne.s32.totalorder %s30, %s31
      %p45 = scmp.eq.s32.totalorder %s23, 1
      %p46 = por %p44, %p45
      %p48 = scmp.ne.s32.totalorder %s31, %s47
      %p49 = scmp.eq.s32.totalorder %s23, 0
      %p50 = por %p48, %p49
      %s51 = ssub.s32 %s17, %s24
      %p52 = scmp.eq.s32.totalorder %s51, 0
      %s54 = sadd.s32 %s53, 1
      %s55 = scalar_select %p52, %s53, %s54
      %p58 = pneg %p52
      %p59 = scmp.eq.s32.totalorder %s17, 1
      %p60 = por %p58, %p59
      %p61 = scmp.ne.s32.totalorder %s53, %s56
      %p62 = scmp.eq.s32.totalorder %s17, 0
      %p63 = por %p61, %p62
      %p64 = scmp.ne.s32.totalorder %s53, %s56
      %p65 = scmp.eq.s32.totalorder %s22, 1
      %p66 = por %p64, %p65
      %p67 = scmp.ne.s32.totalorder %s56, %s57
      %p68 = scmp.eq.s32.totalorder %s22, 0
      %p69 = por %p67, %p68
      %p70 = scmp.ne.s32.totalorder %s56, %s57
      %p71 = scmp.eq.s32.totalorder %s23, 1
      %p72 = por %p70, %p71
      %p74 = scmp.ne.s32.totalorder %s57, %s73
      %p75 = scmp.eq.s32.totalorder %s23, 0
      %p76 = por %p74, %p75
      %s77 = ssub.s32 %s17, %s24
      %p78 = scmp.eq.s32.totalorder %s77, 0
      %s80 = sadd.s32 %s79, 1
      %s81 = scalar_select %p78, %s79, %s80
      %p84 = pneg %p78
      %p85 = scmp.eq.s32.totalorder %s17, 1
      %p86 = por %p84, %p85
      %p87 = scmp.ne.s32.totalorder %s79, %s82
      %p88 = scmp.eq.s32.totalorder %s17, 0
      %p89 = por %p87, %p88
      %p90 = scmp.ne.s32.totalorder %s79, %s82
      %p91 = scmp.eq.s32.totalorder %s22, 1
      %p92 = por %p90, %p91
      %p93 = scmp.ne.s32.totalorder %s82, %s83
      %p94 = scmp.eq.s32.totalorder %s22, 0
      %p95 = por %p93, %p94
      %p96 = scmp.ne.s32.totalorder %s82, %s83
      %p97 = scmp.eq.s32.totalorder %s23, 1
      %p98 = por %p96, %p97
      %p100 = scmp.ne.s32.totalorder %s83, %s99
      %p101 = scmp.eq.s32.totalorder %s23, 0
      %p102 = por %p100, %p101
      %p103 = scmp.le.s32.totalorder 1, %s17
      %p104 = scmp.lt.s32.totalorder %s17, 3
      %p105 = pnand %p103, %p104
      %p106 = pneg %p105
      // Predicated region
      $region9: #{tpu_custom_call.1} parent=5 // pred_check
        _
      $region10: #{tpu_custom_call.1} parent=5 // pred_check_branch
        %108 = sbr.rel (%p105) target = $region12
      $region11: #{tpu_custom_call.1} parent=5 // pred_region
        %s109 = ssub.s32 %s17, 1
      $region12: #{tpu_custom_call.1} parent=5 // pred_fallthru
        _
      %p110 = scmp.lt.s32.totalorder %s17, 2
      // Predicated region
      $region13: #{tpu_custom_call.1} parent=5 // pred_check
        %p111 = pneg %p110
      $region14: #{tpu_custom_call.1} parent=5 // pred_check_branch
        %113 = sbr.rel (%p111) target = $region16
      $region15: #{tpu_custom_call.1} parent=5 // pred_region
        // Predicated region
        $region17: #{tpu_custom_call.1} parent=15 // pred_check
          %p114 = pneg %p37
        $region18: #{tpu_custom_call.1} parent=15 // pred_check_branch
          %116 = sbr.rel (%p114) target = $region20
        $region19: #{tpu_custom_call.1} parent=15 // pred_region
          %s117 = sand.u32 %s27, 1
          %s118 = scalar_lea.sflag [#allocation3], %s117
          %s119 = sand.u32 %s27, 1
          %s120 = smul.addr %s119, 256
          %s121 = scalar_lea.vmem [#allocation2], %s120
          %s123 = ssub.s32 4096, 4096
          %124 = vsyncadd %s118, %s123
          %s125 = smul.addr %s17, 32
          %s126 = smul.addr %s125, 128
          %s127 = scalar_lea.hbm %s0, %s126
          %s128 = sshll.u32 %s121, 4
          %s129 = int_to_ptr.vmem [resolvable:$true] %s128
          %134 = dma.hbm_to_vmem [thread:$0]  %s127, 4096, %s129, %s118, 128, 128, 8
        $region20: #{tpu_custom_call.1} parent=15 // pred_fallthru
          _
        // Predicated region
        $region21: #{tpu_custom_call.1} parent=15 // pred_check
          %p135 = pneg %p63
        $region22: #{tpu_custom_call.1} parent=15 // pred_check_branch
          %137 = sbr.rel (%p135) target = $region24
        $region23: #{tpu_custom_call.1} parent=15 // pred_region
          %s138 = sand.u32 %s53, 1
          %s139 = scalar_lea.sflag [#allocation6], %s138
          %s140 = sand.u32 %s53, 1
          %s141 = smul.addr %s140, 256
          %s142 = scalar_lea.vmem [#allocation5], %s141
          %s144 = ssub.s32 4096, 4096
          %145 = vsyncadd %s139, %s144
          %s146 = smul.addr %s17, 32
          %s147 = smul.addr %s146, 128
          %s148 = scalar_lea.hbm %s1, %s147
          %s149 = sshll.u32 %s142, 4
          %s150 = int_to_ptr.vmem [resolvable:$true] %s149
          %155 = dma.hbm_to_vmem [thread:$0]  %s148, 4096, %s150, %s139, 128, 128, 8
        $region24: #{tpu_custom_call.1} parent=15 // pred_fallthru
          _
      $region16: #{tpu_custom_call.1} parent=5 // pred_fallthru
        _
      %p156 = scmp.le.s32.totalorder 1, %s17
      %p157 = scmp.lt.s32.totalorder %s17, 3
      %p158 = pnand %p156, %p157
      %p159 = pneg %p158
      // Predicated region
      $region25: #{tpu_custom_call.1} parent=5 // pred_check
        _
      $region26: #{tpu_custom_call.1} parent=5 // pred_check_branch
        %161 = sbr.rel (%p158) target = $region28
      $region27: #{tpu_custom_call.1} parent=5 // pred_region
        %s162 = ssub.s32 %s17, 1
        %s163 = sand.u32 %s30, 1
        %s164 = scalar_lea.sflag [#allocation3], %s163
        %s165 = sand.u32 %s30, 1
        %s166 = smul.addr %s165, 256
        %s167 = scalar_lea.vmem [#allocation2], %s166
        // Predicated region
        $region29: #{tpu_custom_call.1} parent=27 // pred_check
          %p168 = pneg %p43
        $region30: #{tpu_custom_call.1} parent=27 // pred_check_branch
          %170 = sbr.rel (%p168) target = $region32
        $region31: #{tpu_custom_call.1} parent=27 // pred_region
          %171 = dma.done %s164, 4096
        $region32: #{tpu_custom_call.1} parent=27 // pred_fallthru
          _
        %s172 = sand.u32 %s56, 1
        %s173 = scalar_lea.sflag [#allocation6], %s172
        %s174 = sand.u32 %s56, 1
        %s175 = smul.addr %s174, 256
        %s176 = scalar_lea.vmem [#allocation5], %s175
        // Predicated region
        $region33: #{tpu_custom_call.1} parent=27 // pred_check
          %p177 = pneg %p69
        $region34: #{tpu_custom_call.1} parent=27 // pred_check_branch
          %179 = sbr.rel (%p177) target = $region36
        $region35: #{tpu_custom_call.1} parent=27 // pred_region
          %180 = dma.done %s173, 4096
        $region36: #{tpu_custom_call.1} parent=27 // pred_fallthru
          _
        %s181 = sand.u32 %s30, 1
        %s182 = scalar_lea.sflag [#allocation3], %s181
        %s183 = sand.u32 %s30, 1
        %s184 = smul.addr %s183, 256
        %s185 = scalar_lea.vmem [#allocation2], %s184
        %p186 = pneg %p43
        %p187 = pneg %p40
        %s188 = sand.u32 %s56, 1
        %s189 = scalar_lea.sflag [#allocation6], %s188
        %s190 = sand.u32 %s56, 1
        %s191 = smul.addr %s190, 256
        %s192 = scalar_lea.vmem [#allocation5], %s191
        %p193 = pneg %p69
        %p194 = pneg %p66
        %p195 = pneg %p95
        %p196 = pneg %p92
        %s197 = sand.u32 %s82, 1
        %s198 = scalar_lea.sflag [#allocation4], %s197
        %s199 = sand.u32 %s82, 1
        %s200 = smul.addr %s199, 8
        %s201 = scalar_lea.vmem [#allocation7], %s200
        %v202 = vld [vmem:[%s167] sm:$0xff]
        %v203 = vld [vmem:[%s167 + $0x8] sm:$0xff]
        %v204 = vld [vmem:[%s167 + $0x10] sm:$0xff]
        %v205 = vld [vmem:[%s167 + $0x18] sm:$0xff]
        %v206 = vld [vmem:[%s167 + $0x20] sm:$0xff]
        %v207 = vld [vmem:[%s167 + $0x28] sm:$0xff]
        %v208 = vld [vmem:[%s167 + $0x30] sm:$0xff]
        %v209 = vld [vmem:[%s167 + $0x38] sm:$0xff]
        %v210 = vld [vmem:[%s167 + $0x40] sm:$0xff]
        %v211 = vld [vmem:[%s167 + $0x48] sm:$0xff]
        %v212 = vld [vmem:[%s167 + $0x50] sm:$0xff]
        %v213 = vld [vmem:[%s167 + $0x58] sm:$0xff]
        %v214 = vld [vmem:[%s167 + $0x60] sm:$0xff]
        %v215 = vld [vmem:[%s167 + $0x68] sm:$0xff]
        %v216 = vld [vmem:[%s167 + $0x70] sm:$0xff]
        %v217 = vld [vmem:[%s167 + $0x78] sm:$0xff]
        %v218 = vld [vmem:[%s167 + $0x80] sm:$0xff]
        %v219 = vld [vmem:[%s167 + $0x88] sm:$0xff]
        %v220 = vld [vmem:[%s167 + $0x90] sm:$0xff]
        %v221 = vld [vmem:[%s167 + $0x98] sm:$0xff]
        %v222 = vld [vmem:[%s167 + $0xa0] sm:$0xff]
        %v223 = vld [vmem:[%s167 + $0xa8] sm:$0xff]
        %v224 = vld [vmem:[%s167 + $0xb0] sm:$0xff]
        %v225 = vld [vmem:[%s167 + $0xb8] sm:$0xff]
        %v226 = vld [vmem:[%s167 + $0xc0] sm:$0xff]
        %v227 = vld [vmem:[%s167 + $0xc8] sm:$0xff]
        %v228 = vld [vmem:[%s167 + $0xd0] sm:$0xff]
        %v229 = vld [vmem:[%s167 + $0xd8] sm:$0xff]
        %v230 = vld [vmem:[%s167 + $0xe0] sm:$0xff]
        %v231 = vld [vmem:[%s167 + $0xe8] sm:$0xff]
        %v232 = vld [vmem:[%s167 + $0xf0] sm:$0xff]
        %v233 = vld [vmem:[%s167 + $0xf8] sm:$0xff]
        %v234 = vld [vmem:[%s176] sm:$0xff]
        %v235 = vld [vmem:[%s176 + $0x8] sm:$0xff]
        %v236 = vld [vmem:[%s176 + $0x10] sm:$0xff]
        %v237 = vld [vmem:[%s176 + $0x18] sm:$0xff]
        %v238 = vld [vmem:[%s176 + $0x20] sm:$0xff]
        %v239 = vld [vmem:[%s176 + $0x28] sm:$0xff]
        %v240 = vld [vmem:[%s176 + $0x30] sm:$0xff]
        %v241 = vld [vmem:[%s176 + $0x38] sm:$0xff]
        %v242 = vld [vmem:[%s176 + $0x40] sm:$0xff]
        %v243 = vld [vmem:[%s176 + $0x48] sm:$0xff]
        %v244 = vld [vmem:[%s176 + $0x50] sm:$0xff]
        %v245 = vld [vmem:[%s176 + $0x58] sm:$0xff]
        %v246 = vld [vmem:[%s176 + $0x60] sm:$0xff]
        %v247 = vld [vmem:[%s176 + $0x68] sm:$0xff]
        %v248 = vld [vmem:[%s176 + $0x70] sm:$0xff]
        %v249 = vld [vmem:[%s176 + $0x78] sm:$0xff]
        %v250 = vld [vmem:[%s176 + $0x80] sm:$0xff]
        %v251 = vld [vmem:[%s176 + $0x88] sm:$0xff]
        %v252 = vld [vmem:[%s176 + $0x90] sm:$0xff]
        %v253 = vld [vmem:[%s176 + $0x98] sm:$0xff]
        %v254 = vld [vmem:[%s176 + $0xa0] sm:$0xff]
        %v255 = vld [vmem:[%s176 + $0xa8] sm:$0xff]
        %v256 = vld [vmem:[%s176 + $0xb0] sm:$0xff]
        %v257 = vld [vmem:[%s176 + $0xb8] sm:$0xff]
        %v258 = vld [vmem:[%s176 + $0xc0] sm:$0xff]
        %v259 = vld [vmem:[%s176 + $0xc8] sm:$0xff]
        %v260 = vld [vmem:[%s176 + $0xd0] sm:$0xff]
        %v261 = vld [vmem:[%s176 + $0xd8] sm:$0xff]
        %v262 = vld [vmem:[%s176 + $0xe0] sm:$0xff]
        %v263 = vld [vmem:[%s176 + $0xe8] sm:$0xff]
        %v264 = vld [vmem:[%s176 + $0xf0] sm:$0xff]
        %v265 = vld [vmem:[%s176 + $0xf8] sm:$0xff]
        %v266 = vsub.f32 %v202, %v234
        %v267 = vsub.f32 %v203, %v235
        %v268 = vsub.f32 %v204, %v236
        %v269 = vsub.f32 %v205, %v237
        %v270 = vsub.f32 %v206, %v238
        %v271 = vsub.f32 %v207, %v239
        %v272 = vsub.f32 %v208, %v240
        %v273 = vsub.f32 %v209, %v241
        %v274 = vsub.f32 %v210, %v242
        %v275 = vsub.f32 %v211, %v243
        %v276 = vsub.f32 %v212, %v244
        %v277 = vsub.f32 %v213, %v245
        %v278 = vsub.f32 %v214, %v246
        %v279 = vsub.f32 %v215, %v247
        %v280 = vsub.f32 %v216, %v248
        %v281 = vsub.f32 %v217, %v249
        %v282 = vsub.f32 %v218, %v250
        %v283 = vsub.f32 %v219, %v251
        %v284 = vsub.f32 %v220, %v252
        %v285 = vsub.f32 %v221, %v253
        %v286 = vsub.f32 %v222, %v254
        %v287 = vsub.f32 %v223, %v255
        %v288 = vsub.f32 %v224, %v256
        %v289 = vsub.f32 %v225, %v257
        %v290 = vsub.f32 %v226, %v258
        %v291 = vsub.f32 %v227, %v259
        %v292 = vsub.f32 %v228, %v260
        %v293 = vsub.f32 %v229, %v261
        %v294 = vsub.f32 %v230, %v262
        %v295 = vsub.f32 %v231, %v263
        %v296 = vsub.f32 %v232, %v264
        %v297 = vsub.f32 %v233, %v265
        %v298 = vmul.f32 %v266, %v266
        %v299 = vmul.f32 %v267, %v267
        %v300 = vmul.f32 %v268, %v268
        %v301 = vmul.f32 %v269, %v269
        %v302 = vmul.f32 %v270, %v270
        %v303 = vmul.f32 %v271, %v271
        %v304 = vmul.f32 %v272, %v272
        %v305 = vmul.f32 %v273, %v273
        %v306 = vmul.f32 %v274, %v274
        %v307 = vmul.f32 %v275, %v275
        %v308 = vmul.f32 %v276, %v276
        %v309 = vmul.f32 %v277, %v277
        %v310 = vmul.f32 %v278, %v278
        %v311 = vmul.f32 %v279, %v279
        %v312 = vmul.f32 %v280, %v280
        %v313 = vmul.f32 %v281, %v281
        %v314 = vmul.f32 %v282, %v282
        %v315 = vmul.f32 %v283, %v283
        %v316 = vmul.f32 %v284, %v284
        %v317 = vmul.f32 %v285, %v285
        %v318 = vmul.f32 %v286, %v286
        %v319 = vmul.f32 %v287, %v287
        %v320 = vmul.f32 %v288, %v288
        %v321 = vmul.f32 %v289, %v289
        %v322 = vmul.f32 %v290, %v290
        %v323 = vmul.f32 %v291, %v291
        %v324 = vmul.f32 %v292, %v292
        %v325 = vmul.f32 %v293, %v293
        %v326 = vmul.f32 %v294, %v294
        %v327 = vmul.f32 %v295, %v295
        %v328 = vmul.f32 %v296, %v296
        %v329 = vmul.f32 %v297, %v297
        %v330 = vadd.f32 %v298, %v299
        %v331 = vadd.f32 %v330, %v300
        %v332 = vadd.f32 %v331, %v301
        %v333 = vadd.f32 %v332, %v302
        %v334 = vadd.f32 %v333, %v303
        %v335 = vadd.f32 %v334, %v304
        %v336 = vadd.f32 %v335, %v305
        %v337 = vadd.f32 %v336, %v306
        %v338 = vadd.f32 %v337, %v307
        %v339 = vadd.f32 %v338, %v308
        %v340 = vadd.f32 %v339, %v309
        %v341 = vadd.f32 %v340, %v310
        %v342 = vadd.f32 %v341, %v311
        %v343 = vadd.f32 %v342, %v312
        %v344 = vadd.f32 %v343, %v313
        %v345 = vadd.f32 %v344, %v314
        %v346 = vadd.f32 %v345, %v315
        %v347 = vadd.f32 %v346, %v316
        %v348 = vadd.f32 %v347, %v317
        %v349 = vadd.f32 %v348, %v318
        %v350 = vadd.f32 %v349, %v319
        %v351 = vadd.f32 %v350, %v320
        %v352 = vadd.f32 %v351, %v321
        %v353 = vadd.f32 %v352, %v322
        %v354 = vadd.f32 %v353, %v323
        %v355 = vadd.f32 %v354, %v324
        %v356 = vadd.f32 %v355, %v325
        %v357 = vadd.f32 %v356, %v326
        %v358 = vadd.f32 %v357, %v327
        %v359 = vadd.f32 %v358, %v328
        %v360 = vadd.f32 %v359, %v329
        %361 = vadd.xlane.f32.xlu0 %v360
        %v362 = vpop.xlane.xlu0 %361
        %v363 = vrot.slane %v362, 4
        %v364 = vadd.f32 %v362, %v363
        %v365 = vrot.slane %v364, 2
        %v366 = vadd.f32 %v364, %v365
        %v367 = vrot.slane %v366, 1
        %v368 = vadd.f32 %v366, %v367
        %s369 = vtos %v368
        %v370 = vsub.f32 %v268, %v266
        %v371 = vsub.f32 %v269, %v267
        %v372 = vsub.f32 %v270, %v268
        %v373 = vsub.f32 %v271, %v269
        %v374 = vsub.f32 %v272, %v270
        %v375 = vsub.f32 %v273, %v271
        %v376 = vsub.f32 %v274, %v272
        %v377 = vsub.f32 %v275, %v273
        %v378 = vsub.f32 %v276, %v274
        %v379 = vsub.f32 %v277, %v275
        %v380 = vsub.f32 %v278, %v276
        %v381 = vsub.f32 %v279, %v277
        %v382 = vsub.f32 %v280, %v278
        %v383 = vsub.f32 %v281, %v279
        %v384 = vsub.f32 %v282, %v280
        %v385 = vsub.f32 %v283, %v281
        %v386 = vsub.f32 %v284, %v282
        %v387 = vsub.f32 %v285, %v283
        %v388 = vsub.f32 %v286, %v284
        %v389 = vsub.f32 %v287, %v285
        %v390 = vsub.f32 %v288, %v286
        %v391 = vsub.f32 %v289, %v287
        %v392 = vsub.f32 %v290, %v288
        %v393 = vsub.f32 %v291, %v289
        %v394 = vsub.f32 %v292, %v290
        %v395 = vsub.f32 %v293, %v291
        %v396 = vsub.f32 %v294, %v292
        %v397 = vsub.f32 %v295, %v293
        %v398 = vsub.f32 %v296, %v294
        %v399 = vsub.f32 %v297, %v295
        %v400 = vmul.f32 %v370, %v370
        %v401 = vmul.f32 %v371, %v371
        %v402 = vmul.f32 %v372, %v372
        %v403 = vmul.f32 %v373, %v373
        %v404 = vmul.f32 %v374, %v374
        %v405 = vmul.f32 %v375, %v375
        %v406 = vmul.f32 %v376, %v376
        %v407 = vmul.f32 %v377, %v377
        %v408 = vmul.f32 %v378, %v378
        %v409 = vmul.f32 %v379, %v379
        %v410 = vmul.f32 %v380, %v380
        %v411 = vmul.f32 %v381, %v381
        %v412 = vmul.f32 %v382, %v382
        %v413 = vmul.f32 %v383, %v383
        %v414 = vmul.f32 %v384, %v384
        %v415 = vmul.f32 %v385, %v385
        %v416 = vmul.f32 %v386, %v386
        %v417 = vmul.f32 %v387, %v387
        %v418 = vmul.f32 %v388, %v388
        %v419 = vmul.f32 %v389, %v389
        %v420 = vmul.f32 %v390, %v390
        %v421 = vmul.f32 %v391, %v391
        %v422 = vmul.f32 %v392, %v392
        %v423 = vmul.f32 %v393, %v393
        %v424 = vmul.f32 %v394, %v394
        %v425 = vmul.f32 %v395, %v395
        %v426 = vmul.f32 %v396, %v396
        %v427 = vmul.f32 %v397, %v397
        %v428 = vmul.f32 %v398, %v398
        %v429 = vmul.f32 %v399, %v399
        %v430 = vadd.f32 %v400, %v401
        %v431 = vadd.f32 %v430, %v402
        %v432 = vadd.f32 %v431, %v403
        %v433 = vadd.f32 %v432, %v404
        %v434 = vadd.f32 %v433, %v405
        %v435 = vadd.f32 %v434, %v406
        %v436 = vadd.f32 %v435, %v407
        %v437 = vadd.f32 %v436, %v408
        %v438 = vadd.f32 %v437, %v409
        %v439 = vadd.f32 %v438, %v410
        %v440 = vadd.f32 %v439, %v411
        %v441 = vadd.f32 %v440, %v412
        %v442 = vadd.f32 %v441, %v413
        %v443 = vadd.f32 %v442, %v414
        %v444 = vadd.f32 %v443, %v415
        %v445 = vadd.f32 %v444, %v416
        %v446 = vadd.f32 %v445, %v417
        %v447 = vadd.f32 %v446, %v418
        %v448 = vadd.f32 %v447, %v419
        %v449 = vadd.f32 %v448, %v420
        %v450 = vadd.f32 %v449, %v421
        %v451 = vadd.f32 %v450, %v422
        %v452 = vadd.f32 %v451, %v423
        %v453 = vadd.f32 %v452, %v424
        %v454 = vadd.f32 %v453, %v425
        %v455 = vadd.f32 %v454, %v426
        %v456 = vadd.f32 %v455, %v427
        %v457 = vadd.f32 %v456, %v428
        %v458 = vadd.f32 %v457, %v429
        %459 = vadd.xlane.f32.xlu0 %v458
        %v460 = vpop.xlane.xlu0 %459
        %v461 = vrot.slane %v460, 4
        %v462 = vadd.f32 %v460, %v461
        %v463 = vrot.slane %v462, 2
        %v464 = vadd.f32 %v462, %v463
        %v465 = vrot.slane %v464, 1
        %v466 = vadd.f32 %v464, %v465
        %s467 = vtos %v466
        %vm500 = vcmask 1040384
        %v501 = vrot.slane %v266, 7
        %v502 = vrot.slane %v267, 7
        %v503 = vsel %vm500, %v501, %v502
        %v504 = vrot.slane %v268, 7
        %v505 = vrot.slane %v269, 7
        %v506 = vsel %vm500, %v504, %v505
        %v507 = vrot.slane %v270, 7
        %v508 = vrot.slane %v271, 7
        %v509 = vsel %vm500, %v507, %v508
        %v510 = vrot.slane %v272, 7
        %v511 = vrot.slane %v273, 7
        %v512 = vsel %vm500, %v510, %v511
        %v513 = vrot.slane %v274, 7
        %v514 = vrot.slane %v275, 7
        %v515 = vsel %vm500, %v513, %v514
        %v516 = vrot.slane %v276, 7
        %v517 = vrot.slane %v277, 7
        %v518 = vsel %vm500, %v516, %v517
        %v519 = vrot.slane %v278, 7
        %v520 = vrot.slane %v279, 7
        %v521 = vsel %vm500, %v519, %v520
        %v522 = vrot.slane %v280, 7
        %v523 = vrot.slane %v281, 7
        %v524 = vsel %vm500, %v522, %v523
        %v525 = vrot.slane %v282, 7
        %v526 = vrot.slane %v283, 7
        %v527 = vsel %vm500, %v525, %v526
        %v528 = vrot.slane %v284, 7
        %v529 = vrot.slane %v285, 7
        %v530 = vsel %vm500, %v528, %v529
        %v531 = vrot.slane %v286, 7
        %v532 = vrot.slane %v287, 7
        %v533 = vsel %vm500, %v531, %v532
        %v534 = vrot.slane %v288, 7
        %v535 = vrot.slane %v289, 7
        %v536 = vsel %vm500, %v534, %v535
        %v537 = vrot.slane %v290, 7
        %v538 = vrot.slane %v291, 7
        %v539 = vsel %vm500, %v537, %v538
        %v540 = vrot.slane %v292, 7
        %v541 = vrot.slane %v293, 7
        %v542 = vsel %vm500, %v540, %v541
        %v543 = vrot.slane %v294, 7
        %v544 = vrot.slane %v295, 7
        %v545 = vsel %vm500, %v543, %v544
        %v546 = vrot.slane %v296, 7
        %v547 = vrot.slane %v297, 7
        %v548 = vsel %vm500, %v546, %v547
        %v581 = vsub.f32 %v266, %v501
        %v582 = vsub.f32 %v267, %v503
        %v583 = vsub.f32 %v268, %v504
        %v584 = vsub.f32 %v269, %v506
        %v585 = vsub.f32 %v270, %v507
        %v586 = vsub.f32 %v271, %v509
        %v587 = vsub.f32 %v272, %v510
        %v588 = vsub.f32 %v273, %v512
        %v589 = vsub.f32 %v274, %v513
        %v590 = vsub.f32 %v275, %v515
        %v591 = vsub.f32 %v276, %v516
        %v592 = vsub.f32 %v277, %v518
        %v593 = vsub.f32 %v278, %v519
        %v594 = vsub.f32 %v279, %v521
        %v595 = vsub.f32 %v280, %v522
        %v596 = vsub.f32 %v281, %v524
        %v597 = vsub.f32 %v282, %v525
        %v598 = vsub.f32 %v283, %v527
        %v599 = vsub.f32 %v284, %v528
        %v600 = vsub.f32 %v285, %v530
        %v601 = vsub.f32 %v286, %v531
        %v602 = vsub.f32 %v287, %v533
        %v603 = vsub.f32 %v288, %v534
        %v604 = vsub.f32 %v289, %v536
        %v605 = vsub.f32 %v290, %v537
        %v606 = vsub.f32 %v291, %v539
        %v607 = vsub.f32 %v292, %v540
        %v608 = vsub.f32 %v293, %v542
        %v609 = vsub.f32 %v294, %v543
        %v610 = vsub.f32 %v295, %v545
        %v611 = vsub.f32 %v296, %v546
        %v612 = vsub.f32 %v297, %v548
        %v613 = vmul.f32 %v581, %v581
        %v614 = vmul.f32 %v582, %v582
        %v615 = vmul.f32 %v583, %v583
        %v616 = vmul.f32 %v584, %v584
        %v617 = vmul.f32 %v585, %v585
        %v618 = vmul.f32 %v586, %v586
        %v619 = vmul.f32 %v587, %v587
        %v620 = vmul.f32 %v588, %v588
        %v621 = vmul.f32 %v589, %v589
        %v622 = vmul.f32 %v590, %v590
        %v623 = vmul.f32 %v591, %v591
        %v624 = vmul.f32 %v592, %v592
        %v625 = vmul.f32 %v593, %v593
        %v626 = vmul.f32 %v594, %v594
        %v627 = vmul.f32 %v595, %v595
        %v628 = vmul.f32 %v596, %v596
        %v629 = vmul.f32 %v597, %v597
        %v630 = vmul.f32 %v598, %v598
        %v631 = vmul.f32 %v599, %v599
        %v632 = vmul.f32 %v600, %v600
        %v633 = vmul.f32 %v601, %v601
        %v634 = vmul.f32 %v602, %v602
        %v635 = vmul.f32 %v603, %v603
        %v636 = vmul.f32 %v604, %v604
        %v637 = vmul.f32 %v605, %v605
        %v638 = vmul.f32 %v606, %v606
        %v639 = vmul.f32 %v607, %v607
        %v640 = vmul.f32 %v608, %v608
        %v641 = vmul.f32 %v609, %v609
        %v642 = vmul.f32 %v610, %v610
        %v643 = vmul.f32 %v611, %v611
        %v644 = vmul.f32 %v612, %v612
        %vm677 = vcmask 1046528
        %v678 = vrot.slane %v613, 1
        %v679 = vrot.slane %v614, 1
        %v680 = vsel %vm677, %v678, %v679
        %v681 = vrot.slane %v615, 1
        %v682 = vrot.slane %v616, 1
        %v683 = vsel %vm677, %v681, %v682
        %v684 = vrot.slane %v617, 1
        %v685 = vrot.slane %v618, 1
        %v686 = vsel %vm677, %v684, %v685
        %v687 = vrot.slane %v619, 1
        %v688 = vrot.slane %v620, 1
        %v689 = vsel %vm677, %v687, %v688
        %v690 = vrot.slane %v621, 1
        %v691 = vrot.slane %v622, 1
        %v692 = vsel %vm677, %v690, %v691
        %v693 = vrot.slane %v623, 1
        %v694 = vrot.slane %v624, 1
        %v695 = vsel %vm677, %v693, %v694
        %v696 = vrot.slane %v625, 1
        %v697 = vrot.slane %v626, 1
        %v698 = vsel %vm677, %v696, %v697
        %v699 = vrot.slane %v627, 1
        %v700 = vrot.slane %v628, 1
        %v701 = vsel %vm677, %v699, %v700
        %v702 = vrot.slane %v629, 1
        %v703 = vrot.slane %v630, 1
        %v704 = vsel %vm677, %v702, %v703
        %v705 = vrot.slane %v631, 1
        %v706 = vrot.slane %v632, 1
        %v707 = vsel %vm677, %v705, %v706
        %v708 = vrot.slane %v633, 1
        %v709 = vrot.slane %v634, 1
        %v710 = vsel %vm677, %v708, %v709
        %v711 = vrot.slane %v635, 1
        %v712 = vrot.slane %v636, 1
        %v713 = vsel %vm677, %v711, %v712
        %v714 = vrot.slane %v637, 1
        %v715 = vrot.slane %v638, 1
        %v716 = vsel %vm677, %v714, %v715
        %v717 = vrot.slane %v639, 1
        %v718 = vrot.slane %v640, 1
        %v719 = vsel %vm677, %v717, %v718
        %v720 = vrot.slane %v641, 1
        %v721 = vrot.slane %v642, 1
        %v722 = vsel %vm677, %v720, %v721
        %v723 = vrot.slane %v643, 1
        %v724 = vrot.slane %v644, 1
        %v725 = vsel %vm677, %v723, %v724
        %v758 = vsel %vm677, %v679, 0.0
        %v759 = vadd.f32 %v680, %v758
        %v760 = vadd.f32 %v759, %v683
        %v761 = vsel %vm677, %v682, 0.0
        %v762 = vadd.f32 %v760, %v761
        %v763 = vadd.f32 %v762, %v686
        %v764 = vsel %vm677, %v685, 0.0
        %v765 = vadd.f32 %v763, %v764
        %v766 = vadd.f32 %v765, %v689
        %v767 = vsel %vm677, %v688, 0.0
        %v768 = vadd.f32 %v766, %v767
        %v769 = vadd.f32 %v768, %v692
        %v770 = vsel %vm677, %v691, 0.0
        %v771 = vadd.f32 %v769, %v770
        %v772 = vadd.f32 %v771, %v695
        %v773 = vsel %vm677, %v694, 0.0
        %v774 = vadd.f32 %v772, %v773
        %v775 = vadd.f32 %v774, %v698
        %v776 = vsel %vm677, %v697, 0.0
        %v777 = vadd.f32 %v775, %v776
        %v778 = vadd.f32 %v777, %v701
        %v779 = vsel %vm677, %v700, 0.0
        %v780 = vadd.f32 %v778, %v779
        %v781 = vadd.f32 %v780, %v704
        %v782 = vsel %vm677, %v703, 0.0
        %v783 = vadd.f32 %v781, %v782
        %v784 = vadd.f32 %v783, %v707
        %v785 = vsel %vm677, %v706, 0.0
        %v786 = vadd.f32 %v784, %v785
        %v787 = vadd.f32 %v786, %v710
        %v788 = vsel %vm677, %v709, 0.0
        %v789 = vadd.f32 %v787, %v788
        %v790 = vadd.f32 %v789, %v713
        %v791 = vsel %vm677, %v712, 0.0
        %v792 = vadd.f32 %v790, %v791
        %v793 = vadd.f32 %v792, %v716
        %v794 = vsel %vm677, %v715, 0.0
        %v795 = vadd.f32 %v793, %v794
        %v796 = vadd.f32 %v795, %v719
        %v797 = vsel %vm677, %v718, 0.0
        %v798 = vadd.f32 %v796, %v797
        %v799 = vadd.f32 %v798, %v722
        %v800 = vsel %vm677, %v721, 0.0
        %v801 = vadd.f32 %v799, %v800
        %v802 = vadd.f32 %v801, %v725
        %v803 = vsel %vm677, %v724, 0.0
        %v804 = vadd.f32 %v802, %v803
        %805 = vadd.xlane.f32.xlu0 %v804
        %v806 = vpop.xlane.xlu0 %805
        %v807 = vrot.slane %v806, 4
        %v808 = vadd.f32 %v806, %v807
        %v809 = vrot.slane %v808, 2
        %v810 = vadd.f32 %v808, %v809
        %v811 = vrot.slane %v810, 1
        %v812 = vadd.f32 %v810, %v811
        %s813 = vtos %v812
        %814 = vrot.lane.b32.xlu0 %v266, 1
        %v815 = vpop.permute.xlu0 %814
        %816 = vrot.lane.b32.xlu0 %v267, 1
        %v817 = vpop.permute.xlu0 %816
        %818 = vrot.lane.b32.xlu0 %v268, 1
        %v819 = vpop.permute.xlu0 %818
        %820 = vrot.lane.b32.xlu0 %v269, 1
        %v821 = vpop.permute.xlu0 %820
        %822 = vrot.lane.b32.xlu0 %v270, 1
        %v823 = vpop.permute.xlu0 %822
        %824 = vrot.lane.b32.xlu0 %v271, 1
        %v825 = vpop.permute.xlu0 %824
        %826 = vrot.lane.b32.xlu0 %v272, 1
        %v827 = vpop.permute.xlu0 %826
        %828 = vrot.lane.b32.xlu0 %v273, 1
        %v829 = vpop.permute.xlu0 %828
        %830 = vrot.lane.b32.xlu0 %v274, 1
        %v831 = vpop.permute.xlu0 %830
        %832 = vrot.lane.b32.xlu0 %v275, 1
        %v833 = vpop.permute.xlu0 %832
        %834 = vrot.lane.b32.xlu0 %v276, 1
        %v835 = vpop.permute.xlu0 %834
        %836 = vrot.lane.b32.xlu0 %v277, 1
        %v837 = vpop.permute.xlu0 %836
        %838 = vrot.lane.b32.xlu0 %v278, 1
        %v839 = vpop.permute.xlu0 %838
        %840 = vrot.lane.b32.xlu0 %v279, 1
        %v841 = vpop.permute.xlu0 %840
        %842 = vrot.lane.b32.xlu0 %v280, 1
        %v843 = vpop.permute.xlu0 %842
        %844 = vrot.lane.b32.xlu0 %v281, 1
        %v845 = vpop.permute.xlu0 %844
        %846 = vrot.lane.b32.xlu0 %v282, 1
        %v847 = vpop.permute.xlu0 %846
        %848 = vrot.lane.b32.xlu0 %v283, 1
        %v849 = vpop.permute.xlu0 %848
        %850 = vrot.lane.b32.xlu0 %v284, 1
        %v851 = vpop.permute.xlu0 %850
        %852 = vrot.lane.b32.xlu0 %v285, 1
        %v853 = vpop.permute.xlu0 %852
        %854 = vrot.lane.b32.xlu0 %v286, 1
        %v855 = vpop.permute.xlu0 %854
        %856 = vrot.lane.b32.xlu0 %v287, 1
        %v857 = vpop.permute.xlu0 %856
        %858 = vrot.lane.b32.xlu0 %v288, 1
        %v859 = vpop.permute.xlu0 %858
        %860 = vrot.lane.b32.xlu0 %v289, 1
        %v861 = vpop.permute.xlu0 %860
        %862 = vrot.lane.b32.xlu0 %v290, 1
        %v863 = vpop.permute.xlu0 %862
        %864 = vrot.lane.b32.xlu0 %v291, 1
        %v865 = vpop.permute.xlu0 %864
        %866 = vrot.lane.b32.xlu0 %v292, 1
        %v867 = vpop.permute.xlu0 %866
        %868 = vrot.lane.b32.xlu0 %v293, 1
        %v869 = vpop.permute.xlu0 %868
        %870 = vrot.lane.b32.xlu0 %v294, 1
        %v871 = vpop.permute.xlu0 %870
        %872 = vrot.lane.b32.xlu0 %v295, 1
        %v873 = vpop.permute.xlu0 %872
        %874 = vrot.lane.b32.xlu0 %v296, 1
        %v875 = vpop.permute.xlu0 %874
        %876 = vrot.lane.b32.xlu0 %v297, 1
        %v877 = vpop.permute.xlu0 %876
        %v910 = vsub.f32 %v266, %v815
        %v911 = vsub.f32 %v267, %v817
        %v912 = vsub.f32 %v268, %v819
        %v913 = vsub.f32 %v269, %v821
        %v914 = vsub.f32 %v270, %v823
        %v915 = vsub.f32 %v271, %v825
        %v916 = vsub.f32 %v272, %v827
        %v917 = vsub.f32 %v273, %v829
        %v918 = vsub.f32 %v274, %v831
        %v919 = vsub.f32 %v275, %v833
        %v920 = vsub.f32 %v276, %v835
        %v921 = vsub.f32 %v277, %v837
        %v922 = vsub.f32 %v278, %v839
        %v923 = vsub.f32 %v279, %v841
        %v924 = vsub.f32 %v280, %v843
        %v925 = vsub.f32 %v281, %v845
        %v926 = vsub.f32 %v282, %v847
        %v927 = vsub.f32 %v283, %v849
        %v928 = vsub.f32 %v284, %v851
        %v929 = vsub.f32 %v285, %v853
        %v930 = vsub.f32 %v286, %v855
        %v931 = vsub.f32 %v287, %v857
        %v932 = vsub.f32 %v288, %v859
        %v933 = vsub.f32 %v289, %v861
        %v934 = vsub.f32 %v290, %v863
        %v935 = vsub.f32 %v291, %v865
        %v936 = vsub.f32 %v292, %v867
        %v937 = vsub.f32 %v293, %v869
        %v938 = vsub.f32 %v294, %v871
        %v939 = vsub.f32 %v295, %v873
        %v940 = vsub.f32 %v296, %v875
        %v941 = vsub.f32 %v297, %v877
        %v942 = vmul.f32 %v910, %v910
        %v943 = vmul.f32 %v911, %v911
        %v944 = vmul.f32 %v912, %v912
        %v945 = vmul.f32 %v913, %v913
        %v946 = vmul.f32 %v914, %v914
        %v947 = vmul.f32 %v915, %v915
        %v948 = vmul.f32 %v916, %v916
        %v949 = vmul.f32 %v917, %v917
        %v950 = vmul.f32 %v918, %v918
        %v951 = vmul.f32 %v919, %v919
        %v952 = vmul.f32 %v920, %v920
        %v953 = vmul.f32 %v921, %v921
        %v954 = vmul.f32 %v922, %v922
        %v955 = vmul.f32 %v923, %v923
        %v956 = vmul.f32 %v924, %v924
        %v957 = vmul.f32 %v925, %v925
        %v958 = vmul.f32 %v926, %v926
        %v959 = vmul.f32 %v927, %v927
        %v960 = vmul.f32 %v928, %v928
        %v961 = vmul.f32 %v929, %v929
        %v962 = vmul.f32 %v930, %v930
        %v963 = vmul.f32 %v931, %v931
        %v964 = vmul.f32 %v932, %v932
        %v965 = vmul.f32 %v933, %v933
        %v966 = vmul.f32 %v934, %v934
        %v967 = vmul.f32 %v935, %v935
        %v968 = vmul.f32 %v936, %v936
        %v969 = vmul.f32 %v937, %v937
        %v970 = vmul.f32 %v938, %v938
        %v971 = vmul.f32 %v939, %v939
        %v972 = vmul.f32 %v940, %v940
        %v973 = vmul.f32 %v941, %v941
        %1006 = vrot.lane.b32.xlu0 %v942, 127
        %v1007 = vpop.permute.xlu0 %1006
        %1008 = vrot.lane.b32.xlu0 %v943, 127
        %v1009 = vpop.permute.xlu0 %1008
        %1010 = vrot.lane.b32.xlu0 %v944, 127
        %v1011 = vpop.permute.xlu0 %1010
        %1012 = vrot.lane.b32.xlu0 %v945, 127
        %v1013 = vpop.permute.xlu0 %1012
        %1014 = vrot.lane.b32.xlu0 %v946, 127
        %v1015 = vpop.permute.xlu0 %1014
        %1016 = vrot.lane.b32.xlu0 %v947, 127
        %v1017 = vpop.permute.xlu0 %1016
        %1018 = vrot.lane.b32.xlu0 %v948, 127
        %v1019 = vpop.permute.xlu0 %1018
        %1020 = vrot.lane.b32.xlu0 %v949, 127
        %v1021 = vpop.permute.xlu0 %1020
        %1022 = vrot.lane.b32.xlu0 %v950, 127
        %v1023 = vpop.permute.xlu0 %1022
        %1024 = vrot.lane.b32.xlu0 %v951, 127
        %v1025 = vpop.permute.xlu0 %1024
        %1026 = vrot.lane.b32.xlu0 %v952, 127
        %v1027 = vpop.permute.xlu0 %1026
        %1028 = vrot.lane.b32.xlu0 %v953, 127
        %v1029 = vpop.permute.xlu0 %1028
        %1030 = vrot.lane.b32.xlu0 %v954, 127
        %v1031 = vpop.permute.xlu0 %1030
        %1032 = vrot.lane.b32.xlu0 %v955, 127
        %v1033 = vpop.permute.xlu0 %1032
        %1034 = vrot.lane.b32.xlu0 %v956, 127
        %v1035 = vpop.permute.xlu0 %1034
        %1036 = vrot.lane.b32.xlu0 %v957, 127
        %v1037 = vpop.permute.xlu0 %1036
        %1038 = vrot.lane.b32.xlu0 %v958, 127
        %v1039 = vpop.permute.xlu0 %1038
        %1040 = vrot.lane.b32.xlu0 %v959, 127
        %v1041 = vpop.permute.xlu0 %1040
        %1042 = vrot.lane.b32.xlu0 %v960, 127
        %v1043 = vpop.permute.xlu0 %1042
        %1044 = vrot.lane.b32.xlu0 %v961, 127
        %v1045 = vpop.permute.xlu0 %1044
        %1046 = vrot.lane.b32.xlu0 %v962, 127
        %v1047 = vpop.permute.xlu0 %1046
        %1048 = vrot.lane.b32.xlu0 %v963, 127
        %v1049 = vpop.permute.xlu0 %1048
        %1050 = vrot.lane.b32.xlu0 %v964, 127
        %v1051 = vpop.permute.xlu0 %1050
        %1052 = vrot.lane.b32.xlu0 %v965, 127
        %v1053 = vpop.permute.xlu0 %1052
        %1054 = vrot.lane.b32.xlu0 %v966, 127
        %v1055 = vpop.permute.xlu0 %1054
        %1056 = vrot.lane.b32.xlu0 %v967, 127
        %v1057 = vpop.permute.xlu0 %1056
        %1058 = vrot.lane.b32.xlu0 %v968, 127
        %v1059 = vpop.permute.xlu0 %1058
        %1060 = vrot.lane.b32.xlu0 %v969, 127
        %v1061 = vpop.permute.xlu0 %1060
        %1062 = vrot.lane.b32.xlu0 %v970, 127
        %v1063 = vpop.permute.xlu0 %1062
        %1064 = vrot.lane.b32.xlu0 %v971, 127
        %v1065 = vpop.permute.xlu0 %1064
        %1066 = vrot.lane.b32.xlu0 %v972, 127
        %v1067 = vpop.permute.xlu0 %1066
        %1068 = vrot.lane.b32.xlu0 %v973, 127
        %v1069 = vpop.permute.xlu0 %1068
        %vm1102 = vcmask 1039360
        %v1103 = vsel %vm1102, %v1007, 0.0
        %v1104 = vsel %vm1102, %v1009, 0.0
        %v1105 = vadd.f32 %v1103, %v1104
        %v1106 = vsel %vm1102, %v1011, 0.0
        %v1107 = vadd.f32 %v1105, %v1106
        %v1108 = vsel %vm1102, %v1013, 0.0
        %v1109 = vadd.f32 %v1107, %v1108
        %v1110 = vsel %vm1102, %v1015, 0.0
        %v1111 = vadd.f32 %v1109, %v1110
        %v1112 = vsel %vm1102, %v1017, 0.0
        %v1113 = vadd.f32 %v1111, %v1112
        %v1114 = vsel %vm1102, %v1019, 0.0
        %v1115 = vadd.f32 %v1113, %v1114
        %v1116 = vsel %vm1102, %v1021, 0.0
        %v1117 = vadd.f32 %v1115, %v1116
        %v1118 = vsel %vm1102, %v1023, 0.0
        %v1119 = vadd.f32 %v1117, %v1118
        %v1120 = vsel %vm1102, %v1025, 0.0
        %v1121 = vadd.f32 %v1119, %v1120
        %v1122 = vsel %vm1102, %v1027, 0.0
        %v1123 = vadd.f32 %v1121, %v1122
        %v1124 = vsel %vm1102, %v1029, 0.0
        %v1125 = vadd.f32 %v1123, %v1124
        %v1126 = vsel %vm1102, %v1031, 0.0
        %v1127 = vadd.f32 %v1125, %v1126
        %v1128 = vsel %vm1102, %v1033, 0.0
        %v1129 = vadd.f32 %v1127, %v1128
        %v1130 = vsel %vm1102, %v1035, 0.0
        %v1131 = vadd.f32 %v1129, %v1130
        %v1132 = vsel %vm1102, %v1037, 0.0
        %v1133 = vadd.f32 %v1131, %v1132
        %v1134 = vsel %vm1102, %v1039, 0.0
        %v1135 = vadd.f32 %v1133, %v1134
        %v1136 = vsel %vm1102, %v1041, 0.0
        %v1137 = vadd.f32 %v1135, %v1136
        %v1138 = vsel %vm1102, %v1043, 0.0
        %v1139 = vadd.f32 %v1137, %v1138
        %v1140 = vsel %vm1102, %v1045, 0.0
        %v1141 = vadd.f32 %v1139, %v1140
        %v1142 = vsel %vm1102, %v1047, 0.0
        %v1143 = vadd.f32 %v1141, %v1142
        %v1144 = vsel %vm1102, %v1049, 0.0
        %v1145 = vadd.f32 %v1143, %v1144
        %v1146 = vsel %vm1102, %v1051, 0.0
        %v1147 = vadd.f32 %v1145, %v1146
        %v1148 = vsel %vm1102, %v1053, 0.0
        %v1149 = vadd.f32 %v1147, %v1148
        %v1150 = vsel %vm1102, %v1055, 0.0
        %v1151 = vadd.f32 %v1149, %v1150
        %v1152 = vsel %vm1102, %v1057, 0.0
        %v1153 = vadd.f32 %v1151, %v1152
        %v1154 = vsel %vm1102, %v1059, 0.0
        %v1155 = vadd.f32 %v1153, %v1154
        %v1156 = vsel %vm1102, %v1061, 0.0
        %v1157 = vadd.f32 %v1155, %v1156
        %v1158 = vsel %vm1102, %v1063, 0.0
        %v1159 = vadd.f32 %v1157, %v1158
        %v1160 = vsel %vm1102, %v1065, 0.0
        %v1161 = vadd.f32 %v1159, %v1160
        %v1162 = vsel %vm1102, %v1067, 0.0
        %v1163 = vadd.f32 %v1161, %v1162
        %v1164 = vsel %vm1102, %v1069, 0.0
        %v1165 = vadd.f32 %v1163, %v1164
        %1166 = vadd.xlane.f32.xlu0 %v1165
        %v1167 = vpop.xlane.xlu0 %1166
        %v1168 = vrot.slane %v1167, 4
        %v1169 = vadd.f32 %v1167, %v1168
        %v1170 = vrot.slane %v1169, 2
        %v1171 = vadd.f32 %v1169, %v1170
        %v1172 = vrot.slane %v1171, 1
        %v1173 = vadd.f32 %v1171, %v1172
        %s1174 = vtos %v1173
        %v1175 = vmul.f32 %v202, %v202
        %v1176 = vmul.f32 %v203, %v203
        %v1177 = vmul.f32 %v204, %v204
        %v1178 = vmul.f32 %v205, %v205
        %v1179 = vmul.f32 %v206, %v206
        %v1180 = vmul.f32 %v207, %v207
        %v1181 = vmul.f32 %v208, %v208
        %v1182 = vmul.f32 %v209, %v209
        %v1183 = vmul.f32 %v210, %v210
        %v1184 = vmul.f32 %v211, %v211
        %v1185 = vmul.f32 %v212, %v212
        %v1186 = vmul.f32 %v213, %v213
        %v1187 = vmul.f32 %v214, %v214
        %v1188 = vmul.f32 %v215, %v215
        %v1189 = vmul.f32 %v216, %v216
        %v1190 = vmul.f32 %v217, %v217
        %v1191 = vmul.f32 %v218, %v218
        %v1192 = vmul.f32 %v219, %v219
        %v1193 = vmul.f32 %v220, %v220
        %v1194 = vmul.f32 %v221, %v221
        %v1195 = vmul.f32 %v222, %v222
        %v1196 = vmul.f32 %v223, %v223
        %v1197 = vmul.f32 %v224, %v224
        %v1198 = vmul.f32 %v225, %v225
        %v1199 = vmul.f32 %v226, %v226
        %v1200 = vmul.f32 %v227, %v227
        %v1201 = vmul.f32 %v228, %v228
        %v1202 = vmul.f32 %v229, %v229
        %v1203 = vmul.f32 %v230, %v230
        %v1204 = vmul.f32 %v231, %v231
        %v1205 = vmul.f32 %v232, %v232
        %v1206 = vmul.f32 %v233, %v233
        %v1207 = vmul.f32 %v234, %v234
        %v1208 = vmul.f32 %v235, %v235
        %v1209 = vmul.f32 %v236, %v236
        %v1210 = vmul.f32 %v237, %v237
        %v1211 = vmul.f32 %v238, %v238
        %v1212 = vmul.f32 %v239, %v239
        %v1213 = vmul.f32 %v240, %v240
        %v1214 = vmul.f32 %v241, %v241
        %v1215 = vmul.f32 %v242, %v242
        %v1216 = vmul.f32 %v243, %v243
        %v1217 = vmul.f32 %v244, %v244
        %v1218 = vmul.f32 %v245, %v245
        %v1219 = vmul.f32 %v246, %v246
        %v1220 = vmul.f32 %v247, %v247
        %v1221 = vmul.f32 %v248, %v248
        %v1222 = vmul.f32 %v249, %v249
        %v1223 = vmul.f32 %v250, %v250
        %v1224 = vmul.f32 %v251, %v251
        %v1225 = vmul.f32 %v252, %v252
        %v1226 = vmul.f32 %v253, %v253
        %v1227 = vmul.f32 %v254, %v254
        %v1228 = vmul.f32 %v255, %v255
        %v1229 = vmul.f32 %v256, %v256
        %v1230 = vmul.f32 %v257, %v257
        %v1231 = vmul.f32 %v258, %v258
        %v1232 = vmul.f32 %v259, %v259
        %v1233 = vmul.f32 %v260, %v260
        %v1234 = vmul.f32 %v261, %v261
        %v1235 = vmul.f32 %v262, %v262
        %v1236 = vmul.f32 %v263, %v263
        %v1237 = vmul.f32 %v264, %v264
        %v1238 = vmul.f32 %v265, %v265
        %v1239 = vmul.f32 %v202, %v234
        %v1240 = vmul.f32 %v203, %v235
        %v1241 = vmul.f32 %v204, %v236
        %v1242 = vmul.f32 %v205, %v237
        %v1243 = vmul.f32 %v206, %v238
        %v1244 = vmul.f32 %v207, %v239
        %v1245 = vmul.f32 %v208, %v240
        %v1246 = vmul.f32 %v209, %v241
        %v1247 = vmul.f32 %v210, %v242
        %v1248 = vmul.f32 %v211, %v243
        %v1249 = vmul.f32 %v212, %v244
        %v1250 = vmul.f32 %v213, %v245
        %v1251 = vmul.f32 %v214, %v246
        %v1252 = vmul.f32 %v215, %v247
        %v1253 = vmul.f32 %v216, %v248
        %v1254 = vmul.f32 %v217, %v249
        %v1255 = vmul.f32 %v218, %v250
        %v1256 = vmul.f32 %v219, %v251
        %v1257 = vmul.f32 %v220, %v252
        %v1258 = vmul.f32 %v221, %v253
        %v1259 = vmul.f32 %v222, %v254
        %v1260 = vmul.f32 %v223, %v255
        %v1261 = vmul.f32 %v224, %v256
        %v1262 = vmul.f32 %v225, %v257
        %v1263 = vmul.f32 %v226, %v258
        %v1264 = vmul.f32 %v227, %v259
        %v1265 = vmul.f32 %v228, %v260
        %v1266 = vmul.f32 %v229, %v261
        %v1267 = vmul.f32 %v230, %v262
        %v1268 = vmul.f32 %v231, %v263
        %v1269 = vmul.f32 %v232, %v264
        %v1270 = vmul.f32 %v233, %v265
        %v1271 = vmul.f32 %v202, 0.0053621056
        %v1272 = vmul.f32 %v203, 0.0053621056
        %v1273 = vmul.f32 %v204, 0.0053621056
        %v1274 = vmul.f32 %v205, 0.0053621056
        %v1275 = vmul.f32 %v206, 0.0053621056
        %v1276 = vmul.f32 %v207, 0.0053621056
        %v1277 = vmul.f32 %v208, 0.0053621056
        %v1278 = vmul.f32 %v209, 0.0053621056
        %v1279 = vmul.f32 %v210, 0.0053621056
        %v1280 = vmul.f32 %v211, 0.0053621056
        %v1281 = vmul.f32 %v212, 0.0053621056
        %v1282 = vmul.f32 %v213, 0.0053621056
        %v1283 = vmul.f32 %v234, 0.0053621056
        %v1284 = vmul.f32 %v235, 0.0053621056
        %v1285 = vmul.f32 %v236, 0.0053621056
        %v1286 = vmul.f32 %v237, 0.0053621056
        %v1287 = vmul.f32 %v238, 0.0053621056
        %v1288 = vmul.f32 %v239, 0.0053621056
        %v1289 = vmul.f32 %v240, 0.0053621056
        %v1290 = vmul.f32 %v241, 0.0053621056
        %v1291 = vmul.f32 %v242, 0.0053621056
        %v1292 = vmul.f32 %v243, 0.0053621056
        %v1293 = vmul.f32 %v244, 0.0053621056
        %v1294 = vmul.f32 %v245, 0.0053621056
        %v1295 = vmul.f32 %v1175, 0.0053621056
        %v1296 = vmul.f32 %v1176, 0.0053621056
        %v1297 = vmul.f32 %v1177, 0.0053621056
        %v1298 = vmul.f32 %v1178, 0.0053621056
        %v1299 = vmul.f32 %v1179, 0.0053621056
        %v1300 = vmul.f32 %v1180, 0.0053621056
        %v1301 = vmul.f32 %v1181, 0.0053621056
        %v1302 = vmul.f32 %v1182, 0.0053621056
        %v1303 = vmul.f32 %v1183, 0.0053621056
        %v1304 = vmul.f32 %v1184, 0.0053621056
        %v1305 = vmul.f32 %v1185, 0.0053621056
        %v1306 = vmul.f32 %v1186, 0.0053621056
        %v1307 = vmul.f32 %v1207, 0.0053621056
        %v1308 = vmul.f32 %v1208, 0.0053621056
        %v1309 = vmul.f32 %v1209, 0.0053621056
        %v1310 = vmul.f32 %v1210, 0.0053621056
        %v1311 = vmul.f32 %v1211, 0.0053621056
        %v1312 = vmul.f32 %v1212, 0.0053621056
        %v1313 = vmul.f32 %v1213, 0.0053621056
        %v1314 = vmul.f32 %v1214, 0.0053621056
        %v1315 = vmul.f32 %v1215, 0.0053621056
        %v1316 = vmul.f32 %v1216, 0.0053621056
        %v1317 = vmul.f32 %v1217, 0.0053621056
        %v1318 = vmul.f32 %v1218, 0.0053621056
        %v1319 = vmul.f32 %v1239, 0.0053621056
        %v1320 = vmul.f32 %v1240, 0.0053621056
        %v1321 = vmul.f32 %v1241, 0.0053621056
        %v1322 = vmul.f32 %v1242, 0.0053621056
        %v1323 = vmul.f32 %v1243, 0.0053621056
        %v1324 = vmul.f32 %v1244, 0.0053621056
        %v1325 = vmul.f32 %v1245, 0.0053621056
        %v1326 = vmul.f32 %v1246, 0.0053621056
        %v1327 = vmul.f32 %v1247, 0.0053621056
        %v1328 = vmul.f32 %v1248, 0.0053621056
        %v1329 = vmul.f32 %v1249, 0.0053621056
        %v1330 = vmul.f32 %v1250, 0.0053621056
        %v1331 = vmul.f32 %v204, 0.020342048
        %v1332 = vmul.f32 %v205, 0.020342048
        %v1333 = vmul.f32 %v206, 0.020342048
        %v1334 = vmul.f32 %v207, 0.020342048
        %v1335 = vmul.f32 %v208, 0.020342048
        %v1336 = vmul.f32 %v209, 0.020342048
        %v1337 = vmul.f32 %v210, 0.020342048
        %v1338 = vmul.f32 %v211, 0.020342048
        %v1339 = vmul.f32 %v212, 0.020342048
        %v1340 = vmul.f32 %v213, 0.020342048
        %v1341 = vmul.f32 %v214, 0.020342048
        %v1342 = vmul.f32 %v215, 0.020342048
        %v1343 = vmul.f32 %v236, 0.020342048
        %v1344 = vmul.f32 %v237, 0.020342048
        %v1345 = vmul.f32 %v238, 0.020342048
        %v1346 = vmul.f32 %v239, 0.020342048
        %v1347 = vmul.f32 %v240, 0.020342048
        %v1348 = vmul.f32 %v241, 0.020342048
        %v1349 = vmul.f32 %v242, 0.020342048
        %v1350 = vmul.f32 %v243, 0.020342048
        %v1351 = vmul.f32 %v244, 0.020342048
        %v1352 = vmul.f32 %v245, 0.020342048
        %v1353 = vmul.f32 %v246, 0.020342048
        %v1354 = vmul.f32 %v247, 0.020342048
        %v1355 = vmul.f32 %v1177, 0.020342048
        %v1356 = vmul.f32 %v1178, 0.020342048
        %v1357 = vmul.f32 %v1179, 0.020342048
        %v1358 = vmul.f32 %v1180, 0.020342048
        %v1359 = vmul.f32 %v1181, 0.020342048
        %v1360 = vmul.f32 %v1182, 0.020342048
        %v1361 = vmul.f32 %v1183, 0.020342048
        %v1362 = vmul.f32 %v1184, 0.020342048
        %v1363 = vmul.f32 %v1185, 0.020342048
        %v1364 = vmul.f32 %v1186, 0.020342048
        %v1365 = vmul.f32 %v1187, 0.020342048
        %v1366 = vmul.f32 %v1188, 0.020342048
        %v1367 = vmul.f32 %v1209, 0.020342048
        %v1368 = vmul.f32 %v1210, 0.020342048
        %v1369 = vmul.f32 %v1211, 0.020342048
        %v1370 = vmul.f32 %v1212, 0.020342048
        %v1371 = vmul.f32 %v1213, 0.020342048
        %v1372 = vmul.f32 %v1214, 0.020342048
        %v1373 = vmul.f32 %v1215, 0.020342048
        %v1374 = vmul.f32 %v1216, 0.020342048
        %v1375 = vmul.f32 %v1217, 0.020342048
        %v1376 = vmul.f32 %v1218, 0.020342048
        %v1377 = vmul.f32 %v1219, 0.020342048
        %v1378 = vmul.f32 %v1220, 0.020342048
        %v1379 = vmul.f32 %v1241, 0.020342048
        %v1380 = vmul.f32 %v1242, 0.020342048
        %v1381 = vmul.f32 %v1243, 0.020342048
        %v1382 = vmul.f32 %v1244, 0.020342048
        %v1383 = vmul.f32 %v1245, 0.020342048
        %v1384 = vmul.f32 %v1246, 0.020342048
        %v1385 = vmul.f32 %v1247, 0.020342048
        %v1386 = vmul.f32 %v1248, 0.020342048
        %v1387 = vmul.f32 %v1249, 0.020342048
        %v1388 = vmul.f32 %v1250, 0.020342048
        %v1389 = vmul.f32 %v1251, 0.020342048
        %v1390 = vmul.f32 %v1252, 0.020342048
        %v1391 = vadd.f32 %v1271, %v1331
        %v1392 = vadd.f32 %v1272, %v1332
        %v1393 = vadd.f32 %v1273, %v1333
        %v1394 = vadd.f32 %v1274, %v1334
        %v1395 = vadd.f32 %v1275, %v1335
        %v1396 = vadd.f32 %v1276, %v1336
        %v1397 = vadd.f32 %v1277, %v1337
        %v1398 = vadd.f32 %v1278, %v1338
        %v1399 = vadd.f32 %v1279, %v1339
        %v1400 = vadd.f32 %v1280, %v1340
        %v1401 = vadd.f32 %v1281, %v1341
        %v1402 = vadd.f32 %v1282, %v1342
        %v1403 = vadd.f32 %v1283, %v1343
        %v1404 = vadd.f32 %v1284, %v1344
        %v1405 = vadd.f32 %v1285, %v1345
        %v1406 = vadd.f32 %v1286, %v1346
        %v1407 = vadd.f32 %v1287, %v1347
        %v1408 = vadd.f32 %v1288, %v1348
        %v1409 = vadd.f32 %v1289, %v1349
        %v1410 = vadd.f32 %v1290, %v1350
        %v1411 = vadd.f32 %v1291, %v1351
        %v1412 = vadd.f32 %v1292, %v1352
        %v1413 = vadd.f32 %v1293, %v1353
        %v1414 = vadd.f32 %v1294, %v1354
        %v1415 = vadd.f32 %v1295, %v1355
        %v1416 = vadd.f32 %v1296, %v1356
        %v1417 = vadd.f32 %v1297, %v1357
        %v1418 = vadd.f32 %v1298, %v1358
        %v1419 = vadd.f32 %v1299, %v1359
        %v1420 = vadd.f32 %v1300, %v1360
        %v1421 = vadd.f32 %v1301, %v1361
        %v1422 = vadd.f32 %v1302, %v1362
        %v1423 = vadd.f32 %v1303, %v1363
        %v1424 = vadd.f32 %v1304, %v1364
        %v1425 = vadd.f32 %v1305, %v1365
        %v1426 = vadd.f32 %v1306, %v1366
        %v1427 = vadd.f32 %v1307, %v1367
        %v1428 = vadd.f32 %v1308, %v1368
        %v1429 = vadd.f32 %v1309, %v1369
        %v1430 = vadd.f32 %v1310, %v1370
        %v1431 = vadd.f32 %v1311, %v1371
        %v1432 = vadd.f32 %v1312, %v1372
        %v1433 = vadd.f32 %v1313, %v1373
        %v1434 = vadd.f32 %v1314, %v1374
        %v1435 = vadd.f32 %v1315, %v1375
        %v1436 = vadd.f32 %v1316, %v1376
        %v1437 = vadd.f32 %v1317, %v1377
        %v1438 = vadd.f32 %v1318, %v1378
        %v1439 = vadd.f32 %v1319, %v1379
        %v1440 = vadd.f32 %v1320, %v1380
        %v1441 = vadd.f32 %v1321, %v1381
        %v1442 = vadd.f32 %v1322, %v1382
        %v1443 = vadd.f32 %v1323, %v1383
        %v1444 = vadd.f32 %v1324, %v1384
        %v1445 = vadd.f32 %v1325, %v1385
        %v1446 = vadd.f32 %v1326, %v1386
        %v1447 = vadd.f32 %v1327, %v1387
        %v1448 = vadd.f32 %v1328, %v1388
        %v1449 = vadd.f32 %v1329, %v1389
        %v1450 = vadd.f32 %v1330, %v1390
        %v1451 = vmul.f32 %v206, 0.057381798
        %v1452 = vmul.f32 %v207, 0.057381798
        %v1453 = vmul.f32 %v208, 0.057381798
        %v1454 = vmul.f32 %v209, 0.057381798
        %v1455 = vmul.f32 %v210, 0.057381798
        %v1456 = vmul.f32 %v211, 0.057381798
        %v1457 = vmul.f32 %v212, 0.057381798
        %v1458 = vmul.f32 %v213, 0.057381798
        %v1459 = vmul.f32 %v214, 0.057381798
        %v1460 = vmul.f32 %v215, 0.057381798
        %v1461 = vmul.f32 %v216, 0.057381798
        %v1462 = vmul.f32 %v217, 0.057381798
        %v1463 = vmul.f32 %v238, 0.057381798
        %v1464 = vmul.f32 %v239, 0.057381798
        %v1465 = vmul.f32 %v240, 0.057381798
        %v1466 = vmul.f32 %v241, 0.057381798
        %v1467 = vmul.f32 %v242, 0.057381798
        %v1468 = vmul.f32 %v243, 0.057381798
        %v1469 = vmul.f32 %v244, 0.057381798
        %v1470 = vmul.f32 %v245, 0.057381798
        %v1471 = vmul.f32 %v246, 0.057381798
        %v1472 = vmul.f32 %v247, 0.057381798
        %v1473 = vmul.f32 %v248, 0.057381798
        %v1474 = vmul.f32 %v249, 0.057381798
        %v1475 = vmul.f32 %v1179, 0.057381798
        %v1476 = vmul.f32 %v1180, 0.057381798
        %v1477 = vmul.f32 %v1181, 0.057381798
        %v1478 = vmul.f32 %v1182, 0.057381798
        %v1479 = vmul.f32 %v1183, 0.057381798
        %v1480 = vmul.f32 %v1184, 0.057381798
        %v1481 = vmul.f32 %v1185, 0.057381798
        %v1482 = vmul.f32 %v1186, 0.057381798
        %v1483 = vmul.f32 %v1187, 0.057381798
        %v1484 = vmul.f32 %v1188, 0.057381798
        %v1485 = vmul.f32 %v1189, 0.057381798
        %v1486 = vmul.f32 %v1190, 0.057381798
        %v1487 = vmul.f32 %v1211, 0.057381798
        %v1488 = vmul.f32 %v1212, 0.057381798
        %v1489 = vmul.f32 %v1213, 0.057381798
        %v1490 = vmul.f32 %v1214, 0.057381798
        %v1491 = vmul.f32 %v1215, 0.057381798
        %v1492 = vmul.f32 %v1216, 0.057381798
        %v1493 = vmul.f32 %v1217, 0.057381798
        %v1494 = vmul.f32 %v1218, 0.057381798
        %v1495 = vmul.f32 %v1219, 0.057381798
        %v1496 = vmul.f32 %v1220, 0.057381798
        %v1497 = vmul.f32 %v1221, 0.057381798
        %v1498 = vmul.f32 %v1222, 0.057381798
        %v1499 = vmul.f32 %v1243, 0.057381798
        %v1500 = vmul.f32 %v1244, 0.057381798
        %v1501 = vmul.f32 %v1245, 0.057381798
        %v1502 = vmul.f32 %v1246, 0.057381798
        %v1503 = vmul.f32 %v1247, 0.057381798
        %v1504 = vmul.f32 %v1248, 0.057381798
        %v1505 = vmul.f32 %v1249, 0.057381798
        %v1506 = vmul.f32 %v1250, 0.057381798
        %v1507 = vmul.f32 %v1251, 0.057381798
        %v1508 = vmul.f32 %v1252, 0.057381798
        %v1509 = vmul.f32 %v1253, 0.057381798
        %v1510 = vmul.f32 %v1254, 0.057381798
        %v1511 = vadd.f32 %v1391, %v1451
        %v1512 = vadd.f32 %v1392, %v1452
        %v1513 = vadd.f32 %v1393, %v1453
        %v1514 = vadd.f32 %v1394, %v1454
        %v1515 = vadd.f32 %v1395, %v1455
        %v1516 = vadd.f32 %v1396, %v1456
        %v1517 = vadd.f32 %v1397, %v1457
        %v1518 = vadd.f32 %v1398, %v1458
        %v1519 = vadd.f32 %v1399, %v1459
        %v1520 = vadd.f32 %v1400, %v1460
        %v1521 = vadd.f32 %v1401, %v1461
        %v1522 = vadd.f32 %v1402, %v1462
        %v1523 = vadd.f32 %v1403, %v1463
        %v1524 = vadd.f32 %v1404, %v1464
        %v1525 = vadd.f32 %v1405, %v1465
        %v1526 = vadd.f32 %v1406, %v1466
        %v1527 = vadd.f32 %v1407, %v1467
        %v1528 = vadd.f32 %v1408, %v1468
        %v1529 = vadd.f32 %v1409, %v1469
        %v1530 = vadd.f32 %v1410, %v1470
        %v1531 = vadd.f32 %v1411, %v1471
        %v1532 = vadd.f32 %v1412, %v1472
        %v1533 = vadd.f32 %v1413, %v1473
        %v1534 = vadd.f32 %v1414, %v1474
        %v1535 = vadd.f32 %v1415, %v1475
        %v1536 = vadd.f32 %v1416, %v1476
        %v1537 = vadd.f32 %v1417, %v1477
        %v1538 = vadd.f32 %v1418, %v1478
        %v1539 = vadd.f32 %v1419, %v1479
        %v1540 = vadd.f32 %v1420, %v1480
        %v1541 = vadd.f32 %v1421, %v1481
        %v1542 = vadd.f32 %v1422, %v1482
        %v1543 = vadd.f32 %v1423, %v1483
        %v1544 = vadd.f32 %v1424, %v1484
        %v1545 = vadd.f32 %v1425, %v1485
        %v1546 = vadd.f32 %v1426, %v1486
        %v1547 = vadd.f32 %v1427, %v1487
        %v1548 = vadd.f32 %v1428, %v1488
        %v1549 = vadd.f32 %v1429, %v1489
        %v1550 = vadd.f32 %v1430, %v1490
        %v1551 = vadd.f32 %v1431, %v1491
        %v1552 = vadd.f32 %v1432, %v1492
        %v1553 = vadd.f32 %v1433, %v1493
        %v1554 = vadd.f32 %v1434, %v1494
        %v1555 = vadd.f32 %v1435, %v1495
        %v1556 = vadd.f32 %v1436, %v1496
        %v1557 = vadd.f32 %v1437, %v1497
        %v1558 = vadd.f32 %v1438, %v1498
        %v1559 = vadd.f32 %v1439, %v1499
        %v1560 = vadd.f32 %v1440, %v1500
        %v1561 = vadd.f32 %v1441, %v1501
        %v1562 = vadd.f32 %v1442, %v1502
        %v1563 = vadd.f32 %v1443, %v1503
        %v1564 = vadd.f32 %v1444, %v1504
        %v1565 = vadd.f32 %v1445, %v1505
        %v1566 = vadd.f32 %v1446, %v1506
        %v1567 = vadd.f32 %v1447, %v1507
        %v1568 = vadd.f32 %v1448, %v1508
        %v1569 = vadd.f32 %v1449, %v1509
        %v1570 = vadd.f32 %v1450, %v1510
        %v1571 = vmul.f32 %v208, 0.12035766
        %v1572 = vmul.f32 %v209, 0.12035766
        %v1573 = vmul.f32 %v210, 0.12035766
        %v1574 = vmul.f32 %v211, 0.12035766
        %v1575 = vmul.f32 %v212, 0.12035766
        %v1576 = vmul.f32 %v213, 0.12035766
        %v1577 = vmul.f32 %v214, 0.12035766
        %v1578 = vmul.f32 %v215, 0.12035766
        %v1579 = vmul.f32 %v216, 0.12035766
        %v1580 = vmul.f32 %v217, 0.12035766
        %v1581 = vmul.f32 %v218, 0.12035766
        %v1582 = vmul.f32 %v219, 0.12035766
        %v1583 = vmul.f32 %v240, 0.12035766
        %v1584 = vmul.f32 %v241, 0.12035766
        %v1585 = vmul.f32 %v242, 0.12035766
        %v1586 = vmul.f32 %v243, 0.12035766
        %v1587 = vmul.f32 %v244, 0.12035766
        %v1588 = vmul.f32 %v245, 0.12035766
        %v1589 = vmul.f32 %v246, 0.12035766
        %v1590 = vmul.f32 %v247, 0.12035766
        %v1591 = vmul.f32 %v248, 0.12035766
        %v1592 = vmul.f32 %v249, 0.12035766
        %v1593 = vmul.f32 %v250, 0.12035766
        %v1594 = vmul.f32 %v251, 0.12035766
        %v1595 = vmul.f32 %v1181, 0.12035766
        %v1596 = vmul.f32 %v1182, 0.12035766
        %v1597 = vmul.f32 %v1183, 0.12035766
        %v1598 = vmul.f32 %v1184, 0.12035766
        %v1599 = vmul.f32 %v1185, 0.12035766
        %v1600 = vmul.f32 %v1186, 0.12035766
        %v1601 = vmul.f32 %v1187, 0.12035766
        %v1602 = vmul.f32 %v1188, 0.12035766
        %v1603 = vmul.f32 %v1189, 0.12035766
        %v1604 = vmul.f32 %v1190, 0.12035766
        %v1605 = vmul.f32 %v1191, 0.12035766
        %v1606 = vmul.f32 %v1192, 0.12035766
        %v1607 = vmul.f32 %v1213, 0.12035766
        %v1608 = vmul.f32 %v1214, 0.12035766
        %v1609 = vmul.f32 %v1215, 0.12035766
        %v1610 = vmul.f32 %v1216, 0.12035766
        %v1611 = vmul.f32 %v1217, 0.12035766
        %v1612 = vmul.f32 %v1218, 0.12035766
        %v1613 = vmul.f32 %v1219, 0.12035766
        %v1614 = vmul.f32 %v1220, 0.12035766
        %v1615 = vmul.f32 %v1221, 0.12035766
        %v1616 = vmul.f32 %v1222, 0.12035766
        %v1617 = vmul.f32 %v1223, 0.12035766
        %v1618 = vmul.f32 %v1224, 0.12035766
        %v1619 = vmul.f32 %v1245, 0.12035766
        %v1620 = vmul.f32 %v1246, 0.12035766
        %v1621 = vmul.f32 %v1247, 0.12035766
        %v1622 = vmul.f32 %v1248, 0.12035766
        %v1623 = vmul.f32 %v1249, 0.12035766
        %v1624 = vmul.f32 %v1250, 0.12035766
        %v1625 = vmul.f32 %v1251, 0.12035766
        %v1626 = vmul.f32 %v1252, 0.12035766
        %v1627 = vmul.f32 %v1253, 0.12035766
        %v1628 = vmul.f32 %v1254, 0.12035766
        %v1629 = vmul.f32 %v1255, 0.12035766
        %v1630 = vmul.f32 %v1256, 0.12035766
        %v1631 = vadd.f32 %v1511, %v1571
        %v1632 = vadd.f32 %v1512, %v1572
        %v1633 = vadd.f32 %v1513, %v1573
        %v1634 = vadd.f32 %v1514, %v1574
        %v1635 = vadd.f32 %v1515, %v1575
        %v1636 = vadd.f32 %v1516, %v1576
        %v1637 = vadd.f32 %v1517, %v1577
        %v1638 = vadd.f32 %v1518, %v1578
        %v1639 = vadd.f32 %v1519, %v1579
        %v1640 = vadd.f32 %v1520, %v1580
        %v1641 = vadd.f32 %v1521, %v1581
        %v1642 = vadd.f32 %v1522, %v1582
        %v1643 = vadd.f32 %v1523, %v1583
        %v1644 = vadd.f32 %v1524, %v1584
        %v1645 = vadd.f32 %v1525, %v1585
        %v1646 = vadd.f32 %v1526, %v1586
        %v1647 = vadd.f32 %v1527, %v1587
        %v1648 = vadd.f32 %v1528, %v1588
        %v1649 = vadd.f32 %v1529, %v1589
        %v1650 = vadd.f32 %v1530, %v1590
        %v1651 = vadd.f32 %v1531, %v1591
        %v1652 = vadd.f32 %v1532, %v1592
        %v1653 = vadd.f32 %v1533, %v1593
        %v1654 = vadd.f32 %v1534, %v1594
        %v1655 = vadd.f32 %v1535, %v1595
        %v1656 = vadd.f32 %v1536, %v1596
        %v1657 = vadd.f32 %v1537, %v1597
        %v1658 = vadd.f32 %v1538, %v1598
        %v1659 = vadd.f32 %v1539, %v1599
        %v1660 = vadd.f32 %v1540, %v1600
        %v1661 = vadd.f32 %v1541, %v1601
        %v1662 = vadd.f32 %v1542, %v1602
        %v1663 = vadd.f32 %v1543, %v1603
        %v1664 = vadd.f32 %v1544, %v1604
        %v1665 = vadd.f32 %v1545, %v1605
        %v1666 = vadd.f32 %v1546, %v1606
        %v1667 = vadd.f32 %v1547, %v1607
        %v1668 = vadd.f32 %v1548, %v1608
        %v1669 = vadd.f32 %v1549, %v1609
        %v1670 = vadd.f32 %v1550, %v1610
        %v1671 = vadd.f32 %v1551, %v1611
        %v1672 = vadd.f32 %v1552, %v1612
        %v1673 = vadd.f32 %v1553, %v1613
        %v1674 = vadd.f32 %v1554, %v1614
        %v1675 = vadd.f32 %v1555, %v1615
        %v1676 = vadd.f32 %v1556, %v1616
        %v1677 = vadd.f32 %v1557, %v1617
        %v1678 = vadd.f32 %v1558, %v1618
        %v1679 = vadd.f32 %v1559, %v1619
        %v1680 = vadd.f32 %v1560, %v1620
        %v1681 = vadd.f32 %v1561, %v1621
        %v1682 = vadd.f32 %v1562, %v1622
        %v1683 = vadd.f32 %v1563, %v1623
        %v1684 = vadd.f32 %v1564, %v1624
        %v1685 = vadd.f32 %v1565, %v1625
        %v1686 = vadd.f32 %v1566, %v1626
        %v1687 = vadd.f32 %v1567, %v1627
        %v1688 = vadd.f32 %v1568, %v1628
        %v1689 = vadd.f32 %v1569, %v1629
        %v1690 = vadd.f32 %v1570, %v1630
        %v1691 = vmul.f32 %v210, 0.18771264
        %v1692 = vmul.f32 %v211, 0.18771264
        %v1693 = vmul.f32 %v212, 0.18771264
        %v1694 = vmul.f32 %v213, 0.18771264
        %v1695 = vmul.f32 %v214, 0.18771264
        %v1696 = vmul.f32 %v215, 0.18771264
        %v1697 = vmul.f32 %v216, 0.18771264
        %v1698 = vmul.f32 %v217, 0.18771264
        %v1699 = vmul.f32 %v218, 0.18771264
        %v1700 = vmul.f32 %v219, 0.18771264
        %v1701 = vmul.f32 %v220, 0.18771264
        %v1702 = vmul.f32 %v221, 0.18771264
        %v1703 = vmul.f32 %v242, 0.18771264
        %v1704 = vmul.f32 %v243, 0.18771264
        %v1705 = vmul.f32 %v244, 0.18771264
        %v1706 = vmul.f32 %v245, 0.18771264
        %v1707 = vmul.f32 %v246, 0.18771264
        %v1708 = vmul.f32 %v247, 0.18771264
        %v1709 = vmul.f32 %v248, 0.18771264
        %v1710 = vmul.f32 %v249, 0.18771264
        %v1711 = vmul.f32 %v250, 0.18771264
        %v1712 = vmul.f32 %v251, 0.18771264
        %v1713 = vmul.f32 %v252, 0.18771264
        %v1714 = vmul.f32 %v253, 0.18771264
        %v1715 = vmul.f32 %v1183, 0.18771264
        %v1716 = vmul.f32 %v1184, 0.18771264
        %v1717 = vmul.f32 %v1185, 0.18771264
        %v1718 = vmul.f32 %v1186, 0.18771264
        %v1719 = vmul.f32 %v1187, 0.18771264
        %v1720 = vmul.f32 %v1188, 0.18771264
        %v1721 = vmul.f32 %v1189, 0.18771264
        %v1722 = vmul.f32 %v1190, 0.18771264
        %v1723 = vmul.f32 %v1191, 0.18771264
        %v1724 = vmul.f32 %v1192, 0.18771264
        %v1725 = vmul.f32 %v1193, 0.18771264
        %v1726 = vmul.f32 %v1194, 0.18771264
        %v1727 = vmul.f32 %v1215, 0.18771264
        %v1728 = vmul.f32 %v1216, 0.18771264
        %v1729 = vmul.f32 %v1217, 0.18771264
        %v1730 = vmul.f32 %v1218, 0.18771264
        %v1731 = vmul.f32 %v1219, 0.18771264
        %v1732 = vmul.f32 %v1220, 0.18771264
        %v1733 = vmul.f32 %v1221, 0.18771264
        %v1734 = vmul.f32 %v1222, 0.18771264
        %v1735 = vmul.f32 %v1223, 0.18771264
        %v1736 = vmul.f32 %v1224, 0.18771264
        %v1737 = vmul.f32 %v1225, 0.18771264
        %v1738 = vmul.f32 %v1226, 0.18771264
        %v1739 = vmul.f32 %v1247, 0.18771264
        %v1740 = vmul.f32 %v1248, 0.18771264
        %v1741 = vmul.f32 %v1249, 0.18771264
        %v1742 = vmul.f32 %v1250, 0.18771264
        %v1743 = vmul.f32 %v1251, 0.18771264
        %v1744 = vmul.f32 %v1252, 0.18771264
        %v1745 = vmul.f32 %v1253, 0.18771264
        %v1746 = vmul.f32 %v1254, 0.18771264
        %v1747 = vmul.f32 %v1255, 0.18771264
        %v1748 = vmul.f32 %v1256, 0.18771264
        %v1749 = vmul.f32 %v1257, 0.18771264
        %v1750 = vmul.f32 %v1258, 0.18771264
        %v1751 = vadd.f32 %v1631, %v1691
        %v1752 = vadd.f32 %v1632, %v1692
        %v1753 = vadd.f32 %v1633, %v1693
        %v1754 = vadd.f32 %v1634, %v1694
        %v1755 = vadd.f32 %v1635, %v1695
        %v1756 = vadd.f32 %v1636, %v1696
        %v1757 = vadd.f32 %v1637, %v1697
        %v1758 = vadd.f32 %v1638, %v1698
        %v1759 = vadd.f32 %v1639, %v1699
        %v1760 = vadd.f32 %v1640, %v1700
        %v1761 = vadd.f32 %v1641, %v1701
        %v1762 = vadd.f32 %v1642, %v1702
        %v1763 = vadd.f32 %v1643, %v1703
        %v1764 = vadd.f32 %v1644, %v1704
        %v1765 = vadd.f32 %v1645, %v1705
        %v1766 = vadd.f32 %v1646, %v1706
        %v1767 = vadd.f32 %v1647, %v1707
        %v1768 = vadd.f32 %v1648, %v1708
        %v1769 = vadd.f32 %v1649, %v1709
        %v1770 = vadd.f32 %v1650, %v1710
        %v1771 = vadd.f32 %v1651, %v1711
        %v1772 = vadd.f32 %v1652, %v1712
        %v1773 = vadd.f32 %v1653, %v1713
        %v1774 = vadd.f32 %v1654, %v1714
        %v1775 = vadd.f32 %v1655, %v1715
        %v1776 = vadd.f32 %v1656, %v1716
        %v1777 = vadd.f32 %v1657, %v1717
        %v1778 = vadd.f32 %v1658, %v1718
        %v1779 = vadd.f32 %v1659, %v1719
        %v1780 = vadd.f32 %v1660, %v1720
        %v1781 = vadd.f32 %v1661, %v1721
        %v1782 = vadd.f32 %v1662, %v1722
        %v1783 = vadd.f32 %v1663, %v1723
        %v1784 = vadd.f32 %v1664, %v1724
        %v1785 = vadd.f32 %v1665, %v1725
        %v1786 = vadd.f32 %v1666, %v1726
        %v1787 = vadd.f32 %v1667, %v1727
        %v1788 = vadd.f32 %v1668, %v1728
        %v1789 = vadd.f32 %v1669, %v1729
        %v1790 = vadd.f32 %v1670, %v1730
        %v1791 = vadd.f32 %v1671, %v1731
        %v1792 = vadd.f32 %v1672, %v1732
        %v1793 = vadd.f32 %v1673, %v1733
        %v1794 = vadd.f32 %v1674, %v1734
        %v1795 = vadd.f32 %v1675, %v1735
        %v1796 = vadd.f32 %v1676, %v1736
        %v1797 = vadd.f32 %v1677, %v1737
        %v1798 = vadd.f32 %v1678, %v1738
        %v1799 = vadd.f32 %v1679, %v1739
        %v1800 = vadd.f32 %v1680, %v1740
        %v1801 = vadd.f32 %v1681, %v1741
        %v1802 = vadd.f32 %v1682, %v1742
        %v1803 = vadd.f32 %v1683, %v1743
        %v1804 = vadd.f32 %v1684, %v1744
        %v1805 = vadd.f32 %v1685, %v1745
        %v1806 = vadd.f32 %v1686, %v1746
        %v1807 = vadd.f32 %v1687, %v1747
        %v1808 = vadd.f32 %v1688, %v1748
        %v1809 = vadd.f32 %v1689, %v1749
        %v1810 = vadd.f32 %v1690, %v1750
        %v1811 = vmul.f32 %v212, 0.21768747
        %v1812 = vmul.f32 %v213, 0.21768747
        %v1813 = vmul.f32 %v214, 0.21768747
        %v1814 = vmul.f32 %v215, 0.21768747
        %v1815 = vmul.f32 %v216, 0.21768747
        %v1816 = vmul.f32 %v217, 0.21768747
        %v1817 = vmul.f32 %v218, 0.21768747
        %v1818 = vmul.f32 %v219, 0.21768747
        %v1819 = vmul.f32 %v220, 0.21768747
        %v1820 = vmul.f32 %v221, 0.21768747
        %v1821 = vmul.f32 %v222, 0.21768747
        %v1822 = vmul.f32 %v223, 0.21768747
        %v1823 = vmul.f32 %v244, 0.21768747
        %v1824 = vmul.f32 %v245, 0.21768747
        %v1825 = vmul.f32 %v246, 0.21768747
        %v1826 = vmul.f32 %v247, 0.21768747
        %v1827 = vmul.f32 %v248, 0.21768747
        %v1828 = vmul.f32 %v249, 0.21768747
        %v1829 = vmul.f32 %v250, 0.21768747
        %v1830 = vmul.f32 %v251, 0.21768747
        %v1831 = vmul.f32 %v252, 0.21768747
        %v1832 = vmul.f32 %v253, 0.21768747
        %v1833 = vmul.f32 %v254, 0.21768747
        %v1834 = vmul.f32 %v255, 0.21768747
        %v1835 = vmul.f32 %v1185, 0.21768747
        %v1836 = vmul.f32 %v1186, 0.21768747
        %v1837 = vmul.f32 %v1187, 0.21768747
        %v1838 = vmul.f32 %v1188, 0.21768747
        %v1839 = vmul.f32 %v1189, 0.21768747
        %v1840 = vmul.f32 %v1190, 0.21768747
        %v1841 = vmul.f32 %v1191, 0.21768747
        %v1842 = vmul.f32 %v1192, 0.21768747
        %v1843 = vmul.f32 %v1193, 0.21768747
        %v1844 = vmul.f32 %v1194, 0.21768747
        %v1845 = vmul.f32 %v1195, 0.21768747
        %v1846 = vmul.f32 %v1196, 0.21768747
        %v1847 = vmul.f32 %v1217, 0.21768747
        %v1848 = vmul.f32 %v1218, 0.21768747
        %v1849 = vmul.f32 %v1219, 0.21768747
        %v1850 = vmul.f32 %v1220, 0.21768747
        %v1851 = vmul.f32 %v1221, 0.21768747
        %v1852 = vmul.f32 %v1222, 0.21768747
        %v1853 = vmul.f32 %v1223, 0.21768747
        %v1854 = vmul.f32 %v1224, 0.21768747
        %v1855 = vmul.f32 %v1225, 0.21768747
        %v1856 = vmul.f32 %v1226, 0.21768747
        %v1857 = vmul.f32 %v1227, 0.21768747
        %v1858 = vmul.f32 %v1228, 0.21768747
        %v1859 = vmul.f32 %v1249, 0.21768747
        %v1860 = vmul.f32 %v1250, 0.21768747
        %v1861 = vmul.f32 %v1251, 0.21768747
        %v1862 = vmul.f32 %v1252, 0.21768747
        %v1863 = vmul.f32 %v1253, 0.21768747
        %v1864 = vmul.f32 %v1254, 0.21768747
        %v1865 = vmul.f32 %v1255, 0.21768747
        %v1866 = vmul.f32 %v1256, 0.21768747
        %v1867 = vmul.f32 %v1257, 0.21768747
        %v1868 = vmul.f32 %v1258, 0.21768747
        %v1869 = vmul.f32 %v1259, 0.21768747
        %v1870 = vmul.f32 %v1260, 0.21768747
        %v1871 = vadd.f32 %v1751, %v1811
        %v1872 = vadd.f32 %v1752, %v1812
        %v1873 = vadd.f32 %v1753, %v1813
        %v1874 = vadd.f32 %v1754, %v1814
        %v1875 = vadd.f32 %v1755, %v1815
        %v1876 = vadd.f32 %v1756, %v1816
        %v1877 = vadd.f32 %v1757, %v1817
        %v1878 = vadd.f32 %v1758, %v1818
        %v1879 = vadd.f32 %v1759, %v1819
        %v1880 = vadd.f32 %v1760, %v1820
        %v1881 = vadd.f32 %v1761, %v1821
        %v1882 = vadd.f32 %v1762, %v1822
        %v1883 = vadd.f32 %v1763, %v1823
        %v1884 = vadd.f32 %v1764, %v1824
        %v1885 = vadd.f32 %v1765, %v1825
        %v1886 = vadd.f32 %v1766, %v1826
        %v1887 = vadd.f32 %v1767, %v1827
        %v1888 = vadd.f32 %v1768, %v1828
        %v1889 = vadd.f32 %v1769, %v1829
        %v1890 = vadd.f32 %v1770, %v1830
        %v1891 = vadd.f32 %v1771, %v1831
        %v1892 = vadd.f32 %v1772, %v1832
        %v1893 = vadd.f32 %v1773, %v1833
        %v1894 = vadd.f32 %v1774, %v1834
        %v1895 = vadd.f32 %v1775, %v1835
        %v1896 = vadd.f32 %v1776, %v1836
        %v1897 = vadd.f32 %v1777, %v1837
        %v1898 = vadd.f32 %v1778, %v1838
        %v1899 = vadd.f32 %v1779, %v1839
        %v1900 = vadd.f32 %v1780, %v1840
        %v1901 = vadd.f32 %v1781, %v1841
        %v1902 = vadd.f32 %v1782, %v1842
        %v1903 = vadd.f32 %v1783, %v1843
        %v1904 = vadd.f32 %v1784, %v1844
        %v1905 = vadd.f32 %v1785, %v1845
        %v1906 = vadd.f32 %v1786, %v1846
        %v1907 = vadd.f32 %v1787, %v1847
        %v1908 = vadd.f32 %v1788, %v1848
        %v1909 = vadd.f32 %v1789, %v1849
        %v1910 = vadd.f32 %v1790, %v1850
        %v1911 = vadd.f32 %v1791, %v1851
        %v1912 = vadd.f32 %v1792, %v1852
        %v1913 = vadd.f32 %v1793, %v1853
        %v1914 = vadd.f32 %v1794, %v1854
        %v1915 = vadd.f32 %v1795, %v1855
        %v1916 = vadd.f32 %v1796, %v1856
        %v1917 = vadd.f32 %v1797, %v1857
        %v1918 = vadd.f32 %v1798, %v1858
        %v1919 = vadd.f32 %v1799, %v1859
        %v1920 = vadd.f32 %v1800, %v1860
        %v1921 = vadd.f32 %v1801, %v1861
        %v1922 = vadd.f32 %v1802, %v1862
        %v1923 = vadd.f32 %v1803, %v1863
        %v1924 = vadd.f32 %v1804, %v1864
        %v1925 = vadd.f32 %v1805, %v1865
        %v1926 = vadd.f32 %v1806, %v1866
        %v1927 = vadd.f32 %v1807, %v1867
        %v1928 = vadd.f32 %v1808, %v1868
        %v1929 = vadd.f32 %v1809, %v1869
        %v1930 = vadd.f32 %v1810, %v1870
        %v1931 = vmul.f32 %v222, 0.18771264
        %v1932 = vmul.f32 %v223, 0.18771264
        %v1933 = vmul.f32 %v224, 0.18771264
        %v1934 = vmul.f32 %v225, 0.18771264
        %v1935 = vmul.f32 %v254, 0.18771264
        %v1936 = vmul.f32 %v255, 0.18771264
        %v1937 = vmul.f32 %v256, 0.18771264
        %v1938 = vmul.f32 %v257, 0.18771264
        %v1939 = vmul.f32 %v1195, 0.18771264
        %v1940 = vmul.f32 %v1196, 0.18771264
        %v1941 = vmul.f32 %v1197, 0.18771264
        %v1942 = vmul.f32 %v1198, 0.18771264
        %v1943 = vmul.f32 %v1227, 0.18771264
        %v1944 = vmul.f32 %v1228, 0.18771264
        %v1945 = vmul.f32 %v1229, 0.18771264
        %v1946 = vmul.f32 %v1230, 0.18771264
        %v1947 = vmul.f32 %v1259, 0.18771264
        %v1948 = vmul.f32 %v1260, 0.18771264
        %v1949 = vmul.f32 %v1261, 0.18771264
        %v1950 = vmul.f32 %v1262, 0.18771264
        %v1951 = vadd.f32 %v1871, %v1695
        %v1952 = vadd.f32 %v1872, %v1696
        %v1953 = vadd.f32 %v1873, %v1697
        %v1954 = vadd.f32 %v1874, %v1698
        %v1955 = vadd.f32 %v1875, %v1699
        %v1956 = vadd.f32 %v1876, %v1700
        %v1957 = vadd.f32 %v1877, %v1701
        %v1958 = vadd.f32 %v1878, %v1702
        %v1959 = vadd.f32 %v1879, %v1931
        %v1960 = vadd.f32 %v1880, %v1932
        %v1961 = vadd.f32 %v1881, %v1933
        %v1962 = vadd.f32 %v1882, %v1934
        %v1963 = vadd.f32 %v1883, %v1707
        %v1964 = vadd.f32 %v1884, %v1708
        %v1965 = vadd.f32 %v1885, %v1709
        %v1966 = vadd.f32 %v1886, %v1710
        %v1967 = vadd.f32 %v1887, %v1711
        %v1968 = vadd.f32 %v1888, %v1712
        %v1969 = vadd.f32 %v1889, %v1713
        %v1970 = vadd.f32 %v1890, %v1714
        %v1971 = vadd.f32 %v1891, %v1935
        %v1972 = vadd.f32 %v1892, %v1936
        %v1973 = vadd.f32 %v1893, %v1937
        %v1974 = vadd.f32 %v1894, %v1938
        %v1975 = vadd.f32 %v1895, %v1719
        %v1976 = vadd.f32 %v1896, %v1720
        %v1977 = vadd.f32 %v1897, %v1721
        %v1978 = vadd.f32 %v1898, %v1722
        %v1979 = vadd.f32 %v1899, %v1723
        %v1980 = vadd.f32 %v1900, %v1724
        %v1981 = vadd.f32 %v1901, %v1725
        %v1982 = vadd.f32 %v1902, %v1726
        %v1983 = vadd.f32 %v1903, %v1939
        %v1984 = vadd.f32 %v1904, %v1940
        %v1985 = vadd.f32 %v1905, %v1941
        %v1986 = vadd.f32 %v1906, %v1942
        %v1987 = vadd.f32 %v1907, %v1731
        %v1988 = vadd.f32 %v1908, %v1732
        %v1989 = vadd.f32 %v1909, %v1733
        %v1990 = vadd.f32 %v1910, %v1734
        %v1991 = vadd.f32 %v1911, %v1735
        %v1992 = vadd.f32 %v1912, %v1736
        %v1993 = vadd.f32 %v1913, %v1737
        %v1994 = vadd.f32 %v1914, %v1738
        %v1995 = vadd.f32 %v1915, %v1943
        %v1996 = vadd.f32 %v1916, %v1944
        %v1997 = vadd.f32 %v1917, %v1945
        %v1998 = vadd.f32 %v1918, %v1946
        %v1999 = vadd.f32 %v1919, %v1743
        %v2000 = vadd.f32 %v1920, %v1744
        %v2001 = vadd.f32 %v1921, %v1745
        %v2002 = vadd.f32 %v1922, %v1746
        %v2003 = vadd.f32 %v1923, %v1747
        %v2004 = vadd.f32 %v1924, %v1748
        %v2005 = vadd.f32 %v1925, %v1749
        %v2006 = vadd.f32 %v1926, %v1750
        %v2007 = vadd.f32 %v1927, %v1947
        %v2008 = vadd.f32 %v1928, %v1948
        %v2009 = vadd.f32 %v1929, %v1949
        %v2010 = vadd.f32 %v1930, %v1950
        %v2011 = vmul.f32 %v220, 0.12035766
        %v2012 = vmul.f32 %v221, 0.12035766
        %v2013 = vmul.f32 %v222, 0.12035766
        %v2014 = vmul.f32 %v223, 0.12035766
        %v2015 = vmul.f32 %v224, 0.12035766
        %v2016 = vmul.f32 %v225, 0.12035766
        %v2017 = vmul.f32 %v226, 0.12035766
        %v2018 = vmul.f32 %v227, 0.12035766
        %v2019 = vmul.f32 %v252, 0.12035766
        %v2020 = vmul.f32 %v253, 0.12035766
        %v2021 = vmul.f32 %v254, 0.12035766
        %v2022 = vmul.f32 %v255, 0.12035766
        %v2023 = vmul.f32 %v256, 0.12035766
        %v2024 = vmul.f32 %v257, 0.12035766
        %v2025 = vmul.f32 %v258, 0.12035766
        %v2026 = vmul.f32 %v259, 0.12035766
        %v2027 = vmul.f32 %v1193, 0.12035766
        %v2028 = vmul.f32 %v1194, 0.12035766
        %v2029 = vmul.f32 %v1195, 0.12035766
        %v2030 = vmul.f32 %v1196, 0.12035766
        %v2031 = vmul.f32 %v1197, 0.12035766
        %v2032 = vmul.f32 %v1198, 0.12035766
        %v2033 = vmul.f32 %v1199, 0.12035766
        %v2034 = vmul.f32 %v1200, 0.12035766
        %v2035 = vmul.f32 %v1225, 0.12035766
        %v2036 = vmul.f32 %v1226, 0.12035766
        %v2037 = vmul.f32 %v1227, 0.12035766
        %v2038 = vmul.f32 %v1228, 0.12035766
        %v2039 = vmul.f32 %v1229, 0.12035766
        %v2040 = vmul.f32 %v1230, 0.12035766
        %v2041 = vmul.f32 %v1231, 0.12035766
        %v2042 = vmul.f32 %v1232, 0.12035766
        %v2043 = vmul.f32 %v1257, 0.12035766
        %v2044 = vmul.f32 %v1258, 0.12035766
        %v2045 = vmul.f32 %v1259, 0.12035766
        %v2046 = vmul.f32 %v1260, 0.12035766
        %v2047 = vmul.f32 %v1261, 0.12035766
        %v2048 = vmul.f32 %v1262, 0.12035766
        %v2049 = vmul.f32 %v1263, 0.12035766
        %v2050 = vmul.f32 %v1264, 0.12035766
        %v2051 = vadd.f32 %v1951, %v1579
        %v2052 = vadd.f32 %v1952, %v1580
        %v2053 = vadd.f32 %v1953, %v1581
        %v2054 = vadd.f32 %v1954, %v1582
        %v2055 = vadd.f32 %v1955, %v2011
        %v2056 = vadd.f32 %v1956, %v2012
        %v2057 = vadd.f32 %v1957, %v2013
        %v2058 = vadd.f32 %v1958, %v2014
        %v2059 = vadd.f32 %v1959, %v2015
        %v2060 = vadd.f32 %v1960, %v2016
        %v2061 = vadd.f32 %v1961, %v2017
        %v2062 = vadd.f32 %v1962, %v2018
        %v2063 = vadd.f32 %v1963, %v1591
        %v2064 = vadd.f32 %v1964, %v1592
        %v2065 = vadd.f32 %v1965, %v1593
        %v2066 = vadd.f32 %v1966, %v1594
        %v2067 = vadd.f32 %v1967, %v2019
        %v2068 = vadd.f32 %v1968, %v2020
        %v2069 = vadd.f32 %v1969, %v2021
        %v2070 = vadd.f32 %v1970, %v2022
        %v2071 = vadd.f32 %v1971, %v2023
        %v2072 = vadd.f32 %v1972, %v2024
        %v2073 = vadd.f32 %v1973, %v2025
        %v2074 = vadd.f32 %v1974, %v2026
        %v2075 = vadd.f32 %v1975, %v1603
        %v2076 = vadd.f32 %v1976, %v1604
        %v2077 = vadd.f32 %v1977, %v1605
        %v2078 = vadd.f32 %v1978, %v1606
        %v2079 = vadd.f32 %v1979, %v2027
        %v2080 = vadd.f32 %v1980, %v2028
        %v2081 = vadd.f32 %v1981, %v2029
        %v2082 = vadd.f32 %v1982, %v2030
        %v2083 = vadd.f32 %v1983, %v2031
        %v2084 = vadd.f32 %v1984, %v2032
        %v2085 = vadd.f32 %v1985, %v2033
        %v2086 = vadd.f32 %v1986, %v2034
        %v2087 = vadd.f32 %v1987, %v1615
        %v2088 = vadd.f32 %v1988, %v1616
        %v2089 = vadd.f32 %v1989, %v1617
        %v2090 = vadd.f32 %v1990, %v1618
        %v2091 = vadd.f32 %v1991, %v2035
        %v2092 = vadd.f32 %v1992, %v2036
        %v2093 = vadd.f32 %v1993, %v2037
        %v2094 = vadd.f32 %v1994, %v2038
        %v2095 = vadd.f32 %v1995, %v2039
        %v2096 = vadd.f32 %v1996, %v2040
        %v2097 = vadd.f32 %v1997, %v2041
        %v2098 = vadd.f32 %v1998, %v2042
        %v2099 = vadd.f32 %v1999, %v1627
        %v2100 = vadd.f32 %v2000, %v1628
        %v2101 = vadd.f32 %v2001, %v1629
        %v2102 = vadd.f32 %v2002, %v1630
        %v2103 = vadd.f32 %v2003, %v2043
        %v2104 = vadd.f32 %v2004, %v2044
        %v2105 = vadd.f32 %v2005, %v2045
        %v2106 = vadd.f32 %v2006, %v2046
        %v2107 = vadd.f32 %v2007, %v2047
        %v2108 = vadd.f32 %v2008, %v2048
        %v2109 = vadd.f32 %v2009, %v2049
        %v2110 = vadd.f32 %v2010, %v2050
        %v2111 = vmul.f32 %v218, 0.057381798
        %v2112 = vmul.f32 %v219, 0.057381798
        %v2113 = vmul.f32 %v220, 0.057381798
        %v2114 = vmul.f32 %v221, 0.057381798
        %v2115 = vmul.f32 %v222, 0.057381798
        %v2116 = vmul.f32 %v223, 0.057381798
        %v2117 = vmul.f32 %v224, 0.057381798
        %v2118 = vmul.f32 %v225, 0.057381798
        %v2119 = vmul.f32 %v226, 0.057381798
        %v2120 = vmul.f32 %v227, 0.057381798
        %v2121 = vmul.f32 %v228, 0.057381798
        %v2122 = vmul.f32 %v229, 0.057381798
        %v2123 = vmul.f32 %v250, 0.057381798
        %v2124 = vmul.f32 %v251, 0.057381798
        %v2125 = vmul.f32 %v252, 0.057381798
        %v2126 = vmul.f32 %v253, 0.057381798
        %v2127 = vmul.f32 %v254, 0.057381798
        %v2128 = vmul.f32 %v255, 0.057381798
        %v2129 = vmul.f32 %v256, 0.057381798
        %v2130 = vmul.f32 %v257, 0.057381798
        %v2131 = vmul.f32 %v258, 0.057381798
        %v2132 = vmul.f32 %v259, 0.057381798
        %v2133 = vmul.f32 %v260, 0.057381798
        %v2134 = vmul.f32 %v261, 0.057381798
        %v2135 = vmul.f32 %v1191, 0.057381798
        %v2136 = vmul.f32 %v1192, 0.057381798
        %v2137 = vmul.f32 %v1193, 0.057381798
        %v2138 = vmul.f32 %v1194, 0.057381798
        %v2139 = vmul.f32 %v1195, 0.057381798
        %v2140 = vmul.f32 %v1196, 0.057381798
        %v2141 = vmul.f32 %v1197, 0.057381798
        %v2142 = vmul.f32 %v1198, 0.057381798
        %v2143 = vmul.f32 %v1199, 0.057381798
        %v2144 = vmul.f32 %v1200, 0.057381798
        %v2145 = vmul.f32 %v1201, 0.057381798
        %v2146 = vmul.f32 %v1202, 0.057381798
        %v2147 = vmul.f32 %v1223, 0.057381798
        %v2148 = vmul.f32 %v1224, 0.057381798
        %v2149 = vmul.f32 %v1225, 0.057381798
        %v2150 = vmul.f32 %v1226, 0.057381798
        %v2151 = vmul.f32 %v1227, 0.057381798
        %v2152 = vmul.f32 %v1228, 0.057381798
        %v2153 = vmul.f32 %v1229, 0.057381798
        %v2154 = vmul.f32 %v1230, 0.057381798
        %v2155 = vmul.f32 %v1231, 0.057381798
        %v2156 = vmul.f32 %v1232, 0.057381798
        %v2157 = vmul.f32 %v1233, 0.057381798
        %v2158 = vmul.f32 %v1234, 0.057381798
        %v2159 = vmul.f32 %v1255, 0.057381798
        %v2160 = vmul.f32 %v1256, 0.057381798
        %v2161 = vmul.f32 %v1257, 0.057381798
        %v2162 = vmul.f32 %v1258, 0.057381798
        %v2163 = vmul.f32 %v1259, 0.057381798
        %v2164 = vmul.f32 %v1260, 0.057381798
        %v2165 = vmul.f32 %v1261, 0.057381798
        %v2166 = vmul.f32 %v1262, 0.057381798
        %v2167 = vmul.f32 %v1263, 0.057381798
        %v2168 = vmul.f32 %v1264, 0.057381798
        %v2169 = vmul.f32 %v1265, 0.057381798
        %v2170 = vmul.f32 %v1266, 0.057381798
        %v2171 = vadd.f32 %v2051, %v2111
        %v2172 = vadd.f32 %v2052, %v2112
        %v2173 = vadd.f32 %v2053, %v2113
        %v2174 = vadd.f32 %v2054, %v2114
        %v2175 = vadd.f32 %v2055, %v2115
        %v2176 = vadd.f32 %v2056, %v2116
        %v2177 = vadd.f32 %v2057, %v2117
        %v2178 = vadd.f32 %v2058, %v2118
        %v2179 = vadd.f32 %v2059, %v2119
        %v2180 = vadd.f32 %v2060, %v2120
        %v2181 = vadd.f32 %v2061, %v2121
        %v2182 = vadd.f32 %v2062, %v2122
        %v2183 = vadd.f32 %v2063, %v2123
        %v2184 = vadd.f32 %v2064, %v2124
        %v2185 = vadd.f32 %v2065, %v2125
        %v2186 = vadd.f32 %v2066, %v2126
        %v2187 = vadd.f32 %v2067, %v2127
        %v2188 = vadd.f32 %v2068, %v2128
        %v2189 = vadd.f32 %v2069, %v2129
        %v2190 = vadd.f32 %v2070, %v2130
        %v2191 = vadd.f32 %v2071, %v2131
        %v2192 = vadd.f32 %v2072, %v2132
        %v2193 = vadd.f32 %v2073, %v2133
        %v2194 = vadd.f32 %v2074, %v2134
        %v2195 = vadd.f32 %v2075, %v2135
        %v2196 = vadd.f32 %v2076, %v2136
        %v2197 = vadd.f32 %v2077, %v2137
        %v2198 = vadd.f32 %v2078, %v2138
        %v2199 = vadd.f32 %v2079, %v2139
        %v2200 = vadd.f32 %v2080, %v2140
        %v2201 = vadd.f32 %v2081, %v2141
        %v2202 = vadd.f32 %v2082, %v2142
        %v2203 = vadd.f32 %v2083, %v2143
        %v2204 = vadd.f32 %v2084, %v2144
        %v2205 = vadd.f32 %v2085, %v2145
        %v2206 = vadd.f32 %v2086, %v2146
        %v2207 = vadd.f32 %v2087, %v2147
        %v2208 = vadd.f32 %v2088, %v2148
        %v2209 = vadd.f32 %v2089, %v2149
        %v2210 = vadd.f32 %v2090, %v2150
        %v2211 = vadd.f32 %v2091, %v2151
        %v2212 = vadd.f32 %v2092, %v2152
        %v2213 = vadd.f32 %v2093, %v2153
        %v2214 = vadd.f32 %v2094, %v2154
        %v2215 = vadd.f32 %v2095, %v2155
        %v2216 = vadd.f32 %v2096, %v2156
        %v2217 = vadd.f32 %v2097, %v2157
        %v2218 = vadd.f32 %v2098, %v2158
        %v2219 = vadd.f32 %v2099, %v2159
        %v2220 = vadd.f32 %v2100, %v2160
        %v2221 = vadd.f32 %v2101, %v2161
        %v2222 = vadd.f32 %v2102, %v2162
        %v2223 = vadd.f32 %v2103, %v2163
        %v2224 = vadd.f32 %v2104, %v2164
        %v2225 = vadd.f32 %v2105, %v2165
        %v2226 = vadd.f32 %v2106, %v2166
        %v2227 = vadd.f32 %v2107, %v2167
        %v2228 = vadd.f32 %v2108, %v2168
        %v2229 = vadd.f32 %v2109, %v2169
        %v2230 = vadd.f32 %v2110, %v2170
        %v2231 = vmul.f32 %v220, 0.020342048
        %v2232 = vmul.f32 %v221, 0.020342048
        %v2233 = vmul.f32 %v222, 0.020342048
        %v2234 = vmul.f32 %v223, 0.020342048
        %v2235 = vmul.f32 %v224, 0.020342048
        %v2236 = vmul.f32 %v225, 0.020342048
        %v2237 = vmul.f32 %v226, 0.020342048
        %v2238 = vmul.f32 %v227, 0.020342048
        %v2239 = vmul.f32 %v228, 0.020342048
        %v2240 = vmul.f32 %v229, 0.020342048
        %v2241 = vmul.f32 %v230, 0.020342048
        %v2242 = vmul.f32 %v231, 0.020342048
        %v2243 = vmul.f32 %v252, 0.020342048
        %v2244 = vmul.f32 %v253, 0.020342048
        %v2245 = vmul.f32 %v254, 0.020342048
        %v2246 = vmul.f32 %v255, 0.020342048
        %v2247 = vmul.f32 %v256, 0.020342048
        %v2248 = vmul.f32 %v257, 0.020342048
        %v2249 = vmul.f32 %v258, 0.020342048
        %v2250 = vmul.f32 %v259, 0.020342048
        %v2251 = vmul.f32 %v260, 0.020342048
        %v2252 = vmul.f32 %v261, 0.020342048
        %v2253 = vmul.f32 %v262, 0.020342048
        %v2254 = vmul.f32 %v263, 0.020342048
        %v2255 = vmul.f32 %v1193, 0.020342048
        %v2256 = vmul.f32 %v1194, 0.020342048
        %v2257 = vmul.f32 %v1195, 0.020342048
        %v2258 = vmul.f32 %v1196, 0.020342048
        %v2259 = vmul.f32 %v1197, 0.020342048
        %v2260 = vmul.f32 %v1198, 0.020342048
        %v2261 = vmul.f32 %v1199, 0.020342048
        %v2262 = vmul.f32 %v1200, 0.020342048
        %v2263 = vmul.f32 %v1201, 0.020342048
        %v2264 = vmul.f32 %v1202, 0.020342048
        %v2265 = vmul.f32 %v1203, 0.020342048
        %v2266 = vmul.f32 %v1204, 0.020342048
        %v2267 = vmul.f32 %v1225, 0.020342048
        %v2268 = vmul.f32 %v1226, 0.020342048
        %v2269 = vmul.f32 %v1227, 0.020342048
        %v2270 = vmul.f32 %v1228, 0.020342048
        %v2271 = vmul.f32 %v1229, 0.020342048
        %v2272 = vmul.f32 %v1230, 0.020342048
        %v2273 = vmul.f32 %v1231, 0.020342048
        %v2274 = vmul.f32 %v1232, 0.020342048
        %v2275 = vmul.f32 %v1233, 0.020342048
        %v2276 = vmul.f32 %v1234, 0.020342048
        %v2277 = vmul.f32 %v1235, 0.020342048
        %v2278 = vmul.f32 %v1236, 0.020342048
        %v2279 = vmul.f32 %v1257, 0.020342048
        %v2280 = vmul.f32 %v1258, 0.020342048
        %v2281 = vmul.f32 %v1259, 0.020342048
        %v2282 = vmul.f32 %v1260, 0.020342048
        %v2283 = vmul.f32 %v1261, 0.020342048
        %v2284 = vmul.f32 %v1262, 0.020342048
        %v2285 = vmul.f32 %v1263, 0.020342048
        %v2286 = vmul.f32 %v1264, 0.020342048
        %v2287 = vmul.f32 %v1265, 0.020342048
        %v2288 = vmul.f32 %v1266, 0.020342048
        %v2289 = vmul.f32 %v1267, 0.020342048
        %v2290 = vmul.f32 %v1268, 0.020342048
        %v2291 = vadd.f32 %v2171, %v2231
        %v2292 = vadd.f32 %v2172, %v2232
        %v2293 = vadd.f32 %v2173, %v2233
        %v2294 = vadd.f32 %v2174, %v2234
        %v2295 = vadd.f32 %v2175, %v2235
        %v2296 = vadd.f32 %v2176, %v2236
        %v2297 = vadd.f32 %v2177, %v2237
        %v2298 = vadd.f32 %v2178, %v2238
        %v2299 = vadd.f32 %v2179, %v2239
        %v2300 = vadd.f32 %v2180, %v2240
        %v2301 = vadd.f32 %v2181, %v2241
        %v2302 = vadd.f32 %v2182, %v2242
        %v2303 = vadd.f32 %v2183, %v2243
        %v2304 = vadd.f32 %v2184, %v2244
        %v2305 = vadd.f32 %v2185, %v2245
        %v2306 = vadd.f32 %v2186, %v2246
        %v2307 = vadd.f32 %v2187, %v2247
        %v2308 = vadd.f32 %v2188, %v2248
        %v2309 = vadd.f32 %v2189, %v2249
        %v2310 = vadd.f32 %v2190, %v2250
        %v2311 = vadd.f32 %v2191, %v2251
        %v2312 = vadd.f32 %v2192, %v2252
        %v2313 = vadd.f32 %v2193, %v2253
        %v2314 = vadd.f32 %v2194, %v2254
        %v2315 = vadd.f32 %v2195, %v2255
        %v2316 = vadd.f32 %v2196, %v2256
        %v2317 = vadd.f32 %v2197, %v2257
        %v2318 = vadd.f32 %v2198, %v2258
        %v2319 = vadd.f32 %v2199, %v2259
        %v2320 = vadd.f32 %v2200, %v2260
        %v2321 = vadd.f32 %v2201, %v2261
        %v2322 = vadd.f32 %v2202, %v2262
        %v2323 = vadd.f32 %v2203, %v2263
        %v2324 = vadd.f32 %v2204, %v2264
        %v2325 = vadd.f32 %v2205, %v2265
        %v2326 = vadd.f32 %v2206, %v2266
        %v2327 = vadd.f32 %v2207, %v2267
        %v2328 = vadd.f32 %v2208, %v2268
        %v2329 = vadd.f32 %v2209, %v2269
        %v2330 = vadd.f32 %v2210, %v2270
        %v2331 = vadd.f32 %v2211, %v2271
        %v2332 = vadd.f32 %v2212, %v2272
        %v2333 = vadd.f32 %v2213, %v2273
        %v2334 = vadd.f32 %v2214, %v2274
        %v2335 = vadd.f32 %v2215, %v2275
        %v2336 = vadd.f32 %v2216, %v2276
        %v2337 = vadd.f32 %v2217, %v2277
        %v2338 = vadd.f32 %v2218, %v2278
        %v2339 = vadd.f32 %v2219, %v2279
        %v2340 = vadd.f32 %v2220, %v2280
        %v2341 = vadd.f32 %v2221, %v2281
        %v2342 = vadd.f32 %v2222, %v2282
        %v2343 = vadd.f32 %v2223, %v2283
        %v2344 = vadd.f32 %v2224, %v2284
        %v2345 = vadd.f32 %v2225, %v2285
        %v2346 = vadd.f32 %v2226, %v2286
        %v2347 = vadd.f32 %v2227, %v2287
        %v2348 = vadd.f32 %v2228, %v2288
        %v2349 = vadd.f32 %v2229, %v2289
        %v2350 = vadd.f32 %v2230, %v2290
        %v2351 = vmul.f32 %v222, 0.0053621056
        %v2352 = vmul.f32 %v223, 0.0053621056
        %v2353 = vmul.f32 %v224, 0.0053621056
        %v2354 = vmul.f32 %v225, 0.0053621056
        %v2355 = vmul.f32 %v226, 0.0053621056
        %v2356 = vmul.f32 %v227, 0.0053621056
        %v2357 = vmul.f32 %v228, 0.0053621056
        %v2358 = vmul.f32 %v229, 0.0053621056
        %v2359 = vmul.f32 %v230, 0.0053621056
        %v2360 = vmul.f32 %v231, 0.0053621056
        %v2361 = vmul.f32 %v232, 0.0053621056
        %v2362 = vmul.f32 %v233, 0.0053621056
        %v2363 = vmul.f32 %v254, 0.0053621056
        %v2364 = vmul.f32 %v255, 0.0053621056
        %v2365 = vmul.f32 %v256, 0.0053621056
        %v2366 = vmul.f32 %v257, 0.0053621056
        %v2367 = vmul.f32 %v258, 0.0053621056
        %v2368 = vmul.f32 %v259, 0.0053621056
        %v2369 = vmul.f32 %v260, 0.0053621056
        %v2370 = vmul.f32 %v261, 0.0053621056
        %v2371 = vmul.f32 %v262, 0.0053621056
        %v2372 = vmul.f32 %v263, 0.0053621056
        %v2373 = vmul.f32 %v264, 0.0053621056
        %v2374 = vmul.f32 %v265, 0.0053621056
        %v2375 = vmul.f32 %v1195, 0.0053621056
        %v2376 = vmul.f32 %v1196, 0.0053621056
        %v2377 = vmul.f32 %v1197, 0.0053621056
        %v2378 = vmul.f32 %v1198, 0.0053621056
        %v2379 = vmul.f32 %v1199, 0.0053621056
        %v2380 = vmul.f32 %v1200, 0.0053621056
        %v2381 = vmul.f32 %v1201, 0.0053621056
        %v2382 = vmul.f32 %v1202, 0.0053621056
        %v2383 = vmul.f32 %v1203, 0.0053621056
        %v2384 = vmul.f32 %v1204, 0.0053621056
        %v2385 = vmul.f32 %v1205, 0.0053621056
        %v2386 = vmul.f32 %v1206, 0.0053621056
        %v2387 = vmul.f32 %v1227, 0.0053621056
        %v2388 = vmul.f32 %v1228, 0.0053621056
        %v2389 = vmul.f32 %v1229, 0.0053621056
        %v2390 = vmul.f32 %v1230, 0.0053621056
        %v2391 = vmul.f32 %v1231, 0.0053621056
        %v2392 = vmul.f32 %v1232, 0.0053621056
        %v2393 = vmul.f32 %v1233, 0.0053621056
        %v2394 = vmul.f32 %v1234, 0.0053621056
        %v2395 = vmul.f32 %v1235, 0.0053621056
        %v2396 = vmul.f32 %v1236, 0.0053621056
        %v2397 = vmul.f32 %v1237, 0.0053621056
        %v2398 = vmul.f32 %v1238, 0.0053621056
        %v2399 = vmul.f32 %v1259, 0.0053621056
        %v2400 = vmul.f32 %v1260, 0.0053621056
        %v2401 = vmul.f32 %v1261, 0.0053621056
        %v2402 = vmul.f32 %v1262, 0.0053621056
        %v2403 = vmul.f32 %v1263, 0.0053621056
        %v2404 = vmul.f32 %v1264, 0.0053621056
        %v2405 = vmul.f32 %v1265, 0.0053621056
        %v2406 = vmul.f32 %v1266, 0.0053621056
        %v2407 = vmul.f32 %v1267, 0.0053621056
        %v2408 = vmul.f32 %v1268, 0.0053621056
        %v2409 = vmul.f32 %v1269, 0.0053621056
        %v2410 = vmul.f32 %v1270, 0.0053621056
        %v2411 = vadd.f32 %v2291, %v2351
        %v2412 = vadd.f32 %v2292, %v2352
        %v2413 = vadd.f32 %v2293, %v2353
        %v2414 = vadd.f32 %v2294, %v2354
        %v2415 = vadd.f32 %v2295, %v2355
        %v2416 = vadd.f32 %v2296, %v2356
        %v2417 = vadd.f32 %v2297, %v2357
        %v2418 = vadd.f32 %v2298, %v2358
        %v2419 = vadd.f32 %v2299, %v2359
        %v2420 = vadd.f32 %v2300, %v2360
        %v2421 = vadd.f32 %v2301, %v2361
        %v2422 = vadd.f32 %v2302, %v2362
        %v2423 = vadd.f32 %v2303, %v2363
        %v2424 = vadd.f32 %v2304, %v2364
        %v2425 = vadd.f32 %v2305, %v2365
        %v2426 = vadd.f32 %v2306, %v2366
        %v2427 = vadd.f32 %v2307, %v2367
        %v2428 = vadd.f32 %v2308, %v2368
        %v2429 = vadd.f32 %v2309, %v2369
        %v2430 = vadd.f32 %v2310, %v2370
        %v2431 = vadd.f32 %v2311, %v2371
        %v2432 = vadd.f32 %v2312, %v2372
        %v2433 = vadd.f32 %v2313, %v2373
        %v2434 = vadd.f32 %v2314, %v2374
        %v2435 = vadd.f32 %v2315, %v2375
        %v2436 = vadd.f32 %v2316, %v2376
        %v2437 = vadd.f32 %v2317, %v2377
        %v2438 = vadd.f32 %v2318, %v2378
        %v2439 = vadd.f32 %v2319, %v2379
        %v2440 = vadd.f32 %v2320, %v2380
        %v2441 = vadd.f32 %v2321, %v2381
        %v2442 = vadd.f32 %v2322, %v2382
        %v2443 = vadd.f32 %v2323, %v2383
        %v2444 = vadd.f32 %v2324, %v2384
        %v2445 = vadd.f32 %v2325, %v2385
        %v2446 = vadd.f32 %v2326, %v2386
        %v2447 = vadd.f32 %v2327, %v2387
        %v2448 = vadd.f32 %v2328, %v2388
        %v2449 = vadd.f32 %v2329, %v2389
        %v2450 = vadd.f32 %v2330, %v2390
        %v2451 = vadd.f32 %v2331, %v2391
        %v2452 = vadd.f32 %v2332, %v2392
        %v2453 = vadd.f32 %v2333, %v2393
        %v2454 = vadd.f32 %v2334, %v2394
        %v2455 = vadd.f32 %v2335, %v2395
        %v2456 = vadd.f32 %v2336, %v2396
        %v2457 = vadd.f32 %v2337, %v2397
        %v2458 = vadd.f32 %v2338, %v2398
        %v2459 = vadd.f32 %v2339, %v2399
        %v2460 = vadd.f32 %v2340, %v2400
        %v2461 = vadd.f32 %v2341, %v2401
        %v2462 = vadd.f32 %v2342, %v2402
        %v2463 = vadd.f32 %v2343, %v2403
        %v2464 = vadd.f32 %v2344, %v2404
        %v2465 = vadd.f32 %v2345, %v2405
        %v2466 = vadd.f32 %v2346, %v2406
        %v2467 = vadd.f32 %v2347, %v2407
        %v2468 = vadd.f32 %v2348, %v2408
        %v2469 = vadd.f32 %v2349, %v2409
        %v2470 = vadd.f32 %v2350, %v2410
        %v2471 = vmul.f32 %v2411, 0.0053621056
        %v2472 = vmul.f32 %v2413, 0.0053621056
        %v2473 = vmul.f32 %v2415, 0.0053621056
        %v2474 = vmul.f32 %v2417, 0.0053621056
        %v2475 = vmul.f32 %v2419, 0.0053621056
        %v2476 = vmul.f32 %v2421, 0.0053621056
        %v2477 = vmul.f32 %v2423, 0.0053621056
        %v2478 = vmul.f32 %v2425, 0.0053621056
        %v2479 = vmul.f32 %v2427, 0.0053621056
        %v2480 = vmul.f32 %v2429, 0.0053621056
        %v2481 = vmul.f32 %v2431, 0.0053621056
        %v2482 = vmul.f32 %v2433, 0.0053621056
        %v2483 = vmul.f32 %v2435, 0.0053621056
        %v2484 = vmul.f32 %v2437, 0.0053621056
        %v2485 = vmul.f32 %v2439, 0.0053621056
        %v2486 = vmul.f32 %v2441, 0.0053621056
        %v2487 = vmul.f32 %v2443, 0.0053621056
        %v2488 = vmul.f32 %v2445, 0.0053621056
        %v2489 = vmul.f32 %v2447, 0.0053621056
        %v2490 = vmul.f32 %v2449, 0.0053621056
        %v2491 = vmul.f32 %v2451, 0.0053621056
        %v2492 = vmul.f32 %v2453, 0.0053621056
        %v2493 = vmul.f32 %v2455, 0.0053621056
        %v2494 = vmul.f32 %v2457, 0.0053621056
        %v2495 = vmul.f32 %v2459, 0.0053621056
        %v2496 = vmul.f32 %v2461, 0.0053621056
        %v2497 = vmul.f32 %v2463, 0.0053621056
        %v2498 = vmul.f32 %v2465, 0.0053621056
        %v2499 = vmul.f32 %v2467, 0.0053621056
        %v2500 = vmul.f32 %v2469, 0.0053621056
        %v2501 = vmul.f32 %v2411, 0.020342048
        %v2502 = vmul.f32 %v2413, 0.020342048
        %v2503 = vmul.f32 %v2415, 0.020342048
        %v2504 = vmul.f32 %v2417, 0.020342048
        %v2505 = vmul.f32 %v2419, 0.020342048
        %v2506 = vmul.f32 %v2421, 0.020342048
        %v2507 = vmul.f32 %v2423, 0.020342048
        %v2508 = vmul.f32 %v2425, 0.020342048
        %v2509 = vmul.f32 %v2427, 0.020342048
        %v2510 = vmul.f32 %v2429, 0.020342048
        %v2511 = vmul.f32 %v2431, 0.020342048
        %v2512 = vmul.f32 %v2433, 0.020342048
        %v2513 = vmul.f32 %v2435, 0.020342048
        %v2514 = vmul.f32 %v2437, 0.020342048
        %v2515 = vmul.f32 %v2439, 0.020342048
        %v2516 = vmul.f32 %v2441, 0.020342048
        %v2517 = vmul.f32 %v2443, 0.020342048
        %v2518 = vmul.f32 %v2445, 0.020342048
        %v2519 = vmul.f32 %v2447, 0.020342048
        %v2520 = vmul.f32 %v2449, 0.020342048
        %v2521 = vmul.f32 %v2451, 0.020342048
        %v2522 = vmul.f32 %v2453, 0.020342048
        %v2523 = vmul.f32 %v2455, 0.020342048
        %v2524 = vmul.f32 %v2457, 0.020342048
        %v2525 = vmul.f32 %v2459, 0.020342048
        %v2526 = vmul.f32 %v2461, 0.020342048
        %v2527 = vmul.f32 %v2463, 0.020342048
        %v2528 = vmul.f32 %v2465, 0.020342048
        %v2529 = vmul.f32 %v2467, 0.020342048
        %v2530 = vmul.f32 %v2469, 0.020342048
        %v2561 = vrot.slane %v2501, 1
        %v2562 = vrot.slane %v2502, 1
        %v2563 = vrot.slane %v2503, 1
        %v2564 = vrot.slane %v2504, 1
        %v2565 = vrot.slane %v2505, 1
        %v2566 = vrot.slane %v2506, 1
        %v2567 = vrot.slane %v2507, 1
        %v2568 = vrot.slane %v2508, 1
        %v2569 = vrot.slane %v2509, 1
        %v2570 = vrot.slane %v2510, 1
        %v2571 = vrot.slane %v2511, 1
        %v2572 = vrot.slane %v2512, 1
        %v2573 = vrot.slane %v2513, 1
        %v2574 = vrot.slane %v2514, 1
        %v2575 = vrot.slane %v2515, 1
        %v2576 = vrot.slane %v2516, 1
        %v2577 = vrot.slane %v2517, 1
        %v2578 = vrot.slane %v2518, 1
        %v2579 = vrot.slane %v2519, 1
        %v2580 = vrot.slane %v2520, 1
        %v2581 = vrot.slane %v2521, 1
        %v2582 = vrot.slane %v2522, 1
        %v2583 = vrot.slane %v2523, 1
        %v2584 = vrot.slane %v2524, 1
        %v2585 = vrot.slane %v2525, 1
        %v2586 = vrot.slane %v2526, 1
        %v2587 = vrot.slane %v2527, 1
        %v2588 = vrot.slane %v2528, 1
        %v2589 = vrot.slane %v2529, 1
        %v2590 = vrot.slane %v2530, 1
        %v2621 = vadd.f32 %v2471, %v2561
        %v2622 = vadd.f32 %v2472, %v2562
        %v2623 = vadd.f32 %v2473, %v2563
        %v2624 = vadd.f32 %v2474, %v2564
        %v2625 = vadd.f32 %v2475, %v2565
        %v2626 = vadd.f32 %v2476, %v2566
        %v2627 = vadd.f32 %v2477, %v2567
        %v2628 = vadd.f32 %v2478, %v2568
        %v2629 = vadd.f32 %v2479, %v2569
        %v2630 = vadd.f32 %v2480, %v2570
        %v2631 = vadd.f32 %v2481, %v2571
        %v2632 = vadd.f32 %v2482, %v2572
        %v2633 = vadd.f32 %v2483, %v2573
        %v2634 = vadd.f32 %v2484, %v2574
        %v2635 = vadd.f32 %v2485, %v2575
        %v2636 = vadd.f32 %v2486, %v2576
        %v2637 = vadd.f32 %v2487, %v2577
        %v2638 = vadd.f32 %v2488, %v2578
        %v2639 = vadd.f32 %v2489, %v2579
        %v2640 = vadd.f32 %v2490, %v2580
        %v2641 = vadd.f32 %v2491, %v2581
        %v2642 = vadd.f32 %v2492, %v2582
        %v2643 = vadd.f32 %v2493, %v2583
        %v2644 = vadd.f32 %v2494, %v2584
        %v2645 = vadd.f32 %v2495, %v2585
        %v2646 = vadd.f32 %v2496, %v2586
        %v2647 = vadd.f32 %v2497, %v2587
        %v2648 = vadd.f32 %v2498, %v2588
        %v2649 = vadd.f32 %v2499, %v2589
        %v2650 = vadd.f32 %v2500, %v2590
        %v2651 = vmul.f32 %v2411, 0.057381798
        %v2652 = vmul.f32 %v2413, 0.057381798
        %v2653 = vmul.f32 %v2415, 0.057381798
        %v2654 = vmul.f32 %v2417, 0.057381798
        %v2655 = vmul.f32 %v2419, 0.057381798
        %v2656 = vmul.f32 %v2421, 0.057381798
        %v2657 = vmul.f32 %v2423, 0.057381798
        %v2658 = vmul.f32 %v2425, 0.057381798
        %v2659 = vmul.f32 %v2427, 0.057381798
        %v2660 = vmul.f32 %v2429, 0.057381798
        %v2661 = vmul.f32 %v2431, 0.057381798
        %v2662 = vmul.f32 %v2433, 0.057381798
        %v2663 = vmul.f32 %v2435, 0.057381798
        %v2664 = vmul.f32 %v2437, 0.057381798
        %v2665 = vmul.f32 %v2439, 0.057381798
        %v2666 = vmul.f32 %v2441, 0.057381798
        %v2667 = vmul.f32 %v2443, 0.057381798
        %v2668 = vmul.f32 %v2445, 0.057381798
        %v2669 = vmul.f32 %v2447, 0.057381798
        %v2670 = vmul.f32 %v2449, 0.057381798
        %v2671 = vmul.f32 %v2451, 0.057381798
        %v2672 = vmul.f32 %v2453, 0.057381798
        %v2673 = vmul.f32 %v2455, 0.057381798
        %v2674 = vmul.f32 %v2457, 0.057381798
        %v2675 = vmul.f32 %v2459, 0.057381798
        %v2676 = vmul.f32 %v2461, 0.057381798
        %v2677 = vmul.f32 %v2463, 0.057381798
        %v2678 = vmul.f32 %v2465, 0.057381798
        %v2679 = vmul.f32 %v2467, 0.057381798
        %v2680 = vmul.f32 %v2469, 0.057381798
        %v2711 = vrot.slane %v2651, 2
        %v2712 = vrot.slane %v2652, 2
        %v2713 = vrot.slane %v2653, 2
        %v2714 = vrot.slane %v2654, 2
        %v2715 = vrot.slane %v2655, 2
        %v2716 = vrot.slane %v2656, 2
        %v2717 = vrot.slane %v2657, 2
        %v2718 = vrot.slane %v2658, 2
        %v2719 = vrot.slane %v2659, 2
        %v2720 = vrot.slane %v2660, 2
        %v2721 = vrot.slane %v2661, 2
        %v2722 = vrot.slane %v2662, 2
        %v2723 = vrot.slane %v2663, 2
        %v2724 = vrot.slane %v2664, 2
        %v2725 = vrot.slane %v2665, 2
        %v2726 = vrot.slane %v2666, 2
        %v2727 = vrot.slane %v2667, 2
        %v2728 = vrot.slane %v2668, 2
        %v2729 = vrot.slane %v2669, 2
        %v2730 = vrot.slane %v2670, 2
        %v2731 = vrot.slane %v2671, 2
        %v2732 = vrot.slane %v2672, 2
        %v2733 = vrot.slane %v2673, 2
        %v2734 = vrot.slane %v2674, 2
        %v2735 = vrot.slane %v2675, 2
        %v2736 = vrot.slane %v2676, 2
        %v2737 = vrot.slane %v2677, 2
        %v2738 = vrot.slane %v2678, 2
        %v2739 = vrot.slane %v2679, 2
        %v2740 = vrot.slane %v2680, 2
        %v2771 = vadd.f32 %v2621, %v2711
        %v2772 = vadd.f32 %v2622, %v2712
        %v2773 = vadd.f32 %v2623, %v2713
        %v2774 = vadd.f32 %v2624, %v2714
        %v2775 = vadd.f32 %v2625, %v2715
        %v2776 = vadd.f32 %v2626, %v2716
        %v2777 = vadd.f32 %v2627, %v2717
        %v2778 = vadd.f32 %v2628, %v2718
        %v2779 = vadd.f32 %v2629, %v2719
        %v2780 = vadd.f32 %v2630, %v2720
        %v2781 = vadd.f32 %v2631, %v2721
        %v2782 = vadd.f32 %v2632, %v2722
        %v2783 = vadd.f32 %v2633, %v2723
        %v2784 = vadd.f32 %v2634, %v2724
        %v2785 = vadd.f32 %v2635, %v2725
        %v2786 = vadd.f32 %v2636, %v2726
        %v2787 = vadd.f32 %v2637, %v2727
        %v2788 = vadd.f32 %v2638, %v2728
        %v2789 = vadd.f32 %v2639, %v2729
        %v2790 = vadd.f32 %v2640, %v2730
        %v2791 = vadd.f32 %v2641, %v2731
        %v2792 = vadd.f32 %v2642, %v2732
        %v2793 = vadd.f32 %v2643, %v2733
        %v2794 = vadd.f32 %v2644, %v2734
        %v2795 = vadd.f32 %v2645, %v2735
        %v2796 = vadd.f32 %v2646, %v2736
        %v2797 = vadd.f32 %v2647, %v2737
        %v2798 = vadd.f32 %v2648, %v2738
        %v2799 = vadd.f32 %v2649, %v2739
        %v2800 = vadd.f32 %v2650, %v2740
        %v2801 = vmul.f32 %v2411, 0.12035766
        %v2802 = vmul.f32 %v2412, 0.12035766
        %v2803 = vmul.f32 %v2413, 0.12035766
        %v2804 = vmul.f32 %v2414, 0.12035766
        %v2805 = vmul.f32 %v2415, 0.12035766
        %v2806 = vmul.f32 %v2416, 0.12035766
        %v2807 = vmul.f32 %v2417, 0.12035766
        %v2808 = vmul.f32 %v2418, 0.12035766
        %v2809 = vmul.f32 %v2419, 0.12035766
        %v2810 = vmul.f32 %v2420, 0.12035766
        %v2811 = vmul.f32 %v2421, 0.12035766
        %v2812 = vmul.f32 %v2422, 0.12035766
        %v2813 = vmul.f32 %v2423, 0.12035766
        %v2814 = vmul.f32 %v2424, 0.12035766
        %v2815 = vmul.f32 %v2425, 0.12035766
        %v2816 = vmul.f32 %v2426, 0.12035766
        %v2817 = vmul.f32 %v2427, 0.12035766
        %v2818 = vmul.f32 %v2428, 0.12035766
        %v2819 = vmul.f32 %v2429, 0.12035766
        %v2820 = vmul.f32 %v2430, 0.12035766
        %v2821 = vmul.f32 %v2431, 0.12035766
        %v2822 = vmul.f32 %v2432, 0.12035766
        %v2823 = vmul.f32 %v2433, 0.12035766
        %v2824 = vmul.f32 %v2434, 0.12035766
        %v2825 = vmul.f32 %v2435, 0.12035766
        %v2826 = vmul.f32 %v2436, 0.12035766
        %v2827 = vmul.f32 %v2437, 0.12035766
        %v2828 = vmul.f32 %v2438, 0.12035766
        %v2829 = vmul.f32 %v2439, 0.12035766
        %v2830 = vmul.f32 %v2440, 0.12035766
        %v2831 = vmul.f32 %v2441, 0.12035766
        %v2832 = vmul.f32 %v2442, 0.12035766
        %v2833 = vmul.f32 %v2443, 0.12035766
        %v2834 = vmul.f32 %v2444, 0.12035766
        %v2835 = vmul.f32 %v2445, 0.12035766
        %v2836 = vmul.f32 %v2446, 0.12035766
        %v2837 = vmul.f32 %v2447, 0.12035766
        %v2838 = vmul.f32 %v2448, 0.12035766
        %v2839 = vmul.f32 %v2449, 0.12035766
        %v2840 = vmul.f32 %v2450, 0.12035766
        %v2841 = vmul.f32 %v2451, 0.12035766
        %v2842 = vmul.f32 %v2452, 0.12035766
        %v2843 = vmul.f32 %v2453, 0.12035766
        %v2844 = vmul.f32 %v2454, 0.12035766
        %v2845 = vmul.f32 %v2455, 0.12035766
        %v2846 = vmul.f32 %v2456, 0.12035766
        %v2847 = vmul.f32 %v2457, 0.12035766
        %v2848 = vmul.f32 %v2458, 0.12035766
        %v2849 = vmul.f32 %v2459, 0.12035766
        %v2850 = vmul.f32 %v2460, 0.12035766
        %v2851 = vmul.f32 %v2461, 0.12035766
        %v2852 = vmul.f32 %v2462, 0.12035766
        %v2853 = vmul.f32 %v2463, 0.12035766
        %v2854 = vmul.f32 %v2464, 0.12035766
        %v2855 = vmul.f32 %v2465, 0.12035766
        %v2856 = vmul.f32 %v2466, 0.12035766
        %v2857 = vmul.f32 %v2467, 0.12035766
        %v2858 = vmul.f32 %v2468, 0.12035766
        %v2859 = vmul.f32 %v2469, 0.12035766
        %v2860 = vmul.f32 %v2470, 0.12035766
        %vm2921 = vcmask 1044480
        %v2922 = vrot.slane %v2801, 3
        %v2923 = vrot.slane %v2802, 3
        %v2924 = vsel %vm2921, %v2922, %v2923
        %v2925 = vrot.slane %v2803, 3
        %v2926 = vrot.slane %v2804, 3
        %v2927 = vsel %vm2921, %v2925, %v2926
        %v2928 = vrot.slane %v2805, 3
        %v2929 = vrot.slane %v2806, 3
        %v2930 = vsel %vm2921, %v2928, %v2929
        %v2931 = vrot.slane %v2807, 3
        %v2932 = vrot.slane %v2808, 3
        %v2933 = vsel %vm2921, %v2931, %v2932
        %v2934 = vrot.slane %v2809, 3
        %v2935 = vrot.slane %v2810, 3
        %v2936 = vsel %vm2921, %v2934, %v2935
        %v2937 = vrot.slane %v2811, 3
        %v2938 = vrot.slane %v2812, 3
        %v2939 = vsel %vm2921, %v2937, %v2938
        %v2940 = vrot.slane %v2813, 3
        %v2941 = vrot.slane %v2814, 3
        %v2942 = vsel %vm2921, %v2940, %v2941
        %v2943 = vrot.slane %v2815, 3
        %v2944 = vrot.slane %v2816, 3
        %v2945 = vsel %vm2921, %v2943, %v2944
        %v2946 = vrot.slane %v2817, 3
        %v2947 = vrot.slane %v2818, 3
        %v2948 = vsel %vm2921, %v2946, %v2947
        %v2949 = vrot.slane %v2819, 3
        %v2950 = vrot.slane %v2820, 3
        %v2951 = vsel %vm2921, %v2949, %v2950
        %v2952 = vrot.slane %v2821, 3
        %v2953 = vrot.slane %v2822, 3
        %v2954 = vsel %vm2921, %v2952, %v2953
        %v2955 = vrot.slane %v2823, 3
        %v2956 = vrot.slane %v2824, 3
        %v2957 = vsel %vm2921, %v2955, %v2956
        %v2958 = vrot.slane %v2825, 3
        %v2959 = vrot.slane %v2826, 3
        %v2960 = vsel %vm2921, %v2958, %v2959
        %v2961 = vrot.slane %v2827, 3
        %v2962 = vrot.slane %v2828, 3
        %v2963 = vsel %vm2921, %v2961, %v2962
        %v2964 = vrot.slane %v2829, 3
        %v2965 = vrot.slane %v2830, 3
        %v2966 = vsel %vm2921, %v2964, %v2965
        %v2967 = vrot.slane %v2831, 3
        %v2968 = vrot.slane %v2832, 3
        %v2969 = vsel %vm2921, %v2967, %v2968
        %v2970 = vrot.slane %v2833, 3
        %v2971 = vrot.slane %v2834, 3
        %v2972 = vsel %vm2921, %v2970, %v2971
        %v2973 = vrot.slane %v2835, 3
        %v2974 = vrot.slane %v2836, 3
        %v2975 = vsel %vm2921, %v2973, %v2974
        %v2976 = vrot.slane %v2837, 3
        %v2977 = vrot.slane %v2838, 3
        %v2978 = vsel %vm2921, %v2976, %v2977
        %v2979 = vrot.slane %v2839, 3
        %v2980 = vrot.slane %v2840, 3
        %v2981 = vsel %vm2921, %v2979, %v2980
        %v2982 = vrot.slane %v2841, 3
        %v2983 = vrot.slane %v2842, 3
        %v2984 = vsel %vm2921, %v2982, %v2983
        %v2985 = vrot.slane %v2843, 3
        %v2986 = vrot.slane %v2844, 3
        %v2987 = vsel %vm2921, %v2985, %v2986
        %v2988 = vrot.slane %v2845, 3
        %v2989 = vrot.slane %v2846, 3
        %v2990 = vsel %vm2921, %v2988, %v2989
        %v2991 = vrot.slane %v2847, 3
        %v2992 = vrot.slane %v2848, 3
        %v2993 = vsel %vm2921, %v2991, %v2992
        %v2994 = vrot.slane %v2849, 3
        %v2995 = vrot.slane %v2850, 3
        %v2996 = vsel %vm2921, %v2994, %v2995
        %v2997 = vrot.slane %v2851, 3
        %v2998 = vrot.slane %v2852, 3
        %v2999 = vsel %vm2921, %v2997, %v2998
        %v3000 = vrot.slane %v2853, 3
        %v3001 = vrot.slane %v2854, 3
        %v3002 = vsel %vm2921, %v3000, %v3001
        %v3003 = vrot.slane %v2855, 3
        %v3004 = vrot.slane %v2856, 3
        %v3005 = vsel %vm2921, %v3003, %v3004
        %v3006 = vrot.slane %v2857, 3
        %v3007 = vrot.slane %v2858, 3
        %v3008 = vsel %vm2921, %v3006, %v3007
        %v3009 = vrot.slane %v2859, 3
        %v3010 = vrot.slane %v2860, 3
        %v3011 = vsel %vm2921, %v3009, %v3010
        %v3042 = vadd.f32 %v2771, %v2924
        %v3043 = vadd.f32 %v2772, %v2927
        %v3044 = vadd.f32 %v2773, %v2930
        %v3045 = vadd.f32 %v2774, %v2933
        %v3046 = vadd.f32 %v2775, %v2936
        %v3047 = vadd.f32 %v2776, %v2939
        %v3048 = vadd.f32 %v2777, %v2942
        %v3049 = vadd.f32 %v2778, %v2945
        %v3050 = vadd.f32 %v2779, %v2948
        %v3051 = vadd.f32 %v2780, %v2951
        %v3052 = vadd.f32 %v2781, %v2954
        %v3053 = vadd.f32 %v2782, %v2957
        %v3054 = vadd.f32 %v2783, %v2960
        %v3055 = vadd.f32 %v2784, %v2963
        %v3056 = vadd.f32 %v2785, %v2966
        %v3057 = vadd.f32 %v2786, %v2969
        %v3058 = vadd.f32 %v2787, %v2972
        %v3059 = vadd.f32 %v2788, %v2975
        %v3060 = vadd.f32 %v2789, %v2978
        %v3061 = vadd.f32 %v2790, %v2981
        %v3062 = vadd.f32 %v2791, %v2984
        %v3063 = vadd.f32 %v2792, %v2987
        %v3064 = vadd.f32 %v2793, %v2990
        %v3065 = vadd.f32 %v2794, %v2993
        %v3066 = vadd.f32 %v2795, %v2996
        %v3067 = vadd.f32 %v2796, %v2999
        %v3068 = vadd.f32 %v2797, %v3002
        %v3069 = vadd.f32 %v2798, %v3005
        %v3070 = vadd.f32 %v2799, %v3008
        %v3071 = vadd.f32 %v2800, %v3011
        %v3072 = vmul.f32 %v2411, 0.18771264
        %v3073 = vmul.f32 %v2412, 0.18771264
        %v3074 = vmul.f32 %v2413, 0.18771264
        %v3075 = vmul.f32 %v2414, 0.18771264
        %v3076 = vmul.f32 %v2415, 0.18771264
        %v3077 = vmul.f32 %v2416, 0.18771264
        %v3078 = vmul.f32 %v2417, 0.18771264
        %v3079 = vmul.f32 %v2418, 0.18771264
        %v3080 = vmul.f32 %v2419, 0.18771264
        %v3081 = vmul.f32 %v2420, 0.18771264
        %v3082 = vmul.f32 %v2421, 0.18771264
        %v3083 = vmul.f32 %v2422, 0.18771264
        %v3084 = vmul.f32 %v2423, 0.18771264
        %v3085 = vmul.f32 %v2424, 0.18771264
        %v3086 = vmul.f32 %v2425, 0.18771264
        %v3087 = vmul.f32 %v2426, 0.18771264
        %v3088 = vmul.f32 %v2427, 0.18771264
        %v3089 = vmul.f32 %v2428, 0.18771264
        %v3090 = vmul.f32 %v2429, 0.18771264
        %v3091 = vmul.f32 %v2430, 0.18771264
        %v3092 = vmul.f32 %v2431, 0.18771264
        %v3093 = vmul.f32 %v2432, 0.18771264
        %v3094 = vmul.f32 %v2433, 0.18771264
        %v3095 = vmul.f32 %v2434, 0.18771264
        %v3096 = vmul.f32 %v2435, 0.18771264
        %v3097 = vmul.f32 %v2436, 0.18771264
        %v3098 = vmul.f32 %v2437, 0.18771264
        %v3099 = vmul.f32 %v2438, 0.18771264
        %v3100 = vmul.f32 %v2439, 0.18771264
        %v3101 = vmul.f32 %v2440, 0.18771264
        %v3102 = vmul.f32 %v2441, 0.18771264
        %v3103 = vmul.f32 %v2442, 0.18771264
        %v3104 = vmul.f32 %v2443, 0.18771264
        %v3105 = vmul.f32 %v2444, 0.18771264
        %v3106 = vmul.f32 %v2445, 0.18771264
        %v3107 = vmul.f32 %v2446, 0.18771264
        %v3108 = vmul.f32 %v2447, 0.18771264
        %v3109 = vmul.f32 %v2448, 0.18771264
        %v3110 = vmul.f32 %v2449, 0.18771264
        %v3111 = vmul.f32 %v2450, 0.18771264
        %v3112 = vmul.f32 %v2451, 0.18771264
        %v3113 = vmul.f32 %v2452, 0.18771264
        %v3114 = vmul.f32 %v2453, 0.18771264
        %v3115 = vmul.f32 %v2454, 0.18771264
        %v3116 = vmul.f32 %v2455, 0.18771264
        %v3117 = vmul.f32 %v2456, 0.18771264
        %v3118 = vmul.f32 %v2457, 0.18771264
        %v3119 = vmul.f32 %v2458, 0.18771264
        %v3120 = vmul.f32 %v2459, 0.18771264
        %v3121 = vmul.f32 %v2460, 0.18771264
        %v3122 = vmul.f32 %v2461, 0.18771264
        %v3123 = vmul.f32 %v2462, 0.18771264
        %v3124 = vmul.f32 %v2463, 0.18771264
        %v3125 = vmul.f32 %v2464, 0.18771264
        %v3126 = vmul.f32 %v2465, 0.18771264
        %v3127 = vmul.f32 %v2466, 0.18771264
        %v3128 = vmul.f32 %v2467, 0.18771264
        %v3129 = vmul.f32 %v2468, 0.18771264
        %v3130 = vmul.f32 %v2469, 0.18771264
        %v3131 = vmul.f32 %v2470, 0.18771264
        %vm3192 = vcmask 1043456
        %v3193 = vrot.slane %v3072, 4
        %v3194 = vrot.slane %v3073, 4
        %v3195 = vsel %vm3192, %v3193, %v3194
        %v3196 = vrot.slane %v3074, 4
        %v3197 = vrot.slane %v3075, 4
        %v3198 = vsel %vm3192, %v3196, %v3197
        %v3199 = vrot.slane %v3076, 4
        %v3200 = vrot.slane %v3077, 4
        %v3201 = vsel %vm3192, %v3199, %v3200
        %v3202 = vrot.slane %v3078, 4
        %v3203 = vrot.slane %v3079, 4
        %v3204 = vsel %vm3192, %v3202, %v3203
        %v3205 = vrot.slane %v3080, 4
        %v3206 = vrot.slane %v3081, 4
        %v3207 = vsel %vm3192, %v3205, %v3206
        %v3208 = vrot.slane %v3082, 4
        %v3209 = vrot.slane %v3083, 4
        %v3210 = vsel %vm3192, %v3208, %v3209
        %v3211 = vrot.slane %v3084, 4
        %v3212 = vrot.slane %v3085, 4
        %v3213 = vsel %vm3192, %v3211, %v3212
        %v3214 = vrot.slane %v3086, 4
        %v3215 = vrot.slane %v3087, 4
        %v3216 = vsel %vm3192, %v3214, %v3215
        %v3217 = vrot.slane %v3088, 4
        %v3218 = vrot.slane %v3089, 4
        %v3219 = vsel %vm3192, %v3217, %v3218
        %v3220 = vrot.slane %v3090, 4
        %v3221 = vrot.slane %v3091, 4
        %v3222 = vsel %vm3192, %v3220, %v3221
        %v3223 = vrot.slane %v3092, 4
        %v3224 = vrot.slane %v3093, 4
        %v3225 = vsel %vm3192, %v3223, %v3224
        %v3226 = vrot.slane %v3094, 4
        %v3227 = vrot.slane %v3095, 4
        %v3228 = vsel %vm3192, %v3226, %v3227
        %v3229 = vrot.slane %v3096, 4
        %v3230 = vrot.slane %v3097, 4
        %v3231 = vsel %vm3192, %v3229, %v3230
        %v3232 = vrot.slane %v3098, 4
        %v3233 = vrot.slane %v3099, 4
        %v3234 = vsel %vm3192, %v3232, %v3233
        %v3235 = vrot.slane %v3100, 4
        %v3236 = vrot.slane %v3101, 4
        %v3237 = vsel %vm3192, %v3235, %v3236
        %v3238 = vrot.slane %v3102, 4
        %v3239 = vrot.slane %v3103, 4
        %v3240 = vsel %vm3192, %v3238, %v3239
        %v3241 = vrot.slane %v3104, 4
        %v3242 = vrot.slane %v3105, 4
        %v3243 = vsel %vm3192, %v3241, %v3242
        %v3244 = vrot.slane %v3106, 4
        %v3245 = vrot.slane %v3107, 4
        %v3246 = vsel %vm3192, %v3244, %v3245
        %v3247 = vrot.slane %v3108, 4
        %v3248 = vrot.slane %v3109, 4
        %v3249 = vsel %vm3192, %v3247, %v3248
        %v3250 = vrot.slane %v3110, 4
        %v3251 = vrot.slane %v3111, 4
        %v3252 = vsel %vm3192, %v3250, %v3251
        %v3253 = vrot.slane %v3112, 4
        %v3254 = vrot.slane %v3113, 4
        %v3255 = vsel %vm3192, %v3253, %v3254
        %v3256 = vrot.slane %v3114, 4
        %v3257 = vrot.slane %v3115, 4
        %v3258 = vsel %vm3192, %v3256, %v3257
        %v3259 = vrot.slane %v3116, 4
        %v3260 = vrot.slane %v3117, 4
        %v3261 = vsel %vm3192, %v3259, %v3260
        %v3262 = vrot.slane %v3118, 4
        %v3263 = vrot.slane %v3119, 4
        %v3264 = vsel %vm3192, %v3262, %v3263
        %v3265 = vrot.slane %v3120, 4
        %v3266 = vrot.slane %v3121, 4
        %v3267 = vsel %vm3192, %v3265, %v3266
        %v3268 = vrot.slane %v3122, 4
        %v3269 = vrot.slane %v3123, 4
        %v3270 = vsel %vm3192, %v3268, %v3269
        %v3271 = vrot.slane %v3124, 4
        %v3272 = vrot.slane %v3125, 4
        %v3273 = vsel %vm3192, %v3271, %v3272
        %v3274 = vrot.slane %v3126, 4
        %v3275 = vrot.slane %v3127, 4
        %v3276 = vsel %vm3192, %v3274, %v3275
        %v3277 = vrot.slane %v3128, 4
        %v3278 = vrot.slane %v3129, 4
        %v3279 = vsel %vm3192, %v3277, %v3278
        %v3280 = vrot.slane %v3130, 4
        %v3281 = vrot.slane %v3131, 4
        %v3282 = vsel %vm3192, %v3280, %v3281
        %v3313 = vadd.f32 %v3042, %v3195
        %v3314 = vadd.f32 %v3043, %v3198
        %v3315 = vadd.f32 %v3044, %v3201
        %v3316 = vadd.f32 %v3045, %v3204
        %v3317 = vadd.f32 %v3046, %v3207
        %v3318 = vadd.f32 %v3047, %v3210
        %v3319 = vadd.f32 %v3048, %v3213
        %v3320 = vadd.f32 %v3049, %v3216
        %v3321 = vadd.f32 %v3050, %v3219
        %v3322 = vadd.f32 %v3051, %v3222
        %v3323 = vadd.f32 %v3052, %v3225
        %v3324 = vadd.f32 %v3053, %v3228
        %v3325 = vadd.f32 %v3054, %v3231
        %v3326 = vadd.f32 %v3055, %v3234
        %v3327 = vadd.f32 %v3056, %v3237
        %v3328 = vadd.f32 %v3057, %v3240
        %v3329 = vadd.f32 %v3058, %v3243
        %v3330 = vadd.f32 %v3059, %v3246
        %v3331 = vadd.f32 %v3060, %v3249
        %v3332 = vadd.f32 %v3061, %v3252
        %v3333 = vadd.f32 %v3062, %v3255
        %v3334 = vadd.f32 %v3063, %v3258
        %v3335 = vadd.f32 %v3064, %v3261
        %v3336 = vadd.f32 %v3065, %v3264
        %v3337 = vadd.f32 %v3066, %v3267
        %v3338 = vadd.f32 %v3067, %v3270
        %v3339 = vadd.f32 %v3068, %v3273
        %v3340 = vadd.f32 %v3069, %v3276
        %v3341 = vadd.f32 %v3070, %v3279
        %v3342 = vadd.f32 %v3071, %v3282
        %v3343 = vmul.f32 %v2411, 0.21768747
        %v3344 = vmul.f32 %v2412, 0.21768747
        %v3345 = vmul.f32 %v2413, 0.21768747
        %v3346 = vmul.f32 %v2414, 0.21768747
        %v3347 = vmul.f32 %v2415, 0.21768747
        %v3348 = vmul.f32 %v2416, 0.21768747
        %v3349 = vmul.f32 %v2417, 0.21768747
        %v3350 = vmul.f32 %v2418, 0.21768747
        %v3351 = vmul.f32 %v2419, 0.21768747
        %v3352 = vmul.f32 %v2420, 0.21768747
        %v3353 = vmul.f32 %v2421, 0.21768747
        %v3354 = vmul.f32 %v2422, 0.21768747
        %v3355 = vmul.f32 %v2423, 0.21768747
        %v3356 = vmul.f32 %v2424, 0.21768747
        %v3357 = vmul.f32 %v2425, 0.21768747
        %v3358 = vmul.f32 %v2426, 0.21768747
        %v3359 = vmul.f32 %v2427, 0.21768747
        %v3360 = vmul.f32 %v2428, 0.21768747
        %v3361 = vmul.f32 %v2429, 0.21768747
        %v3362 = vmul.f32 %v2430, 0.21768747
        %v3363 = vmul.f32 %v2431, 0.21768747
        %v3364 = vmul.f32 %v2432, 0.21768747
        %v3365 = vmul.f32 %v2433, 0.21768747
        %v3366 = vmul.f32 %v2434, 0.21768747
        %v3367 = vmul.f32 %v2435, 0.21768747
        %v3368 = vmul.f32 %v2436, 0.21768747
        %v3369 = vmul.f32 %v2437, 0.21768747
        %v3370 = vmul.f32 %v2438, 0.21768747
        %v3371 = vmul.f32 %v2439, 0.21768747
        %v3372 = vmul.f32 %v2440, 0.21768747
        %v3373 = vmul.f32 %v2441, 0.21768747
        %v3374 = vmul.f32 %v2442, 0.21768747
        %v3375 = vmul.f32 %v2443, 0.21768747
        %v3376 = vmul.f32 %v2444, 0.21768747
        %v3377 = vmul.f32 %v2445, 0.21768747
        %v3378 = vmul.f32 %v2446, 0.21768747
        %v3379 = vmul.f32 %v2447, 0.21768747
        %v3380 = vmul.f32 %v2448, 0.21768747
        %v3381 = vmul.f32 %v2449, 0.21768747
        %v3382 = vmul.f32 %v2450, 0.21768747
        %v3383 = vmul.f32 %v2451, 0.21768747
        %v3384 = vmul.f32 %v2452, 0.21768747
        %v3385 = vmul.f32 %v2453, 0.21768747
        %v3386 = vmul.f32 %v2454, 0.21768747
        %v3387 = vmul.f32 %v2455, 0.21768747
        %v3388 = vmul.f32 %v2456, 0.21768747
        %v3389 = vmul.f32 %v2457, 0.21768747
        %v3390 = vmul.f32 %v2458, 0.21768747
        %v3391 = vmul.f32 %v2459, 0.21768747
        %v3392 = vmul.f32 %v2460, 0.21768747
        %v3393 = vmul.f32 %v2461, 0.21768747
        %v3394 = vmul.f32 %v2462, 0.21768747
        %v3395 = vmul.f32 %v2463, 0.21768747
        %v3396 = vmul.f32 %v2464, 0.21768747
        %v3397 = vmul.f32 %v2465, 0.21768747
        %v3398 = vmul.f32 %v2466, 0.21768747
        %v3399 = vmul.f32 %v2467, 0.21768747
        %v3400 = vmul.f32 %v2468, 0.21768747
        %v3401 = vmul.f32 %v2469, 0.21768747
        %v3402 = vmul.f32 %v2470, 0.21768747
        %vm3463 = vcmask 1042432
        %v3464 = vrot.slane %v3343, 5
        %v3465 = vrot.slane %v3344, 5
        %v3466 = vsel %vm3463, %v3464, %v3465
        %v3467 = vrot.slane %v3345, 5
        %v3468 = vrot.slane %v3346, 5
        %v3469 = vsel %vm3463, %v3467, %v3468
        %v3470 = vrot.slane %v3347, 5
        %v3471 = vrot.slane %v3348, 5
        %v3472 = vsel %vm3463, %v3470, %v3471
        %v3473 = vrot.slane %v3349, 5
        %v3474 = vrot.slane %v3350, 5
        %v3475 = vsel %vm3463, %v3473, %v3474
        %v3476 = vrot.slane %v3351, 5
        %v3477 = vrot.slane %v3352, 5
        %v3478 = vsel %vm3463, %v3476, %v3477
        %v3479 = vrot.slane %v3353, 5
        %v3480 = vrot.slane %v3354, 5
        %v3481 = vsel %vm3463, %v3479, %v3480
        %v3482 = vrot.slane %v3355, 5
        %v3483 = vrot.slane %v3356, 5
        %v3484 = vsel %vm3463, %v3482, %v3483
        %v3485 = vrot.slane %v3357, 5
        %v3486 = vrot.slane %v3358, 5
        %v3487 = vsel %vm3463, %v3485, %v3486
        %v3488 = vrot.slane %v3359, 5
        %v3489 = vrot.slane %v3360, 5
        %v3490 = vsel %vm3463, %v3488, %v3489
        %v3491 = vrot.slane %v3361, 5
        %v3492 = vrot.slane %v3362, 5
        %v3493 = vsel %vm3463, %v3491, %v3492
        %v3494 = vrot.slane %v3363, 5
        %v3495 = vrot.slane %v3364, 5
        %v3496 = vsel %vm3463, %v3494, %v3495
        %v3497 = vrot.slane %v3365, 5
        %v3498 = vrot.slane %v3366, 5
        %v3499 = vsel %vm3463, %v3497, %v3498
        %v3500 = vrot.slane %v3367, 5
        %v3501 = vrot.slane %v3368, 5
        %v3502 = vsel %vm3463, %v3500, %v3501
        %v3503 = vrot.slane %v3369, 5
        %v3504 = vrot.slane %v3370, 5
        %v3505 = vsel %vm3463, %v3503, %v3504
        %v3506 = vrot.slane %v3371, 5
        %v3507 = vrot.slane %v3372, 5
        %v3508 = vsel %vm3463, %v3506, %v3507
        %v3509 = vrot.slane %v3373, 5
        %v3510 = vrot.slane %v3374, 5
        %v3511 = vsel %vm3463, %v3509, %v3510
        %v3512 = vrot.slane %v3375, 5
        %v3513 = vrot.slane %v3376, 5
        %v3514 = vsel %vm3463, %v3512, %v3513
        %v3515 = vrot.slane %v3377, 5
        %v3516 = vrot.slane %v3378, 5
        %v3517 = vsel %vm3463, %v3515, %v3516
        %v3518 = vrot.slane %v3379, 5
        %v3519 = vrot.slane %v3380, 5
        %v3520 = vsel %vm3463, %v3518, %v3519
        %v3521 = vrot.slane %v3381, 5
        %v3522 = vrot.slane %v3382, 5
        %v3523 = vsel %vm3463, %v3521, %v3522
        %v3524 = vrot.slane %v3383, 5
        %v3525 = vrot.slane %v3384, 5
        %v3526 = vsel %vm3463, %v3524, %v3525
        %v3527 = vrot.slane %v3385, 5
        %v3528 = vrot.slane %v3386, 5
        %v3529 = vsel %vm3463, %v3527, %v3528
        %v3530 = vrot.slane %v3387, 5
        %v3531 = vrot.slane %v3388, 5
        %v3532 = vsel %vm3463, %v3530, %v3531
        %v3533 = vrot.slane %v3389, 5
        %v3534 = vrot.slane %v3390, 5
        %v3535 = vsel %vm3463, %v3533, %v3534
        %v3536 = vrot.slane %v3391, 5
        %v3537 = vrot.slane %v3392, 5
        %v3538 = vsel %vm3463, %v3536, %v3537
        %v3539 = vrot.slane %v3393, 5
        %v3540 = vrot.slane %v3394, 5
        %v3541 = vsel %vm3463, %v3539, %v3540
        %v3542 = vrot.slane %v3395, 5
        %v3543 = vrot.slane %v3396, 5
        %v3544 = vsel %vm3463, %v3542, %v3543
        %v3545 = vrot.slane %v3397, 5
        %v3546 = vrot.slane %v3398, 5
        %v3547 = vsel %vm3463, %v3545, %v3546
        %v3548 = vrot.slane %v3399, 5
        %v3549 = vrot.slane %v3400, 5
        %v3550 = vsel %vm3463, %v3548, %v3549
        %v3551 = vrot.slane %v3401, 5
        %v3552 = vrot.slane %v3402, 5
        %v3553 = vsel %vm3463, %v3551, %v3552
        %v3584 = vadd.f32 %v3313, %v3466
        %v3585 = vadd.f32 %v3314, %v3469
        %v3586 = vadd.f32 %v3315, %v3472
        %v3587 = vadd.f32 %v3316, %v3475
        %v3588 = vadd.f32 %v3317, %v3478
        %v3589 = vadd.f32 %v3318, %v3481
        %v3590 = vadd.f32 %v3319, %v3484
        %v3591 = vadd.f32 %v3320, %v3487
        %v3592 = vadd.f32 %v3321, %v3490
        %v3593 = vadd.f32 %v3322, %v3493
        %v3594 = vadd.f32 %v3323, %v3496
        %v3595 = vadd.f32 %v3324, %v3499
        %v3596 = vadd.f32 %v3325, %v3502
        %v3597 = vadd.f32 %v3326, %v3505
        %v3598 = vadd.f32 %v3327, %v3508
        %v3599 = vadd.f32 %v3328, %v3511
        %v3600 = vadd.f32 %v3329, %v3514
        %v3601 = vadd.f32 %v3330, %v3517
        %v3602 = vadd.f32 %v3331, %v3520
        %v3603 = vadd.f32 %v3332, %v3523
        %v3604 = vadd.f32 %v3333, %v3526
        %v3605 = vadd.f32 %v3334, %v3529
        %v3606 = vadd.f32 %v3335, %v3532
        %v3607 = vadd.f32 %v3336, %v3535
        %v3608 = vadd.f32 %v3337, %v3538
        %v3609 = vadd.f32 %v3338, %v3541
        %v3610 = vadd.f32 %v3339, %v3544
        %v3611 = vadd.f32 %v3340, %v3547
        %v3612 = vadd.f32 %v3341, %v3550
        %v3613 = vadd.f32 %v3342, %v3553
        %vm3614 = vcmask 1041408
        %v3615 = vrot.slane %v3072, 6
        %v3616 = vrot.slane %v3073, 6
        %v3617 = vsel %vm3614, %v3615, %v3616
        %v3618 = vrot.slane %v3074, 6
        %v3619 = vrot.slane %v3075, 6
        %v3620 = vsel %vm3614, %v3618, %v3619
        %v3621 = vrot.slane %v3076, 6
        %v3622 = vrot.slane %v3077, 6
        %v3623 = vsel %vm3614, %v3621, %v3622
        %v3624 = vrot.slane %v3078, 6
        %v3625 = vrot.slane %v3079, 6
        %v3626 = vsel %vm3614, %v3624, %v3625
        %v3627 = vrot.slane %v3080, 6
        %v3628 = vrot.slane %v3081, 6
        %v3629 = vsel %vm3614, %v3627, %v3628
        %v3630 = vrot.slane %v3082, 6
        %v3631 = vrot.slane %v3083, 6
        %v3632 = vsel %vm3614, %v3630, %v3631
        %v3633 = vrot.slane %v3084, 6
        %v3634 = vrot.slane %v3085, 6
        %v3635 = vsel %vm3614, %v3633, %v3634
        %v3636 = vrot.slane %v3086, 6
        %v3637 = vrot.slane %v3087, 6
        %v3638 = vsel %vm3614, %v3636, %v3637
        %v3639 = vrot.slane %v3088, 6
        %v3640 = vrot.slane %v3089, 6
        %v3641 = vsel %vm3614, %v3639, %v3640
        %v3642 = vrot.slane %v3090, 6
        %v3643 = vrot.slane %v3091, 6
        %v3644 = vsel %vm3614, %v3642, %v3643
        %v3645 = vrot.slane %v3092, 6
        %v3646 = vrot.slane %v3093, 6
        %v3647 = vsel %vm3614, %v3645, %v3646
        %v3648 = vrot.slane %v3094, 6
        %v3649 = vrot.slane %v3095, 6
        %v3650 = vsel %vm3614, %v3648, %v3649
        %v3651 = vrot.slane %v3096, 6
        %v3652 = vrot.slane %v3097, 6
        %v3653 = vsel %vm3614, %v3651, %v3652
        %v3654 = vrot.slane %v3098, 6
        %v3655 = vrot.slane %v3099, 6
        %v3656 = vsel %vm3614, %v3654, %v3655
        %v3657 = vrot.slane %v3100, 6
        %v3658 = vrot.slane %v3101, 6
        %v3659 = vsel %vm3614, %v3657, %v3658
        %v3660 = vrot.slane %v3102, 6
        %v3661 = vrot.slane %v3103, 6
        %v3662 = vsel %vm3614, %v3660, %v3661
        %v3663 = vrot.slane %v3104, 6
        %v3664 = vrot.slane %v3105, 6
        %v3665 = vsel %vm3614, %v3663, %v3664
        %v3666 = vrot.slane %v3106, 6
        %v3667 = vrot.slane %v3107, 6
        %v3668 = vsel %vm3614, %v3666, %v3667
        %v3669 = vrot.slane %v3108, 6
        %v3670 = vrot.slane %v3109, 6
        %v3671 = vsel %vm3614, %v3669, %v3670
        %v3672 = vrot.slane %v3110, 6
        %v3673 = vrot.slane %v3111, 6
        %v3674 = vsel %vm3614, %v3672, %v3673
        %v3675 = vrot.slane %v3112, 6
        %v3676 = vrot.slane %v3113, 6
        %v3677 = vsel %vm3614, %v3675, %v3676
        %v3678 = vrot.slane %v3114, 6
        %v3679 = vrot.slane %v3115, 6
        %v3680 = vsel %vm3614, %v3678, %v3679
        %v3681 = vrot.slane %v3116, 6
        %v3682 = vrot.slane %v3117, 6
        %v3683 = vsel %vm3614, %v3681, %v3682
        %v3684 = vrot.slane %v3118, 6
        %v3685 = vrot.slane %v3119, 6
        %v3686 = vsel %vm3614, %v3684, %v3685
        %v3687 = vrot.slane %v3120, 6
        %v3688 = vrot.slane %v3121, 6
        %v3689 = vsel %vm3614, %v3687, %v3688
        %v3690 = vrot.slane %v3122, 6
        %v3691 = vrot.slane %v3123, 6
        %v3692 = vsel %vm3614, %v3690, %v3691
        %v3693 = vrot.slane %v3124, 6
        %v3694 = vrot.slane %v3125, 6
        %v3695 = vsel %vm3614, %v3693, %v3694
        %v3696 = vrot.slane %v3126, 6
        %v3697 = vrot.slane %v3127, 6
        %v3698 = vsel %vm3614, %v3696, %v3697
        %v3699 = vrot.slane %v3128, 6
        %v3700 = vrot.slane %v3129, 6
        %v3701 = vsel %vm3614, %v3699, %v3700
        %v3702 = vrot.slane %v3130, 6
        %v3703 = vrot.slane %v3131, 6
        %v3704 = vsel %vm3614, %v3702, %v3703
        %v3735 = vadd.f32 %v3584, %v3617
        %v3736 = vadd.f32 %v3585, %v3620
        %v3737 = vadd.f32 %v3586, %v3623
        %v3738 = vadd.f32 %v3587, %v3626
        %v3739 = vadd.f32 %v3588, %v3629
        %v3740 = vadd.f32 %v3589, %v3632
        %v3741 = vadd.f32 %v3590, %v3635
        %v3742 = vadd.f32 %v3591, %v3638
        %v3743 = vadd.f32 %v3592, %v3641
        %v3744 = vadd.f32 %v3593, %v3644
        %v3745 = vadd.f32 %v3594, %v3647
        %v3746 = vadd.f32 %v3595, %v3650
        %v3747 = vadd.f32 %v3596, %v3653
        %v3748 = vadd.f32 %v3597, %v3656
        %v3749 = vadd.f32 %v3598, %v3659
        %v3750 = vadd.f32 %v3599, %v3662
        %v3751 = vadd.f32 %v3600, %v3665
        %v3752 = vadd.f32 %v3601, %v3668
        %v3753 = vadd.f32 %v3602, %v3671
        %v3754 = vadd.f32 %v3603, %v3674
        %v3755 = vadd.f32 %v3604, %v3677
        %v3756 = vadd.f32 %v3605, %v3680
        %v3757 = vadd.f32 %v3606, %v3683
        %v3758 = vadd.f32 %v3607, %v3686
        %v3759 = vadd.f32 %v3608, %v3689
        %v3760 = vadd.f32 %v3609, %v3692
        %v3761 = vadd.f32 %v3610, %v3695
        %v3762 = vadd.f32 %v3611, %v3698
        %v3763 = vadd.f32 %v3612, %v3701
        %v3764 = vadd.f32 %v3613, %v3704
        %v3765 = vrot.slane %v2801, 7
        %v3766 = vrot.slane %v2802, 7
        %v3767 = vsel %vm500, %v3765, %v3766
        %v3768 = vrot.slane %v2803, 7
        %v3769 = vrot.slane %v2804, 7
        %v3770 = vsel %vm500, %v3768, %v3769
        %v3771 = vrot.slane %v2805, 7
        %v3772 = vrot.slane %v2806, 7
        %v3773 = vsel %vm500, %v3771, %v3772
        %v3774 = vrot.slane %v2807, 7
        %v3775 = vrot.slane %v2808, 7
        %v3776 = vsel %vm500, %v3774, %v3775
        %v3777 = vrot.slane %v2809, 7
        %v3778 = vrot.slane %v2810, 7
        %v3779 = vsel %vm500, %v3777, %v3778
        %v3780 = vrot.slane %v2811, 7
        %v3781 = vrot.slane %v2812, 7
        %v3782 = vsel %vm500, %v3780, %v3781
        %v3783 = vrot.slane %v2813, 7
        %v3784 = vrot.slane %v2814, 7
        %v3785 = vsel %vm500, %v3783, %v3784
        %v3786 = vrot.slane %v2815, 7
        %v3787 = vrot.slane %v2816, 7
        %v3788 = vsel %vm500, %v3786, %v3787
        %v3789 = vrot.slane %v2817, 7
        %v3790 = vrot.slane %v2818, 7
        %v3791 = vsel %vm500, %v3789, %v3790
        %v3792 = vrot.slane %v2819, 7
        %v3793 = vrot.slane %v2820, 7
        %v3794 = vsel %vm500, %v3792, %v3793
        %v3795 = vrot.slane %v2821, 7
        %v3796 = vrot.slane %v2822, 7
        %v3797 = vsel %vm500, %v3795, %v3796
        %v3798 = vrot.slane %v2823, 7
        %v3799 = vrot.slane %v2824, 7
        %v3800 = vsel %vm500, %v3798, %v3799
        %v3801 = vrot.slane %v2825, 7
        %v3802 = vrot.slane %v2826, 7
        %v3803 = vsel %vm500, %v3801, %v3802
        %v3804 = vrot.slane %v2827, 7
        %v3805 = vrot.slane %v2828, 7
        %v3806 = vsel %vm500, %v3804, %v3805
        %v3807 = vrot.slane %v2829, 7
        %v3808 = vrot.slane %v2830, 7
        %v3809 = vsel %vm500, %v3807, %v3808
        %v3810 = vrot.slane %v2831, 7
        %v3811 = vrot.slane %v2832, 7
        %v3812 = vsel %vm500, %v3810, %v3811
        %v3813 = vrot.slane %v2833, 7
        %v3814 = vrot.slane %v2834, 7
        %v3815 = vsel %vm500, %v3813, %v3814
        %v3816 = vrot.slane %v2835, 7
        %v3817 = vrot.slane %v2836, 7
        %v3818 = vsel %vm500, %v3816, %v3817
        %v3819 = vrot.slane %v2837, 7
        %v3820 = vrot.slane %v2838, 7
        %v3821 = vsel %vm500, %v3819, %v3820
        %v3822 = vrot.slane %v2839, 7
        %v3823 = vrot.slane %v2840, 7
        %v3824 = vsel %vm500, %v3822, %v3823
        %v3825 = vrot.slane %v2841, 7
        %v3826 = vrot.slane %v2842, 7
        %v3827 = vsel %vm500, %v3825, %v3826
        %v3828 = vrot.slane %v2843, 7
        %v3829 = vrot.slane %v2844, 7
        %v3830 = vsel %vm500, %v3828, %v3829
        %v3831 = vrot.slane %v2845, 7
        %v3832 = vrot.slane %v2846, 7
        %v3833 = vsel %vm500, %v3831, %v3832
        %v3834 = vrot.slane %v2847, 7
        %v3835 = vrot.slane %v2848, 7
        %v3836 = vsel %vm500, %v3834, %v3835
        %v3837 = vrot.slane %v2849, 7
        %v3838 = vrot.slane %v2850, 7
        %v3839 = vsel %vm500, %v3837, %v3838
        %v3840 = vrot.slane %v2851, 7
        %v3841 = vrot.slane %v2852, 7
        %v3842 = vsel %vm500, %v3840, %v3841
        %v3843 = vrot.slane %v2853, 7
        %v3844 = vrot.slane %v2854, 7
        %v3845 = vsel %vm500, %v3843, %v3844
        %v3846 = vrot.slane %v2855, 7
        %v3847 = vrot.slane %v2856, 7
        %v3848 = vsel %vm500, %v3846, %v3847
        %v3849 = vrot.slane %v2857, 7
        %v3850 = vrot.slane %v2858, 7
        %v3851 = vsel %vm500, %v3849, %v3850
        %v3852 = vrot.slane %v2859, 7
        %v3853 = vrot.slane %v2860, 7
        %v3854 = vsel %vm500, %v3852, %v3853
        %v3885 = vadd.f32 %v3735, %v3767
        %v3886 = vadd.f32 %v3736, %v3770
        %v3887 = vadd.f32 %v3737, %v3773
        %v3888 = vadd.f32 %v3738, %v3776
        %v3889 = vadd.f32 %v3739, %v3779
        %v3890 = vadd.f32 %v3740, %v3782
        %v3891 = vadd.f32 %v3741, %v3785
        %v3892 = vadd.f32 %v3742, %v3788
        %v3893 = vadd.f32 %v3743, %v3791
        %v3894 = vadd.f32 %v3744, %v3794
        %v3895 = vadd.f32 %v3745, %v3797
        %v3896 = vadd.f32 %v3746, %v3800
        %v3897 = vadd.f32 %v3747, %v3803
        %v3898 = vadd.f32 %v3748, %v3806
        %v3899 = vadd.f32 %v3749, %v3809
        %v3900 = vadd.f32 %v3750, %v3812
        %v3901 = vadd.f32 %v3751, %v3815
        %v3902 = vadd.f32 %v3752, %v3818
        %v3903 = vadd.f32 %v3753, %v3821
        %v3904 = vadd.f32 %v3754, %v3824
        %v3905 = vadd.f32 %v3755, %v3827
        %v3906 = vadd.f32 %v3756, %v3830
        %v3907 = vadd.f32 %v3757, %v3833
        %v3908 = vadd.f32 %v3758, %v3836
        %v3909 = vadd.f32 %v3759, %v3839
        %v3910 = vadd.f32 %v3760, %v3842
        %v3911 = vadd.f32 %v3761, %v3845
        %v3912 = vadd.f32 %v3762, %v3848
        %v3913 = vadd.f32 %v3763, %v3851
        %v3914 = vadd.f32 %v3764, %v3854
        %v3915 = vmul.f32 %v2412, 0.057381798
        %v3916 = vmul.f32 %v2414, 0.057381798
        %v3917 = vmul.f32 %v2416, 0.057381798
        %v3918 = vmul.f32 %v2418, 0.057381798
        %v3919 = vmul.f32 %v2420, 0.057381798
        %v3920 = vmul.f32 %v2422, 0.057381798
        %v3921 = vmul.f32 %v2424, 0.057381798
        %v3922 = vmul.f32 %v2426, 0.057381798
        %v3923 = vmul.f32 %v2428, 0.057381798
        %v3924 = vmul.f32 %v2430, 0.057381798
        %v3925 = vmul.f32 %v2432, 0.057381798
        %v3926 = vmul.f32 %v2434, 0.057381798
        %v3927 = vmul.f32 %v2436, 0.057381798
        %v3928 = vmul.f32 %v2438, 0.057381798
        %v3929 = vmul.f32 %v2440, 0.057381798
        %v3930 = vmul.f32 %v2442, 0.057381798
        %v3931 = vmul.f32 %v2444, 0.057381798
        %v3932 = vmul.f32 %v2446, 0.057381798
        %v3933 = vmul.f32 %v2448, 0.057381798
        %v3934 = vmul.f32 %v2450, 0.057381798
        %v3935 = vmul.f32 %v2452, 0.057381798
        %v3936 = vmul.f32 %v2454, 0.057381798
        %v3937 = vmul.f32 %v2456, 0.057381798
        %v3938 = vmul.f32 %v2458, 0.057381798
        %v3939 = vmul.f32 %v2460, 0.057381798
        %v3940 = vmul.f32 %v2462, 0.057381798
        %v3941 = vmul.f32 %v2464, 0.057381798
        %v3942 = vmul.f32 %v2466, 0.057381798
        %v3943 = vmul.f32 %v2468, 0.057381798
        %v3944 = vmul.f32 %v2470, 0.057381798
        %v3945 = vadd.f32 %v3885, %v3915
        %v3946 = vadd.f32 %v3886, %v3916
        %v3947 = vadd.f32 %v3887, %v3917
        %v3948 = vadd.f32 %v3888, %v3918
        %v3949 = vadd.f32 %v3889, %v3919
        %v3950 = vadd.f32 %v3890, %v3920
        %v3951 = vadd.f32 %v3891, %v3921
        %v3952 = vadd.f32 %v3892, %v3922
        %v3953 = vadd.f32 %v3893, %v3923
        %v3954 = vadd.f32 %v3894, %v3924
        %v3955 = vadd.f32 %v3895, %v3925
        %v3956 = vadd.f32 %v3896, %v3926
        %v3957 = vadd.f32 %v3897, %v3927
        %v3958 = vadd.f32 %v3898, %v3928
        %v3959 = vadd.f32 %v3899, %v3929
        %v3960 = vadd.f32 %v3900, %v3930
        %v3961 = vadd.f32 %v3901, %v3931
        %v3962 = vadd.f32 %v3902, %v3932
        %v3963 = vadd.f32 %v3903, %v3933
        %v3964 = vadd.f32 %v3904, %v3934
        %v3965 = vadd.f32 %v3905, %v3935
        %v3966 = vadd.f32 %v3906, %v3936
        %v3967 = vadd.f32 %v3907, %v3937
        %v3968 = vadd.f32 %v3908, %v3938
        %v3969 = vadd.f32 %v3909, %v3939
        %v3970 = vadd.f32 %v3910, %v3940
        %v3971 = vadd.f32 %v3911, %v3941
        %v3972 = vadd.f32 %v3912, %v3942
        %v3973 = vadd.f32 %v3913, %v3943
        %v3974 = vadd.f32 %v3914, %v3944
        %v3975 = vmul.f32 %v2412, 0.020342048
        %v3976 = vmul.f32 %v2414, 0.020342048
        %v3977 = vmul.f32 %v2416, 0.020342048
        %v3978 = vmul.f32 %v2418, 0.020342048
        %v3979 = vmul.f32 %v2420, 0.020342048
        %v3980 = vmul.f32 %v2422, 0.020342048
        %v3981 = vmul.f32 %v2424, 0.020342048
        %v3982 = vmul.f32 %v2426, 0.020342048
        %v3983 = vmul.f32 %v2428, 0.020342048
        %v3984 = vmul.f32 %v2430, 0.020342048
        %v3985 = vmul.f32 %v2432, 0.020342048
        %v3986 = vmul.f32 %v2434, 0.020342048
        %v3987 = vmul.f32 %v2436, 0.020342048
        %v3988 = vmul.f32 %v2438, 0.020342048
        %v3989 = vmul.f32 %v2440, 0.020342048
        %v3990 = vmul.f32 %v2442, 0.020342048
        %v3991 = vmul.f32 %v2444, 0.020342048
        %v3992 = vmul.f32 %v2446, 0.020342048
        %v3993 = vmul.f32 %v2448, 0.020342048
        %v3994 = vmul.f32 %v2450, 0.020342048
        %v3995 = vmul.f32 %v2452, 0.020342048
        %v3996 = vmul.f32 %v2454, 0.020342048
        %v3997 = vmul.f32 %v2456, 0.020342048
        %v3998 = vmul.f32 %v2458, 0.020342048
        %v3999 = vmul.f32 %v2460, 0.020342048
        %v4000 = vmul.f32 %v2462, 0.020342048
        %v4001 = vmul.f32 %v2464, 0.020342048
        %v4002 = vmul.f32 %v2466, 0.020342048
        %v4003 = vmul.f32 %v2468, 0.020342048
        %v4004 = vmul.f32 %v2470, 0.020342048
        %v4035 = vrot.slane %v3975, 1
        %v4036 = vrot.slane %v3976, 1
        %v4037 = vrot.slane %v3977, 1
        %v4038 = vrot.slane %v3978, 1
        %v4039 = vrot.slane %v3979, 1
        %v4040 = vrot.slane %v3980, 1
        %v4041 = vrot.slane %v3981, 1
        %v4042 = vrot.slane %v3982, 1
        %v4043 = vrot.slane %v3983, 1
        %v4044 = vrot.slane %v3984, 1
        %v4045 = vrot.slane %v3985, 1
        %v4046 = vrot.slane %v3986, 1
        %v4047 = vrot.slane %v3987, 1
        %v4048 = vrot.slane %v3988, 1
        %v4049 = vrot.slane %v3989, 1
        %v4050 = vrot.slane %v3990, 1
        %v4051 = vrot.slane %v3991, 1
        %v4052 = vrot.slane %v3992, 1
        %v4053 = vrot.slane %v3993, 1
        %v4054 = vrot.slane %v3994, 1
        %v4055 = vrot.slane %v3995, 1
        %v4056 = vrot.slane %v3996, 1
        %v4057 = vrot.slane %v3997, 1
        %v4058 = vrot.slane %v3998, 1
        %v4059 = vrot.slane %v3999, 1
        %v4060 = vrot.slane %v4000, 1
        %v4061 = vrot.slane %v4001, 1
        %v4062 = vrot.slane %v4002, 1
        %v4063 = vrot.slane %v4003, 1
        %v4064 = vrot.slane %v4004, 1
        %v4095 = vadd.f32 %v3945, %v4035
        %v4096 = vadd.f32 %v3946, %v4036
        %v4097 = vadd.f32 %v3947, %v4037
        %v4098 = vadd.f32 %v3948, %v4038
        %v4099 = vadd.f32 %v3949, %v4039
        %v4100 = vadd.f32 %v3950, %v4040
        %v4101 = vadd.f32 %v3951, %v4041
        %v4102 = vadd.f32 %v3952, %v4042
        %v4103 = vadd.f32 %v3953, %v4043
        %v4104 = vadd.f32 %v3954, %v4044
        %v4105 = vadd.f32 %v3955, %v4045
        %v4106 = vadd.f32 %v3956, %v4046
        %v4107 = vadd.f32 %v3957, %v4047
        %v4108 = vadd.f32 %v3958, %v4048
        %v4109 = vadd.f32 %v3959, %v4049
        %v4110 = vadd.f32 %v3960, %v4050
        %v4111 = vadd.f32 %v3961, %v4051
        %v4112 = vadd.f32 %v3962, %v4052
        %v4113 = vadd.f32 %v3963, %v4053
        %v4114 = vadd.f32 %v3964, %v4054
        %v4115 = vadd.f32 %v3965, %v4055
        %v4116 = vadd.f32 %v3966, %v4056
        %v4117 = vadd.f32 %v3967, %v4057
        %v4118 = vadd.f32 %v3968, %v4058
        %v4119 = vadd.f32 %v3969, %v4059
        %v4120 = vadd.f32 %v3970, %v4060
        %v4121 = vadd.f32 %v3971, %v4061
        %v4122 = vadd.f32 %v3972, %v4062
        %v4123 = vadd.f32 %v3973, %v4063
        %v4124 = vadd.f32 %v3974, %v4064
        %v4125 = vmul.f32 %v2412, 0.0053621056
        %v4126 = vmul.f32 %v2414, 0.0053621056
        %v4127 = vmul.f32 %v2416, 0.0053621056
        %v4128 = vmul.f32 %v2418, 0.0053621056
        %v4129 = vmul.f32 %v2420, 0.0053621056
        %v4130 = vmul.f32 %v2422, 0.0053621056
        %v4131 = vmul.f32 %v2424, 0.0053621056
        %v4132 = vmul.f32 %v2426, 0.0053621056
        %v4133 = vmul.f32 %v2428, 0.0053621056
        %v4134 = vmul.f32 %v2430, 0.0053621056
        %v4135 = vmul.f32 %v2432, 0.0053621056
        %v4136 = vmul.f32 %v2434, 0.0053621056
        %v4137 = vmul.f32 %v2436, 0.0053621056
        %v4138 = vmul.f32 %v2438, 0.0053621056
        %v4139 = vmul.f32 %v2440, 0.0053621056
        %v4140 = vmul.f32 %v2442, 0.0053621056
        %v4141 = vmul.f32 %v2444, 0.0053621056
        %v4142 = vmul.f32 %v2446, 0.0053621056
        %v4143 = vmul.f32 %v2448, 0.0053621056
        %v4144 = vmul.f32 %v2450, 0.0053621056
        %v4145 = vmul.f32 %v2452, 0.0053621056
        %v4146 = vmul.f32 %v2454, 0.0053621056
        %v4147 = vmul.f32 %v2456, 0.0053621056
        %v4148 = vmul.f32 %v2458, 0.0053621056
        %v4149 = vmul.f32 %v2460, 0.0053621056
        %v4150 = vmul.f32 %v2462, 0.0053621056
        %v4151 = vmul.f32 %v2464, 0.0053621056
        %v4152 = vmul.f32 %v2466, 0.0053621056
        %v4153 = vmul.f32 %v2468, 0.0053621056
        %v4154 = vmul.f32 %v2470, 0.0053621056
        %v4185 = vrot.slane %v4125, 2
        %v4186 = vrot.slane %v4126, 2
        %v4187 = vrot.slane %v4127, 2
        %v4188 = vrot.slane %v4128, 2
        %v4189 = vrot.slane %v4129, 2
        %v4190 = vrot.slane %v4130, 2
        %v4191 = vrot.slane %v4131, 2
        %v4192 = vrot.slane %v4132, 2
        %v4193 = vrot.slane %v4133, 2
        %v4194 = vrot.slane %v4134, 2
        %v4195 = vrot.slane %v4135, 2
        %v4196 = vrot.slane %v4136, 2
        %v4197 = vrot.slane %v4137, 2
        %v4198 = vrot.slane %v4138, 2
        %v4199 = vrot.slane %v4139, 2
        %v4200 = vrot.slane %v4140, 2
        %v4201 = vrot.slane %v4141, 2
        %v4202 = vrot.slane %v4142, 2
        %v4203 = vrot.slane %v4143, 2
        %v4204 = vrot.slane %v4144, 2
        %v4205 = vrot.slane %v4145, 2
        %v4206 = vrot.slane %v4146, 2
        %v4207 = vrot.slane %v4147, 2
        %v4208 = vrot.slane %v4148, 2
        %v4209 = vrot.slane %v4149, 2
        %v4210 = vrot.slane %v4150, 2
        %v4211 = vrot.slane %v4151, 2
        %v4212 = vrot.slane %v4152, 2
        %v4213 = vrot.slane %v4153, 2
        %v4214 = vrot.slane %v4154, 2
        %v4245 = vadd.f32 %v4095, %v4185
        %v4246 = vadd.f32 %v4096, %v4186
        %v4247 = vadd.f32 %v4097, %v4187
        %v4248 = vadd.f32 %v4098, %v4188
        %v4249 = vadd.f32 %v4099, %v4189
        %v4250 = vadd.f32 %v4100, %v4190
        %v4251 = vadd.f32 %v4101, %v4191
        %v4252 = vadd.f32 %v4102, %v4192
        %v4253 = vadd.f32 %v4103, %v4193
        %v4254 = vadd.f32 %v4104, %v4194
        %v4255 = vadd.f32 %v4105, %v4195
        %v4256 = vadd.f32 %v4106, %v4196
        %v4257 = vadd.f32 %v4107, %v4197
        %v4258 = vadd.f32 %v4108, %v4198
        %v4259 = vadd.f32 %v4109, %v4199
        %v4260 = vadd.f32 %v4110, %v4200
        %v4261 = vadd.f32 %v4111, %v4201
        %v4262 = vadd.f32 %v4112, %v4202
        %v4263 = vadd.f32 %v4113, %v4203
        %v4264 = vadd.f32 %v4114, %v4204
        %v4265 = vadd.f32 %v4115, %v4205
        %v4266 = vadd.f32 %v4116, %v4206
        %v4267 = vadd.f32 %v4117, %v4207
        %v4268 = vadd.f32 %v4118, %v4208
        %v4269 = vadd.f32 %v4119, %v4209
        %v4270 = vadd.f32 %v4120, %v4210
        %v4271 = vadd.f32 %v4121, %v4211
        %v4272 = vadd.f32 %v4122, %v4212
        %v4273 = vadd.f32 %v4123, %v4213
        %v4274 = vadd.f32 %v4124, %v4214
        %v4275 = vmul.f32 %v4245, 0.0053621056
        %v4276 = vmul.f32 %v4246, 0.0053621056
        %v4277 = vmul.f32 %v4247, 0.0053621056
        %v4278 = vmul.f32 %v4248, 0.0053621056
        %v4279 = vmul.f32 %v4249, 0.0053621056
        %v4280 = vmul.f32 %v4250, 0.0053621056
        %v4281 = vmul.f32 %v4251, 0.0053621056
        %v4282 = vmul.f32 %v4252, 0.0053621056
        %v4283 = vmul.f32 %v4253, 0.0053621056
        %v4284 = vmul.f32 %v4254, 0.0053621056
        %v4285 = vmul.f32 %v4255, 0.0053621056
        %v4286 = vmul.f32 %v4256, 0.0053621056
        %v4287 = vmul.f32 %v4257, 0.0053621056
        %v4288 = vmul.f32 %v4258, 0.0053621056
        %v4289 = vmul.f32 %v4259, 0.0053621056
        %v4290 = vmul.f32 %v4260, 0.0053621056
        %v4291 = vmul.f32 %v4261, 0.0053621056
        %v4292 = vmul.f32 %v4262, 0.0053621056
        %v4293 = vmul.f32 %v4263, 0.0053621056
        %v4294 = vmul.f32 %v4264, 0.0053621056
        %v4295 = vmul.f32 %v4265, 0.0053621056
        %v4296 = vmul.f32 %v4266, 0.0053621056
        %v4297 = vmul.f32 %v4267, 0.0053621056
        %v4298 = vmul.f32 %v4268, 0.0053621056
        %v4299 = vmul.f32 %v4269, 0.0053621056
        %v4300 = vmul.f32 %v4270, 0.0053621056
        %v4301 = vmul.f32 %v4271, 0.0053621056
        %v4302 = vmul.f32 %v4272, 0.0053621056
        %v4303 = vmul.f32 %v4273, 0.0053621056
        %v4304 = vmul.f32 %v4274, 0.0053621056
        %v4305 = vmul.f32 %v4245, 0.020342048
        %v4306 = vmul.f32 %v4246, 0.020342048
        %v4307 = vmul.f32 %v4247, 0.020342048
        %v4308 = vmul.f32 %v4248, 0.020342048
        %v4309 = vmul.f32 %v4249, 0.020342048
        %v4310 = vmul.f32 %v4250, 0.020342048
        %v4311 = vmul.f32 %v4251, 0.020342048
        %v4312 = vmul.f32 %v4252, 0.020342048
        %v4313 = vmul.f32 %v4253, 0.020342048
        %v4314 = vmul.f32 %v4254, 0.020342048
        %v4315 = vmul.f32 %v4255, 0.020342048
        %v4316 = vmul.f32 %v4256, 0.020342048
        %v4317 = vmul.f32 %v4257, 0.020342048
        %v4318 = vmul.f32 %v4258, 0.020342048
        %v4319 = vmul.f32 %v4259, 0.020342048
        %v4320 = vmul.f32 %v4260, 0.020342048
        %v4321 = vmul.f32 %v4261, 0.020342048
        %v4322 = vmul.f32 %v4262, 0.020342048
        %v4323 = vmul.f32 %v4263, 0.020342048
        %v4324 = vmul.f32 %v4264, 0.020342048
        %v4325 = vmul.f32 %v4265, 0.020342048
        %v4326 = vmul.f32 %v4266, 0.020342048
        %v4327 = vmul.f32 %v4267, 0.020342048
        %v4328 = vmul.f32 %v4268, 0.020342048
        %v4329 = vmul.f32 %v4269, 0.020342048
        %v4330 = vmul.f32 %v4270, 0.020342048
        %v4331 = vmul.f32 %v4271, 0.020342048
        %v4332 = vmul.f32 %v4272, 0.020342048
        %v4333 = vmul.f32 %v4273, 0.020342048
        %v4334 = vmul.f32 %v4274, 0.020342048
        %4365 = vrot.lane.b32.xlu0 %v4305, 127
        %v4366 = vpop.permute.xlu0 %4365
        %4367 = vrot.lane.b32.xlu0 %v4306, 127
        %v4368 = vpop.permute.xlu0 %4367
        %4369 = vrot.lane.b32.xlu0 %v4307, 127
        %v4370 = vpop.permute.xlu0 %4369
        %4371 = vrot.lane.b32.xlu0 %v4308, 127
        %v4372 = vpop.permute.xlu0 %4371
        %4373 = vrot.lane.b32.xlu0 %v4309, 127
        %v4374 = vpop.permute.xlu0 %4373
        %4375 = vrot.lane.b32.xlu0 %v4310, 127
        %v4376 = vpop.permute.xlu0 %4375
        %4377 = vrot.lane.b32.xlu0 %v4311, 127
        %v4378 = vpop.permute.xlu0 %4377
        %4379 = vrot.lane.b32.xlu0 %v4312, 127
        %v4380 = vpop.permute.xlu0 %4379
        %4381 = vrot.lane.b32.xlu0 %v4313, 127
        %v4382 = vpop.permute.xlu0 %4381
        %4383 = vrot.lane.b32.xlu0 %v4314, 127
        %v4384 = vpop.permute.xlu0 %4383
        %4385 = vrot.lane.b32.xlu0 %v4315, 127
        %v4386 = vpop.permute.xlu0 %4385
        %4387 = vrot.lane.b32.xlu0 %v4316, 127
        %v4388 = vpop.permute.xlu0 %4387
        %4389 = vrot.lane.b32.xlu0 %v4317, 127
        %v4390 = vpop.permute.xlu0 %4389
        %4391 = vrot.lane.b32.xlu0 %v4318, 127
        %v4392 = vpop.permute.xlu0 %4391
        %4393 = vrot.lane.b32.xlu0 %v4319, 127
        %v4394 = vpop.permute.xlu0 %4393
        %4395 = vrot.lane.b32.xlu0 %v4320, 127
        %v4396 = vpop.permute.xlu0 %4395
        %4397 = vrot.lane.b32.xlu0 %v4321, 127
        %v4398 = vpop.permute.xlu0 %4397
        %4399 = vrot.lane.b32.xlu0 %v4322, 127
        %v4400 = vpop.permute.xlu0 %4399
        %4401 = vrot.lane.b32.xlu0 %v4323, 127
        %v4402 = vpop.permute.xlu0 %4401
        %4403 = vrot.lane.b32.xlu0 %v4324, 127
        %v4404 = vpop.permute.xlu0 %4403
        %4405 = vrot.lane.b32.xlu0 %v4325, 127
        %v4406 = vpop.permute.xlu0 %4405
        %4407 = vrot.lane.b32.xlu0 %v4326, 127
        %v4408 = vpop.permute.xlu0 %4407
        %4409 = vrot.lane.b32.xlu0 %v4327, 127
        %v4410 = vpop.permute.xlu0 %4409
        %4411 = vrot.lane.b32.xlu0 %v4328, 127
        %v4412 = vpop.permute.xlu0 %4411
        %4413 = vrot.lane.b32.xlu0 %v4329, 127
        %v4414 = vpop.permute.xlu0 %4413
        %4415 = vrot.lane.b32.xlu0 %v4330, 127
        %v4416 = vpop.permute.xlu0 %4415
        %4417 = vrot.lane.b32.xlu0 %v4331, 127
        %v4418 = vpop.permute.xlu0 %4417
        %4419 = vrot.lane.b32.xlu0 %v4332, 127
        %v4420 = vpop.permute.xlu0 %4419
        %4421 = vrot.lane.b32.xlu0 %v4333, 127
        %v4422 = vpop.permute.xlu0 %4421
        %4423 = vrot.lane.b32.xlu0 %v4334, 127
        %v4424 = vpop.permute.xlu0 %4423
        %v4455 = vadd.f32 %v4275, %v4366
        %v4456 = vadd.f32 %v4276, %v4368
        %v4457 = vadd.f32 %v4277, %v4370
        %v4458 = vadd.f32 %v4278, %v4372
        %v4459 = vadd.f32 %v4279, %v4374
        %v4460 = vadd.f32 %v4280, %v4376
        %v4461 = vadd.f32 %v4281, %v4378
        %v4462 = vadd.f32 %v4282, %v4380
        %v4463 = vadd.f32 %v4283, %v4382
        %v4464 = vadd.f32 %v4284, %v4384
        %v4465 = vadd.f32 %v4285, %v4386
        %v4466 = vadd.f32 %v4286, %v4388
        %v4467 = vadd.f32 %v4287, %v4390
        %v4468 = vadd.f32 %v4288, %v4392
        %v4469 = vadd.f32 %v4289, %v4394
        %v4470 = vadd.f32 %v4290, %v4396
        %v4471 = vadd.f32 %v4291, %v4398
        %v4472 = vadd.f32 %v4292, %v4400
        %v4473 = vadd.f32 %v4293, %v4402
        %v4474 = vadd.f32 %v4294, %v4404
        %v4475 = vadd.f32 %v4295, %v4406
        %v4476 = vadd.f32 %v4296, %v4408
        %v4477 = vadd.f32 %v4297, %v4410
        %v4478 = vadd.f32 %v4298, %v4412
        %v4479 = vadd.f32 %v4299, %v4414
        %v4480 = vadd.f32 %v4300, %v4416
        %v4481 = vadd.f32 %v4301, %v4418
        %v4482 = vadd.f32 %v4302, %v4420
        %v4483 = vadd.f32 %v4303, %v4422
        %v4484 = vadd.f32 %v4304, %v4424
        %v4485 = vmul.f32 %v4245, 0.057381798
        %v4486 = vmul.f32 %v4246, 0.057381798
        %v4487 = vmul.f32 %v4247, 0.057381798
        %v4488 = vmul.f32 %v4248, 0.057381798
        %v4489 = vmul.f32 %v4249, 0.057381798
        %v4490 = vmul.f32 %v4250, 0.057381798
        %v4491 = vmul.f32 %v4251, 0.057381798
        %v4492 = vmul.f32 %v4252, 0.057381798
        %v4493 = vmul.f32 %v4253, 0.057381798
        %v4494 = vmul.f32 %v4254, 0.057381798
        %v4495 = vmul.f32 %v4255, 0.057381798
        %v4496 = vmul.f32 %v4256, 0.057381798
        %v4497 = vmul.f32 %v4257, 0.057381798
        %v4498 = vmul.f32 %v4258, 0.057381798
        %v4499 = vmul.f32 %v4259, 0.057381798
        %v4500 = vmul.f32 %v4260, 0.057381798
        %v4501 = vmul.f32 %v4261, 0.057381798
        %v4502 = vmul.f32 %v4262, 0.057381798
        %v4503 = vmul.f32 %v4263, 0.057381798
        %v4504 = vmul.f32 %v4264, 0.057381798
        %v4505 = vmul.f32 %v4265, 0.057381798
        %v4506 = vmul.f32 %v4266, 0.057381798
        %v4507 = vmul.f32 %v4267, 0.057381798
        %v4508 = vmul.f32 %v4268, 0.057381798
        %v4509 = vmul.f32 %v4269, 0.057381798
        %v4510 = vmul.f32 %v4270, 0.057381798
        %v4511 = vmul.f32 %v4271, 0.057381798
        %v4512 = vmul.f32 %v4272, 0.057381798
        %v4513 = vmul.f32 %v4273, 0.057381798
        %v4514 = vmul.f32 %v4274, 0.057381798
        %4545 = vrot.lane.b32.xlu0 %v4485, 126
        %v4546 = vpop.permute.xlu0 %4545
        %4547 = vrot.lane.b32.xlu0 %v4486, 126
        %v4548 = vpop.permute.xlu0 %4547
        %4549 = vrot.lane.b32.xlu0 %v4487, 126
        %v4550 = vpop.permute.xlu0 %4549
        %4551 = vrot.lane.b32.xlu0 %v4488, 126
        %v4552 = vpop.permute.xlu0 %4551
        %4553 = vrot.lane.b32.xlu0 %v4489, 126
        %v4554 = vpop.permute.xlu0 %4553
        %4555 = vrot.lane.b32.xlu0 %v4490, 126
        %v4556 = vpop.permute.xlu0 %4555
        %4557 = vrot.lane.b32.xlu0 %v4491, 126
        %v4558 = vpop.permute.xlu0 %4557
        %4559 = vrot.lane.b32.xlu0 %v4492, 126
        %v4560 = vpop.permute.xlu0 %4559
        %4561 = vrot.lane.b32.xlu0 %v4493, 126
        %v4562 = vpop.permute.xlu0 %4561
        %4563 = vrot.lane.b32.xlu0 %v4494, 126
        %v4564 = vpop.permute.xlu0 %4563
        %4565 = vrot.lane.b32.xlu0 %v4495, 126
        %v4566 = vpop.permute.xlu0 %4565
        %4567 = vrot.lane.b32.xlu0 %v4496, 126
        %v4568 = vpop.permute.xlu0 %4567
        %4569 = vrot.lane.b32.xlu0 %v4497, 126
        %v4570 = vpop.permute.xlu0 %4569
        %4571 = vrot.lane.b32.xlu0 %v4498, 126
        %v4572 = vpop.permute.xlu0 %4571
        %4573 = vrot.lane.b32.xlu0 %v4499, 126
        %v4574 = vpop.permute.xlu0 %4573
        %4575 = vrot.lane.b32.xlu0 %v4500, 126
        %v4576 = vpop.permute.xlu0 %4575
        %4577 = vrot.lane.b32.xlu0 %v4501, 126
        %v4578 = vpop.permute.xlu0 %4577
        %4579 = vrot.lane.b32.xlu0 %v4502, 126
        %v4580 = vpop.permute.xlu0 %4579
        %4581 = vrot.lane.b32.xlu0 %v4503, 126
        %v4582 = vpop.permute.xlu0 %4581
        %4583 = vrot.lane.b32.xlu0 %v4504, 126
        %v4584 = vpop.permute.xlu0 %4583
        %4585 = vrot.lane.b32.xlu0 %v4505, 126
        %v4586 = vpop.permute.xlu0 %4585
        %4587 = vrot.lane.b32.xlu0 %v4506, 126
        %v4588 = vpop.permute.xlu0 %4587
        %4589 = vrot.lane.b32.xlu0 %v4507, 126
        %v4590 = vpop.permute.xlu0 %4589
        %4591 = vrot.lane.b32.xlu0 %v4508, 126
        %v4592 = vpop.permute.xlu0 %4591
        %4593 = vrot.lane.b32.xlu0 %v4509, 126
        %v4594 = vpop.permute.xlu0 %4593
        %4595 = vrot.lane.b32.xlu0 %v4510, 126
        %v4596 = vpop.permute.xlu0 %4595
        %4597 = vrot.lane.b32.xlu0 %v4511, 126
        %v4598 = vpop.permute.xlu0 %4597
        %4599 = vrot.lane.b32.xlu0 %v4512, 126
        %v4600 = vpop.permute.xlu0 %4599
        %4601 = vrot.lane.b32.xlu0 %v4513, 126
        %v4602 = vpop.permute.xlu0 %4601
        %4603 = vrot.lane.b32.xlu0 %v4514, 126
        %v4604 = vpop.permute.xlu0 %4603
        %v4635 = vadd.f32 %v4455, %v4546
        %v4636 = vadd.f32 %v4456, %v4548
        %v4637 = vadd.f32 %v4457, %v4550
        %v4638 = vadd.f32 %v4458, %v4552
        %v4639 = vadd.f32 %v4459, %v4554
        %v4640 = vadd.f32 %v4460, %v4556
        %v4641 = vadd.f32 %v4461, %v4558
        %v4642 = vadd.f32 %v4462, %v4560
        %v4643 = vadd.f32 %v4463, %v4562
        %v4644 = vadd.f32 %v4464, %v4564
        %v4645 = vadd.f32 %v4465, %v4566
        %v4646 = vadd.f32 %v4466, %v4568
        %v4647 = vadd.f32 %v4467, %v4570
        %v4648 = vadd.f32 %v4468, %v4572
        %v4649 = vadd.f32 %v4469, %v4574
        %v4650 = vadd.f32 %v4470, %v4576
        %v4651 = vadd.f32 %v4471, %v4578
        %v4652 = vadd.f32 %v4472, %v4580
        %v4653 = vadd.f32 %v4473, %v4582
        %v4654 = vadd.f32 %v4474, %v4584
        %v4655 = vadd.f32 %v4475, %v4586
        %v4656 = vadd.f32 %v4476, %v4588
        %v4657 = vadd.f32 %v4477, %v4590
        %v4658 = vadd.f32 %v4478, %v4592
        %v4659 = vadd.f32 %v4479, %v4594
        %v4660 = vadd.f32 %v4480, %v4596
        %v4661 = vadd.f32 %v4481, %v4598
        %v4662 = vadd.f32 %v4482, %v4600
        %v4663 = vadd.f32 %v4483, %v4602
        %v4664 = vadd.f32 %v4484, %v4604
        %v4665 = vmul.f32 %v4245, 0.12035766
        %v4666 = vmul.f32 %v4246, 0.12035766
        %v4667 = vmul.f32 %v4247, 0.12035766
        %v4668 = vmul.f32 %v4248, 0.12035766
        %v4669 = vmul.f32 %v4249, 0.12035766
        %v4670 = vmul.f32 %v4250, 0.12035766
        %v4671 = vmul.f32 %v4251, 0.12035766
        %v4672 = vmul.f32 %v4252, 0.12035766
        %v4673 = vmul.f32 %v4253, 0.12035766
        %v4674 = vmul.f32 %v4254, 0.12035766
        %v4675 = vmul.f32 %v4255, 0.12035766
        %v4676 = vmul.f32 %v4256, 0.12035766
        %v4677 = vmul.f32 %v4257, 0.12035766
        %v4678 = vmul.f32 %v4258, 0.12035766
        %v4679 = vmul.f32 %v4259, 0.12035766
        %v4680 = vmul.f32 %v4260, 0.12035766
        %v4681 = vmul.f32 %v4261, 0.12035766
        %v4682 = vmul.f32 %v4262, 0.12035766
        %v4683 = vmul.f32 %v4263, 0.12035766
        %v4684 = vmul.f32 %v4264, 0.12035766
        %v4685 = vmul.f32 %v4265, 0.12035766
        %v4686 = vmul.f32 %v4266, 0.12035766
        %v4687 = vmul.f32 %v4267, 0.12035766
        %v4688 = vmul.f32 %v4268, 0.12035766
        %v4689 = vmul.f32 %v4269, 0.12035766
        %v4690 = vmul.f32 %v4270, 0.12035766
        %v4691 = vmul.f32 %v4271, 0.12035766
        %v4692 = vmul.f32 %v4272, 0.12035766
        %v4693 = vmul.f32 %v4273, 0.12035766
        %v4694 = vmul.f32 %v4274, 0.12035766
        %4725 = vrot.lane.b32.xlu0 %v4665, 125
        %v4726 = vpop.permute.xlu0 %4725
        %4727 = vrot.lane.b32.xlu0 %v4666, 125
        %v4728 = vpop.permute.xlu0 %4727
        %4729 = vrot.lane.b32.xlu0 %v4667, 125
        %v4730 = vpop.permute.xlu0 %4729
        %4731 = vrot.lane.b32.xlu0 %v4668, 125
        %v4732 = vpop.permute.xlu0 %4731
        %4733 = vrot.lane.b32.xlu0 %v4669, 125
        %v4734 = vpop.permute.xlu0 %4733
        %4735 = vrot.lane.b32.xlu0 %v4670, 125
        %v4736 = vpop.permute.xlu0 %4735
        %4737 = vrot.lane.b32.xlu0 %v4671, 125
        %v4738 = vpop.permute.xlu0 %4737
        %4739 = vrot.lane.b32.xlu0 %v4672, 125
        %v4740 = vpop.permute.xlu0 %4739
        %4741 = vrot.lane.b32.xlu0 %v4673, 125
        %v4742 = vpop.permute.xlu0 %4741
        %4743 = vrot.lane.b32.xlu0 %v4674, 125
        %v4744 = vpop.permute.xlu0 %4743
        %4745 = vrot.lane.b32.xlu0 %v4675, 125
        %v4746 = vpop.permute.xlu0 %4745
        %4747 = vrot.lane.b32.xlu0 %v4676, 125
        %v4748 = vpop.permute.xlu0 %4747
        %4749 = vrot.lane.b32.xlu0 %v4677, 125
        %v4750 = vpop.permute.xlu0 %4749
        %4751 = vrot.lane.b32.xlu0 %v4678, 125
        %v4752 = vpop.permute.xlu0 %4751
        %4753 = vrot.lane.b32.xlu0 %v4679, 125
        %v4754 = vpop.permute.xlu0 %4753
        %4755 = vrot.lane.b32.xlu0 %v4680, 125
        %v4756 = vpop.permute.xlu0 %4755
        %4757 = vrot.lane.b32.xlu0 %v4681, 125
        %v4758 = vpop.permute.xlu0 %4757
        %4759 = vrot.lane.b32.xlu0 %v4682, 125
        %v4760 = vpop.permute.xlu0 %4759
        %4761 = vrot.lane.b32.xlu0 %v4683, 125
        %v4762 = vpop.permute.xlu0 %4761
        %4763 = vrot.lane.b32.xlu0 %v4684, 125
        %v4764 = vpop.permute.xlu0 %4763
        %4765 = vrot.lane.b32.xlu0 %v4685, 125
        %v4766 = vpop.permute.xlu0 %4765
        %4767 = vrot.lane.b32.xlu0 %v4686, 125
        %v4768 = vpop.permute.xlu0 %4767
        %4769 = vrot.lane.b32.xlu0 %v4687, 125
        %v4770 = vpop.permute.xlu0 %4769
        %4771 = vrot.lane.b32.xlu0 %v4688, 125
        %v4772 = vpop.permute.xlu0 %4771
        %4773 = vrot.lane.b32.xlu0 %v4689, 125
        %v4774 = vpop.permute.xlu0 %4773
        %4775 = vrot.lane.b32.xlu0 %v4690, 125
        %v4776 = vpop.permute.xlu0 %4775
        %4777 = vrot.lane.b32.xlu0 %v4691, 125
        %v4778 = vpop.permute.xlu0 %4777
        %4779 = vrot.lane.b32.xlu0 %v4692, 125
        %v4780 = vpop.permute.xlu0 %4779
        %4781 = vrot.lane.b32.xlu0 %v4693, 125
        %v4782 = vpop.permute.xlu0 %4781
        %4783 = vrot.lane.b32.xlu0 %v4694, 125
        %v4784 = vpop.permute.xlu0 %4783
        %v4815 = vadd.f32 %v4635, %v4726
        %v4816 = vadd.f32 %v4636, %v4728
        %v4817 = vadd.f32 %v4637, %v4730
        %v4818 = vadd.f32 %v4638, %v4732
        %v4819 = vadd.f32 %v4639, %v4734
        %v4820 = vadd.f32 %v4640, %v4736
        %v4821 = vadd.f32 %v4641, %v4738
        %v4822 = vadd.f32 %v4642, %v4740
        %v4823 = vadd.f32 %v4643, %v4742
        %v4824 = vadd.f32 %v4644, %v4744
        %v4825 = vadd.f32 %v4645, %v4746
        %v4826 = vadd.f32 %v4646, %v4748
        %v4827 = vadd.f32 %v4647, %v4750
        %v4828 = vadd.f32 %v4648, %v4752
        %v4829 = vadd.f32 %v4649, %v4754
        %v4830 = vadd.f32 %v4650, %v4756
        %v4831 = vadd.f32 %v4651, %v4758
        %v4832 = vadd.f32 %v4652, %v4760
        %v4833 = vadd.f32 %v4653, %v4762
        %v4834 = vadd.f32 %v4654, %v4764
        %v4835 = vadd.f32 %v4655, %v4766
        %v4836 = vadd.f32 %v4656, %v4768
        %v4837 = vadd.f32 %v4657, %v4770
        %v4838 = vadd.f32 %v4658, %v4772
        %v4839 = vadd.f32 %v4659, %v4774
        %v4840 = vadd.f32 %v4660, %v4776
        %v4841 = vadd.f32 %v4661, %v4778
        %v4842 = vadd.f32 %v4662, %v4780
        %v4843 = vadd.f32 %v4663, %v4782
        %v4844 = vadd.f32 %v4664, %v4784
        %v4845 = vmul.f32 %v4245, 0.18771264
        %v4846 = vmul.f32 %v4246, 0.18771264
        %v4847 = vmul.f32 %v4247, 0.18771264
        %v4848 = vmul.f32 %v4248, 0.18771264
        %v4849 = vmul.f32 %v4249, 0.18771264
        %v4850 = vmul.f32 %v4250, 0.18771264
        %v4851 = vmul.f32 %v4251, 0.18771264
        %v4852 = vmul.f32 %v4252, 0.18771264
        %v4853 = vmul.f32 %v4253, 0.18771264
        %v4854 = vmul.f32 %v4254, 0.18771264
        %v4855 = vmul.f32 %v4255, 0.18771264
        %v4856 = vmul.f32 %v4256, 0.18771264
        %v4857 = vmul.f32 %v4257, 0.18771264
        %v4858 = vmul.f32 %v4258, 0.18771264
        %v4859 = vmul.f32 %v4259, 0.18771264
        %v4860 = vmul.f32 %v4260, 0.18771264
        %v4861 = vmul.f32 %v4261, 0.18771264
        %v4862 = vmul.f32 %v4262, 0.18771264
        %v4863 = vmul.f32 %v4263, 0.18771264
        %v4864 = vmul.f32 %v4264, 0.18771264
        %v4865 = vmul.f32 %v4265, 0.18771264
        %v4866 = vmul.f32 %v4266, 0.18771264
        %v4867 = vmul.f32 %v4267, 0.18771264
        %v4868 = vmul.f32 %v4268, 0.18771264
        %v4869 = vmul.f32 %v4269, 0.18771264
        %v4870 = vmul.f32 %v4270, 0.18771264
        %v4871 = vmul.f32 %v4271, 0.18771264
        %v4872 = vmul.f32 %v4272, 0.18771264
        %v4873 = vmul.f32 %v4273, 0.18771264
        %v4874 = vmul.f32 %v4274, 0.18771264
        %4905 = vrot.lane.b32.xlu0 %v4845, 124
        %v4906 = vpop.permute.xlu0 %4905
        %4907 = vrot.lane.b32.xlu0 %v4846, 124
        %v4908 = vpop.permute.xlu0 %4907
        %4909 = vrot.lane.b32.xlu0 %v4847, 124
        %v4910 = vpop.permute.xlu0 %4909
        %4911 = vrot.lane.b32.xlu0 %v4848, 124
        %v4912 = vpop.permute.xlu0 %4911
        %4913 = vrot.lane.b32.xlu0 %v4849, 124
        %v4914 = vpop.permute.xlu0 %4913
        %4915 = vrot.lane.b32.xlu0 %v4850, 124
        %v4916 = vpop.permute.xlu0 %4915
        %4917 = vrot.lane.b32.xlu0 %v4851, 124
        %v4918 = vpop.permute.xlu0 %4917
        %4919 = vrot.lane.b32.xlu0 %v4852, 124
        %v4920 = vpop.permute.xlu0 %4919
        %4921 = vrot.lane.b32.xlu0 %v4853, 124
        %v4922 = vpop.permute.xlu0 %4921
        %4923 = vrot.lane.b32.xlu0 %v4854, 124
        %v4924 = vpop.permute.xlu0 %4923
        %4925 = vrot.lane.b32.xlu0 %v4855, 124
        %v4926 = vpop.permute.xlu0 %4925
        %4927 = vrot.lane.b32.xlu0 %v4856, 124
        %v4928 = vpop.permute.xlu0 %4927
        %4929 = vrot.lane.b32.xlu0 %v4857, 124
        %v4930 = vpop.permute.xlu0 %4929
        %4931 = vrot.lane.b32.xlu0 %v4858, 124
        %v4932 = vpop.permute.xlu0 %4931
        %4933 = vrot.lane.b32.xlu0 %v4859, 124
        %v4934 = vpop.permute.xlu0 %4933
        %4935 = vrot.lane.b32.xlu0 %v4860, 124
        %v4936 = vpop.permute.xlu0 %4935
        %4937 = vrot.lane.b32.xlu0 %v4861, 124
        %v4938 = vpop.permute.xlu0 %4937
        %4939 = vrot.lane.b32.xlu0 %v4862, 124
        %v4940 = vpop.permute.xlu0 %4939
        %4941 = vrot.lane.b32.xlu0 %v4863, 124
        %v4942 = vpop.permute.xlu0 %4941
        %4943 = vrot.lane.b32.xlu0 %v4864, 124
        %v4944 = vpop.permute.xlu0 %4943
        %4945 = vrot.lane.b32.xlu0 %v4865, 124
        %v4946 = vpop.permute.xlu0 %4945
        %4947 = vrot.lane.b32.xlu0 %v4866, 124
        %v4948 = vpop.permute.xlu0 %4947
        %4949 = vrot.lane.b32.xlu0 %v4867, 124
        %v4950 = vpop.permute.xlu0 %4949
        %4951 = vrot.lane.b32.xlu0 %v4868, 124
        %v4952 = vpop.permute.xlu0 %4951
        %4953 = vrot.lane.b32.xlu0 %v4869, 124
        %v4954 = vpop.permute.xlu0 %4953
        %4955 = vrot.lane.b32.xlu0 %v4870, 124
        %v4956 = vpop.permute.xlu0 %4955
        %4957 = vrot.lane.b32.xlu0 %v4871, 124
        %v4958 = vpop.permute.xlu0 %4957
        %4959 = vrot.lane.b32.xlu0 %v4872, 124
        %v4960 = vpop.permute.xlu0 %4959
        %4961 = vrot.lane.b32.xlu0 %v4873, 124
        %v4962 = vpop.permute.xlu0 %4961
        %4963 = vrot.lane.b32.xlu0 %v4874, 124
        %v4964 = vpop.permute.xlu0 %4963
        %v4995 = vadd.f32 %v4815, %v4906
        %v4996 = vadd.f32 %v4816, %v4908
        %v4997 = vadd.f32 %v4817, %v4910
        %v4998 = vadd.f32 %v4818, %v4912
        %v4999 = vadd.f32 %v4819, %v4914
        %v5000 = vadd.f32 %v4820, %v4916
        %v5001 = vadd.f32 %v4821, %v4918
        %v5002 = vadd.f32 %v4822, %v4920
        %v5003 = vadd.f32 %v4823, %v4922
        %v5004 = vadd.f32 %v4824, %v4924
        %v5005 = vadd.f32 %v4825, %v4926
        %v5006 = vadd.f32 %v4826, %v4928
        %v5007 = vadd.f32 %v4827, %v4930
        %v5008 = vadd.f32 %v4828, %v4932
        %v5009 = vadd.f32 %v4829, %v4934
        %v5010 = vadd.f32 %v4830, %v4936
        %v5011 = vadd.f32 %v4831, %v4938
        %v5012 = vadd.f32 %v4832, %v4940
        %v5013 = vadd.f32 %v4833, %v4942
        %v5014 = vadd.f32 %v4834, %v4944
        %v5015 = vadd.f32 %v4835, %v4946
        %v5016 = vadd.f32 %v4836, %v4948
        %v5017 = vadd.f32 %v4837, %v4950
        %v5018 = vadd.f32 %v4838, %v4952
        %v5019 = vadd.f32 %v4839, %v4954
        %v5020 = vadd.f32 %v4840, %v4956
        %v5021 = vadd.f32 %v4841, %v4958
        %v5022 = vadd.f32 %v4842, %v4960
        %v5023 = vadd.f32 %v4843, %v4962
        %v5024 = vadd.f32 %v4844, %v4964
        %v5025 = vmul.f32 %v4245, 0.21768747
        %v5026 = vmul.f32 %v4246, 0.21768747
        %v5027 = vmul.f32 %v4247, 0.21768747
        %v5028 = vmul.f32 %v4248, 0.21768747
        %v5029 = vmul.f32 %v4249, 0.21768747
        %v5030 = vmul.f32 %v4250, 0.21768747
        %v5031 = vmul.f32 %v4251, 0.21768747
        %v5032 = vmul.f32 %v4252, 0.21768747
        %v5033 = vmul.f32 %v4253, 0.21768747
        %v5034 = vmul.f32 %v4254, 0.21768747
        %v5035 = vmul.f32 %v4255, 0.21768747
        %v5036 = vmul.f32 %v4256, 0.21768747
        %v5037 = vmul.f32 %v4257, 0.21768747
        %v5038 = vmul.f32 %v4258, 0.21768747
        %v5039 = vmul.f32 %v4259, 0.21768747
        %v5040 = vmul.f32 %v4260, 0.21768747
        %v5041 = vmul.f32 %v4261, 0.21768747
        %v5042 = vmul.f32 %v4262, 0.21768747
        %v5043 = vmul.f32 %v4263, 0.21768747
        %v5044 = vmul.f32 %v4264, 0.21768747
        %v5045 = vmul.f32 %v4265, 0.21768747
        %v5046 = vmul.f32 %v4266, 0.21768747
        %v5047 = vmul.f32 %v4267, 0.21768747
        %v5048 = vmul.f32 %v4268, 0.21768747
        %v5049 = vmul.f32 %v4269, 0.21768747
        %v5050 = vmul.f32 %v4270, 0.21768747
        %v5051 = vmul.f32 %v4271, 0.21768747
        %v5052 = vmul.f32 %v4272, 0.21768747
        %v5053 = vmul.f32 %v4273, 0.21768747
        %v5054 = vmul.f32 %v4274, 0.21768747
        %5085 = vrot.lane.b32.xlu0 %v5025, 123
        %v5086 = vpop.permute.xlu0 %5085
        %5087 = vrot.lane.b32.xlu0 %v5026, 123
        %v5088 = vpop.permute.xlu0 %5087
        %5089 = vrot.lane.b32.xlu0 %v5027, 123
        %v5090 = vpop.permute.xlu0 %5089
        %5091 = vrot.lane.b32.xlu0 %v5028, 123
        %v5092 = vpop.permute.xlu0 %5091
        %5093 = vrot.lane.b32.xlu0 %v5029, 123
        %v5094 = vpop.permute.xlu0 %5093
        %5095 = vrot.lane.b32.xlu0 %v5030, 123
        %v5096 = vpop.permute.xlu0 %5095
        %5097 = vrot.lane.b32.xlu0 %v5031, 123
        %v5098 = vpop.permute.xlu0 %5097
        %5099 = vrot.lane.b32.xlu0 %v5032, 123
        %v5100 = vpop.permute.xlu0 %5099
        %5101 = vrot.lane.b32.xlu0 %v5033, 123
        %v5102 = vpop.permute.xlu0 %5101
        %5103 = vrot.lane.b32.xlu0 %v5034, 123
        %v5104 = vpop.permute.xlu0 %5103
        %5105 = vrot.lane.b32.xlu0 %v5035, 123
        %v5106 = vpop.permute.xlu0 %5105
        %5107 = vrot.lane.b32.xlu0 %v5036, 123
        %v5108 = vpop.permute.xlu0 %5107
        %5109 = vrot.lane.b32.xlu0 %v5037, 123
        %v5110 = vpop.permute.xlu0 %5109
        %5111 = vrot.lane.b32.xlu0 %v5038, 123
        %v5112 = vpop.permute.xlu0 %5111
        %5113 = vrot.lane.b32.xlu0 %v5039, 123
        %v5114 = vpop.permute.xlu0 %5113
        %5115 = vrot.lane.b32.xlu0 %v5040, 123
        %v5116 = vpop.permute.xlu0 %5115
        %5117 = vrot.lane.b32.xlu0 %v5041, 123
        %v5118 = vpop.permute.xlu0 %5117
        %5119 = vrot.lane.b32.xlu0 %v5042, 123
        %v5120 = vpop.permute.xlu0 %5119
        %5121 = vrot.lane.b32.xlu0 %v5043, 123
        %v5122 = vpop.permute.xlu0 %5121
        %5123 = vrot.lane.b32.xlu0 %v5044, 123
        %v5124 = vpop.permute.xlu0 %5123
        %5125 = vrot.lane.b32.xlu0 %v5045, 123
        %v5126 = vpop.permute.xlu0 %5125
        %5127 = vrot.lane.b32.xlu0 %v5046, 123
        %v5128 = vpop.permute.xlu0 %5127
        %5129 = vrot.lane.b32.xlu0 %v5047, 123
        %v5130 = vpop.permute.xlu0 %5129
        %5131 = vrot.lane.b32.xlu0 %v5048, 123
        %v5132 = vpop.permute.xlu0 %5131
        %5133 = vrot.lane.b32.xlu0 %v5049, 123
        %v5134 = vpop.permute.xlu0 %5133
        %5135 = vrot.lane.b32.xlu0 %v5050, 123
        %v5136 = vpop.permute.xlu0 %5135
        %5137 = vrot.lane.b32.xlu0 %v5051, 123
        %v5138 = vpop.permute.xlu0 %5137
        %5139 = vrot.lane.b32.xlu0 %v5052, 123
        %v5140 = vpop.permute.xlu0 %5139
        %5141 = vrot.lane.b32.xlu0 %v5053, 123
        %v5142 = vpop.permute.xlu0 %5141
        %5143 = vrot.lane.b32.xlu0 %v5054, 123
        %v5144 = vpop.permute.xlu0 %5143
        %v5175 = vadd.f32 %v4995, %v5086
        %v5176 = vadd.f32 %v4996, %v5088
        %v5177 = vadd.f32 %v4997, %v5090
        %v5178 = vadd.f32 %v4998, %v5092
        %v5179 = vadd.f32 %v4999, %v5094
        %v5180 = vadd.f32 %v5000, %v5096
        %v5181 = vadd.f32 %v5001, %v5098
        %v5182 = vadd.f32 %v5002, %v5100
        %v5183 = vadd.f32 %v5003, %v5102
        %v5184 = vadd.f32 %v5004, %v5104
        %v5185 = vadd.f32 %v5005, %v5106
        %v5186 = vadd.f32 %v5006, %v5108
        %v5187 = vadd.f32 %v5007, %v5110
        %v5188 = vadd.f32 %v5008, %v5112
        %v5189 = vadd.f32 %v5009, %v5114
        %v5190 = vadd.f32 %v5010, %v5116
        %v5191 = vadd.f32 %v5011, %v5118
        %v5192 = vadd.f32 %v5012, %v5120
        %v5193 = vadd.f32 %v5013, %v5122
        %v5194 = vadd.f32 %v5014, %v5124
        %v5195 = vadd.f32 %v5015, %v5126
        %v5196 = vadd.f32 %v5016, %v5128
        %v5197 = vadd.f32 %v5017, %v5130
        %v5198 = vadd.f32 %v5018, %v5132
        %v5199 = vadd.f32 %v5019, %v5134
        %v5200 = vadd.f32 %v5020, %v5136
        %v5201 = vadd.f32 %v5021, %v5138
        %v5202 = vadd.f32 %v5022, %v5140
        %v5203 = vadd.f32 %v5023, %v5142
        %v5204 = vadd.f32 %v5024, %v5144
        %5205 = vrot.lane.b32.xlu0 %v4845, 122
        %v5206 = vpop.permute.xlu0 %5205
        %5207 = vrot.lane.b32.xlu0 %v4846, 122
        %v5208 = vpop.permute.xlu0 %5207
        %5209 = vrot.lane.b32.xlu0 %v4847, 122
        %v5210 = vpop.permute.xlu0 %5209
        %5211 = vrot.lane.b32.xlu0 %v4848, 122
        %v5212 = vpop.permute.xlu0 %5211
        %5213 = vrot.lane.b32.xlu0 %v4849, 122
        %v5214 = vpop.permute.xlu0 %5213
        %5215 = vrot.lane.b32.xlu0 %v4850, 122
        %v5216 = vpop.permute.xlu0 %5215
        %5217 = vrot.lane.b32.xlu0 %v4851, 122
        %v5218 = vpop.permute.xlu0 %5217
        %5219 = vrot.lane.b32.xlu0 %v4852, 122
        %v5220 = vpop.permute.xlu0 %5219
        %5221 = vrot.lane.b32.xlu0 %v4853, 122
        %v5222 = vpop.permute.xlu0 %5221
        %5223 = vrot.lane.b32.xlu0 %v4854, 122
        %v5224 = vpop.permute.xlu0 %5223
        %5225 = vrot.lane.b32.xlu0 %v4855, 122
        %v5226 = vpop.permute.xlu0 %5225
        %5227 = vrot.lane.b32.xlu0 %v4856, 122
        %v5228 = vpop.permute.xlu0 %5227
        %5229 = vrot.lane.b32.xlu0 %v4857, 122
        %v5230 = vpop.permute.xlu0 %5229
        %5231 = vrot.lane.b32.xlu0 %v4858, 122
        %v5232 = vpop.permute.xlu0 %5231
        %5233 = vrot.lane.b32.xlu0 %v4859, 122
        %v5234 = vpop.permute.xlu0 %5233
        %5235 = vrot.lane.b32.xlu0 %v4860, 122
        %v5236 = vpop.permute.xlu0 %5235
        %5237 = vrot.lane.b32.xlu0 %v4861, 122
        %v5238 = vpop.permute.xlu0 %5237
        %5239 = vrot.lane.b32.xlu0 %v4862, 122
        %v5240 = vpop.permute.xlu0 %5239
        %5241 = vrot.lane.b32.xlu0 %v4863, 122
        %v5242 = vpop.permute.xlu0 %5241
        %5243 = vrot.lane.b32.xlu0 %v4864, 122
        %v5244 = vpop.permute.xlu0 %5243
        %5245 = vrot.lane.b32.xlu0 %v4865, 122
        %v5246 = vpop.permute.xlu0 %5245
        %5247 = vrot.lane.b32.xlu0 %v4866, 122
        %v5248 = vpop.permute.xlu0 %5247
        %5249 = vrot.lane.b32.xlu0 %v4867, 122
        %v5250 = vpop.permute.xlu0 %5249
        %5251 = vrot.lane.b32.xlu0 %v4868, 122
        %v5252 = vpop.permute.xlu0 %5251
        %5253 = vrot.lane.b32.xlu0 %v4869, 122
        %v5254 = vpop.permute.xlu0 %5253
        %5255 = vrot.lane.b32.xlu0 %v4870, 122
        %v5256 = vpop.permute.xlu0 %5255
        %5257 = vrot.lane.b32.xlu0 %v4871, 122
        %v5258 = vpop.permute.xlu0 %5257
        %5259 = vrot.lane.b32.xlu0 %v4872, 122
        %v5260 = vpop.permute.xlu0 %5259
        %5261 = vrot.lane.b32.xlu0 %v4873, 122
        %v5262 = vpop.permute.xlu0 %5261
        %5263 = vrot.lane.b32.xlu0 %v4874, 122
        %v5264 = vpop.permute.xlu0 %5263
        %v5295 = vadd.f32 %v5175, %v5206
        %v5296 = vadd.f32 %v5176, %v5208
        %v5297 = vadd.f32 %v5177, %v5210
        %v5298 = vadd.f32 %v5178, %v5212
        %v5299 = vadd.f32 %v5179, %v5214
        %v5300 = vadd.f32 %v5180, %v5216
        %v5301 = vadd.f32 %v5181, %v5218
        %v5302 = vadd.f32 %v5182, %v5220
        %v5303 = vadd.f32 %v5183, %v5222
        %v5304 = vadd.f32 %v5184, %v5224
        %v5305 = vadd.f32 %v5185, %v5226
        %v5306 = vadd.f32 %v5186, %v5228
        %v5307 = vadd.f32 %v5187, %v5230
        %v5308 = vadd.f32 %v5188, %v5232
        %v5309 = vadd.f32 %v5189, %v5234
        %v5310 = vadd.f32 %v5190, %v5236
        %v5311 = vadd.f32 %v5191, %v5238
        %v5312 = vadd.f32 %v5192, %v5240
        %v5313 = vadd.f32 %v5193, %v5242
        %v5314 = vadd.f32 %v5194, %v5244
        %v5315 = vadd.f32 %v5195, %v5246
        %v5316 = vadd.f32 %v5196, %v5248
        %v5317 = vadd.f32 %v5197, %v5250
        %v5318 = vadd.f32 %v5198, %v5252
        %v5319 = vadd.f32 %v5199, %v5254
        %v5320 = vadd.f32 %v5200, %v5256
        %v5321 = vadd.f32 %v5201, %v5258
        %v5322 = vadd.f32 %v5202, %v5260
        %v5323 = vadd.f32 %v5203, %v5262
        %v5324 = vadd.f32 %v5204, %v5264
        %5325 = vrot.lane.b32.xlu0 %v4665, 121
        %v5326 = vpop.permute.xlu0 %5325
        %5327 = vrot.lane.b32.xlu0 %v4666, 121
        %v5328 = vpop.permute.xlu0 %5327
        %5329 = vrot.lane.b32.xlu0 %v4667, 121
        %v5330 = vpop.permute.xlu0 %5329
        %5331 = vrot.lane.b32.xlu0 %v4668, 121
        %v5332 = vpop.permute.xlu0 %5331
        %5333 = vrot.lane.b32.xlu0 %v4669, 121
        %v5334 = vpop.permute.xlu0 %5333
        %5335 = vrot.lane.b32.xlu0 %v4670, 121
        %v5336 = vpop.permute.xlu0 %5335
        %5337 = vrot.lane.b32.xlu0 %v4671, 121
        %v5338 = vpop.permute.xlu0 %5337
        %5339 = vrot.lane.b32.xlu0 %v4672, 121
        %v5340 = vpop.permute.xlu0 %5339
        %5341 = vrot.lane.b32.xlu0 %v4673, 121
        %v5342 = vpop.permute.xlu0 %5341
        %5343 = vrot.lane.b32.xlu0 %v4674, 121
        %v5344 = vpop.permute.xlu0 %5343
        %5345 = vrot.lane.b32.xlu0 %v4675, 121
        %v5346 = vpop.permute.xlu0 %5345
        %5347 = vrot.lane.b32.xlu0 %v4676, 121
        %v5348 = vpop.permute.xlu0 %5347
        %5349 = vrot.lane.b32.xlu0 %v4677, 121
        %v5350 = vpop.permute.xlu0 %5349
        %5351 = vrot.lane.b32.xlu0 %v4678, 121
        %v5352 = vpop.permute.xlu0 %5351
        %5353 = vrot.lane.b32.xlu0 %v4679, 121
        %v5354 = vpop.permute.xlu0 %5353
        %5355 = vrot.lane.b32.xlu0 %v4680, 121
        %v5356 = vpop.permute.xlu0 %5355
        %5357 = vrot.lane.b32.xlu0 %v4681, 121
        %v5358 = vpop.permute.xlu0 %5357
        %5359 = vrot.lane.b32.xlu0 %v4682, 121
        %v5360 = vpop.permute.xlu0 %5359
        %5361 = vrot.lane.b32.xlu0 %v4683, 121
        %v5362 = vpop.permute.xlu0 %5361
        %5363 = vrot.lane.b32.xlu0 %v4684, 121
        %v5364 = vpop.permute.xlu0 %5363
        %5365 = vrot.lane.b32.xlu0 %v4685, 121
        %v5366 = vpop.permute.xlu0 %5365
        %5367 = vrot.lane.b32.xlu0 %v4686, 121
        %v5368 = vpop.permute.xlu0 %5367
        %5369 = vrot.lane.b32.xlu0 %v4687, 121
        %v5370 = vpop.permute.xlu0 %5369
        %5371 = vrot.lane.b32.xlu0 %v4688, 121
        %v5372 = vpop.permute.xlu0 %5371
        %5373 = vrot.lane.b32.xlu0 %v4689, 121
        %v5374 = vpop.permute.xlu0 %5373
        %5375 = vrot.lane.b32.xlu0 %v4690, 121
        %v5376 = vpop.permute.xlu0 %5375
        %5377 = vrot.lane.b32.xlu0 %v4691, 121
        %v5378 = vpop.permute.xlu0 %5377
        %5379 = vrot.lane.b32.xlu0 %v4692, 121
        %v5380 = vpop.permute.xlu0 %5379
        %5381 = vrot.lane.b32.xlu0 %v4693, 121
        %v5382 = vpop.permute.xlu0 %5381
        %5383 = vrot.lane.b32.xlu0 %v4694, 121
        %v5384 = vpop.permute.xlu0 %5383
        %v5415 = vadd.f32 %v5295, %v5326
        %v5416 = vadd.f32 %v5296, %v5328
        %v5417 = vadd.f32 %v5297, %v5330
        %v5418 = vadd.f32 %v5298, %v5332
        %v5419 = vadd.f32 %v5299, %v5334
        %v5420 = vadd.f32 %v5300, %v5336
        %v5421 = vadd.f32 %v5301, %v5338
        %v5422 = vadd.f32 %v5302, %v5340
        %v5423 = vadd.f32 %v5303, %v5342
        %v5424 = vadd.f32 %v5304, %v5344
        %v5425 = vadd.f32 %v5305, %v5346
        %v5426 = vadd.f32 %v5306, %v5348
        %v5427 = vadd.f32 %v5307, %v5350
        %v5428 = vadd.f32 %v5308, %v5352
        %v5429 = vadd.f32 %v5309, %v5354
        %v5430 = vadd.f32 %v5310, %v5356
        %v5431 = vadd.f32 %v5311, %v5358
        %v5432 = vadd.f32 %v5312, %v5360
        %v5433 = vadd.f32 %v5313, %v5362
        %v5434 = vadd.f32 %v5314, %v5364
        %v5435 = vadd.f32 %v5315, %v5366
        %v5436 = vadd.f32 %v5316, %v5368
        %v5437 = vadd.f32 %v5317, %v5370
        %v5438 = vadd.f32 %v5318, %v5372
        %v5439 = vadd.f32 %v5319, %v5374
        %v5440 = vadd.f32 %v5320, %v5376
        %v5441 = vadd.f32 %v5321, %v5378
        %v5442 = vadd.f32 %v5322, %v5380
        %v5443 = vadd.f32 %v5323, %v5382
        %v5444 = vadd.f32 %v5324, %v5384
        %5445 = vrot.lane.b32.xlu0 %v4485, 120
        %v5446 = vpop.permute.xlu0 %5445
        %5447 = vrot.lane.b32.xlu0 %v4486, 120
        %v5448 = vpop.permute.xlu0 %5447
        %5449 = vrot.lane.b32.xlu0 %v4487, 120
        %v5450 = vpop.permute.xlu0 %5449
        %5451 = vrot.lane.b32.xlu0 %v4488, 120
        %v5452 = vpop.permute.xlu0 %5451
        %5453 = vrot.lane.b32.xlu0 %v4489, 120
        %v5454 = vpop.permute.xlu0 %5453
        %5455 = vrot.lane.b32.xlu0 %v4490, 120
        %v5456 = vpop.permute.xlu0 %5455
        %5457 = vrot.lane.b32.xlu0 %v4491, 120
        %v5458 = vpop.permute.xlu0 %5457
        %5459 = vrot.lane.b32.xlu0 %v4492, 120
        %v5460 = vpop.permute.xlu0 %5459
        %5461 = vrot.lane.b32.xlu0 %v4493, 120
        %v5462 = vpop.permute.xlu0 %5461
        %5463 = vrot.lane.b32.xlu0 %v4494, 120
        %v5464 = vpop.permute.xlu0 %5463
        %5465 = vrot.lane.b32.xlu0 %v4495, 120
        %v5466 = vpop.permute.xlu0 %5465
        %5467 = vrot.lane.b32.xlu0 %v4496, 120
        %v5468 = vpop.permute.xlu0 %5467
        %5469 = vrot.lane.b32.xlu0 %v4497, 120
        %v5470 = vpop.permute.xlu0 %5469
        %5471 = vrot.lane.b32.xlu0 %v4498, 120
        %v5472 = vpop.permute.xlu0 %5471
        %5473 = vrot.lane.b32.xlu0 %v4499, 120
        %v5474 = vpop.permute.xlu0 %5473
        %5475 = vrot.lane.b32.xlu0 %v4500, 120
        %v5476 = vpop.permute.xlu0 %5475
        %5477 = vrot.lane.b32.xlu0 %v4501, 120
        %v5478 = vpop.permute.xlu0 %5477
        %5479 = vrot.lane.b32.xlu0 %v4502, 120
        %v5480 = vpop.permute.xlu0 %5479
        %5481 = vrot.lane.b32.xlu0 %v4503, 120
        %v5482 = vpop.permute.xlu0 %5481
        %5483 = vrot.lane.b32.xlu0 %v4504, 120
        %v5484 = vpop.permute.xlu0 %5483
        %5485 = vrot.lane.b32.xlu0 %v4505, 120
        %v5486 = vpop.permute.xlu0 %5485
        %5487 = vrot.lane.b32.xlu0 %v4506, 120
        %v5488 = vpop.permute.xlu0 %5487
        %5489 = vrot.lane.b32.xlu0 %v4507, 120
        %v5490 = vpop.permute.xlu0 %5489
        %5491 = vrot.lane.b32.xlu0 %v4508, 120
        %v5492 = vpop.permute.xlu0 %5491
        %5493 = vrot.lane.b32.xlu0 %v4509, 120
        %v5494 = vpop.permute.xlu0 %5493
        %5495 = vrot.lane.b32.xlu0 %v4510, 120
        %v5496 = vpop.permute.xlu0 %5495
        %5497 = vrot.lane.b32.xlu0 %v4511, 120
        %v5498 = vpop.permute.xlu0 %5497
        %5499 = vrot.lane.b32.xlu0 %v4512, 120
        %v5500 = vpop.permute.xlu0 %5499
        %5501 = vrot.lane.b32.xlu0 %v4513, 120
        %v5502 = vpop.permute.xlu0 %5501
        %5503 = vrot.lane.b32.xlu0 %v4514, 120
        %v5504 = vpop.permute.xlu0 %5503
        %v5535 = vadd.f32 %v5415, %v5446
        %v5536 = vadd.f32 %v5416, %v5448
        %v5537 = vadd.f32 %v5417, %v5450
        %v5538 = vadd.f32 %v5418, %v5452
        %v5539 = vadd.f32 %v5419, %v5454
        %v5540 = vadd.f32 %v5420, %v5456
        %v5541 = vadd.f32 %v5421, %v5458
        %v5542 = vadd.f32 %v5422, %v5460
        %v5543 = vadd.f32 %v5423, %v5462
        %v5544 = vadd.f32 %v5424, %v5464
        %v5545 = vadd.f32 %v5425, %v5466
        %v5546 = vadd.f32 %v5426, %v5468
        %v5547 = vadd.f32 %v5427, %v5470
        %v5548 = vadd.f32 %v5428, %v5472
        %v5549 = vadd.f32 %v5429, %v5474
        %v5550 = vadd.f32 %v5430, %v5476
        %v5551 = vadd.f32 %v5431, %v5478
        %v5552 = vadd.f32 %v5432, %v5480
        %v5553 = vadd.f32 %v5433, %v5482
        %v5554 = vadd.f32 %v5434, %v5484
        %v5555 = vadd.f32 %v5435, %v5486
        %v5556 = vadd.f32 %v5436, %v5488
        %v5557 = vadd.f32 %v5437, %v5490
        %v5558 = vadd.f32 %v5438, %v5492
        %v5559 = vadd.f32 %v5439, %v5494
        %v5560 = vadd.f32 %v5440, %v5496
        %v5561 = vadd.f32 %v5441, %v5498
        %v5562 = vadd.f32 %v5442, %v5500
        %v5563 = vadd.f32 %v5443, %v5502
        %v5564 = vadd.f32 %v5444, %v5504
        %5565 = vrot.lane.b32.xlu0 %v4305, 119
        %v5566 = vpop.permute.xlu0 %5565
        %5567 = vrot.lane.b32.xlu0 %v4306, 119
        %v5568 = vpop.permute.xlu0 %5567
        %5569 = vrot.lane.b32.xlu0 %v4307, 119
        %v5570 = vpop.permute.xlu0 %5569
        %5571 = vrot.lane.b32.xlu0 %v4308, 119
        %v5572 = vpop.permute.xlu0 %5571
        %5573 = vrot.lane.b32.xlu0 %v4309, 119
        %v5574 = vpop.permute.xlu0 %5573
        %5575 = vrot.lane.b32.xlu0 %v4310, 119
        %v5576 = vpop.permute.xlu0 %5575
        %5577 = vrot.lane.b32.xlu0 %v4311, 119
        %v5578 = vpop.permute.xlu0 %5577
        %5579 = vrot.lane.b32.xlu0 %v4312, 119
        %v5580 = vpop.permute.xlu0 %5579
        %5581 = vrot.lane.b32.xlu0 %v4313, 119
        %v5582 = vpop.permute.xlu0 %5581
        %5583 = vrot.lane.b32.xlu0 %v4314, 119
        %v5584 = vpop.permute.xlu0 %5583
        %5585 = vrot.lane.b32.xlu0 %v4315, 119
        %v5586 = vpop.permute.xlu0 %5585
        %5587 = vrot.lane.b32.xlu0 %v4316, 119
        %v5588 = vpop.permute.xlu0 %5587
        %5589 = vrot.lane.b32.xlu0 %v4317, 119
        %v5590 = vpop.permute.xlu0 %5589
        %5591 = vrot.lane.b32.xlu0 %v4318, 119
        %v5592 = vpop.permute.xlu0 %5591
        %5593 = vrot.lane.b32.xlu0 %v4319, 119
        %v5594 = vpop.permute.xlu0 %5593
        %5595 = vrot.lane.b32.xlu0 %v4320, 119
        %v5596 = vpop.permute.xlu0 %5595
        %5597 = vrot.lane.b32.xlu0 %v4321, 119
        %v5598 = vpop.permute.xlu0 %5597
        %5599 = vrot.lane.b32.xlu0 %v4322, 119
        %v5600 = vpop.permute.xlu0 %5599
        %5601 = vrot.lane.b32.xlu0 %v4323, 119
        %v5602 = vpop.permute.xlu0 %5601
        %5603 = vrot.lane.b32.xlu0 %v4324, 119
        %v5604 = vpop.permute.xlu0 %5603
        %5605 = vrot.lane.b32.xlu0 %v4325, 119
        %v5606 = vpop.permute.xlu0 %5605
        %5607 = vrot.lane.b32.xlu0 %v4326, 119
        %v5608 = vpop.permute.xlu0 %5607
        %5609 = vrot.lane.b32.xlu0 %v4327, 119
        %v5610 = vpop.permute.xlu0 %5609
        %5611 = vrot.lane.b32.xlu0 %v4328, 119
        %v5612 = vpop.permute.xlu0 %5611
        %5613 = vrot.lane.b32.xlu0 %v4329, 119
        %v5614 = vpop.permute.xlu0 %5613
        %5615 = vrot.lane.b32.xlu0 %v4330, 119
        %v5616 = vpop.permute.xlu0 %5615
        %5617 = vrot.lane.b32.xlu0 %v4331, 119
        %v5618 = vpop.permute.xlu0 %5617
        %5619 = vrot.lane.b32.xlu0 %v4332, 119
        %v5620 = vpop.permute.xlu0 %5619
        %5621 = vrot.lane.b32.xlu0 %v4333, 119
        %v5622 = vpop.permute.xlu0 %5621
        %5623 = vrot.lane.b32.xlu0 %v4334, 119
        %v5624 = vpop.permute.xlu0 %5623
        %v5655 = vadd.f32 %v5535, %v5566
        %v5656 = vadd.f32 %v5536, %v5568
        %v5657 = vadd.f32 %v5537, %v5570
        %v5658 = vadd.f32 %v5538, %v5572
        %v5659 = vadd.f32 %v5539, %v5574
        %v5660 = vadd.f32 %v5540, %v5576
        %v5661 = vadd.f32 %v5541, %v5578
        %v5662 = vadd.f32 %v5542, %v5580
        %v5663 = vadd.f32 %v5543, %v5582
        %v5664 = vadd.f32 %v5544, %v5584
        %v5665 = vadd.f32 %v5545, %v5586
        %v5666 = vadd.f32 %v5546, %v5588
        %v5667 = vadd.f32 %v5547, %v5590
        %v5668 = vadd.f32 %v5548, %v5592
        %v5669 = vadd.f32 %v5549, %v5594
        %v5670 = vadd.f32 %v5550, %v5596
        %v5671 = vadd.f32 %v5551, %v5598
        %v5672 = vadd.f32 %v5552, %v5600
        %v5673 = vadd.f32 %v5553, %v5602
        %v5674 = vadd.f32 %v5554, %v5604
        %v5675 = vadd.f32 %v5555, %v5606
        %v5676 = vadd.f32 %v5556, %v5608
        %v5677 = vadd.f32 %v5557, %v5610
        %v5678 = vadd.f32 %v5558, %v5612
        %v5679 = vadd.f32 %v5559, %v5614
        %v5680 = vadd.f32 %v5560, %v5616
        %v5681 = vadd.f32 %v5561, %v5618
        %v5682 = vadd.f32 %v5562, %v5620
        %v5683 = vadd.f32 %v5563, %v5622
        %v5684 = vadd.f32 %v5564, %v5624
        %5715 = vrot.lane.b32.xlu0 %v4275, 118
        %v5716 = vpop.permute.xlu0 %5715
        %5717 = vrot.lane.b32.xlu0 %v4276, 118
        %v5718 = vpop.permute.xlu0 %5717
        %5719 = vrot.lane.b32.xlu0 %v4277, 118
        %v5720 = vpop.permute.xlu0 %5719
        %5721 = vrot.lane.b32.xlu0 %v4278, 118
        %v5722 = vpop.permute.xlu0 %5721
        %5723 = vrot.lane.b32.xlu0 %v4279, 118
        %v5724 = vpop.permute.xlu0 %5723
        %5725 = vrot.lane.b32.xlu0 %v4280, 118
        %v5726 = vpop.permute.xlu0 %5725
        %5727 = vrot.lane.b32.xlu0 %v4281, 118
        %v5728 = vpop.permute.xlu0 %5727
        %5729 = vrot.lane.b32.xlu0 %v4282, 118
        %v5730 = vpop.permute.xlu0 %5729
        %5731 = vrot.lane.b32.xlu0 %v4283, 118
        %v5732 = vpop.permute.xlu0 %5731
        %5733 = vrot.lane.b32.xlu0 %v4284, 118
        %v5734 = vpop.permute.xlu0 %5733
        %5735 = vrot.lane.b32.xlu0 %v4285, 118
        %v5736 = vpop.permute.xlu0 %5735
        %5737 = vrot.lane.b32.xlu0 %v4286, 118
        %v5738 = vpop.permute.xlu0 %5737
        %5739 = vrot.lane.b32.xlu0 %v4287, 118
        %v5740 = vpop.permute.xlu0 %5739
        %5741 = vrot.lane.b32.xlu0 %v4288, 118
        %v5742 = vpop.permute.xlu0 %5741
        %5743 = vrot.lane.b32.xlu0 %v4289, 118
        %v5744 = vpop.permute.xlu0 %5743
        %5745 = vrot.lane.b32.xlu0 %v4290, 118
        %v5746 = vpop.permute.xlu0 %5745
        %5747 = vrot.lane.b32.xlu0 %v4291, 118
        %v5748 = vpop.permute.xlu0 %5747
        %5749 = vrot.lane.b32.xlu0 %v4292, 118
        %v5750 = vpop.permute.xlu0 %5749
        %5751 = vrot.lane.b32.xlu0 %v4293, 118
        %v5752 = vpop.permute.xlu0 %5751
        %5753 = vrot.lane.b32.xlu0 %v4294, 118
        %v5754 = vpop.permute.xlu0 %5753
        %5755 = vrot.lane.b32.xlu0 %v4295, 118
        %v5756 = vpop.permute.xlu0 %5755
        %5757 = vrot.lane.b32.xlu0 %v4296, 118
        %v5758 = vpop.permute.xlu0 %5757
        %5759 = vrot.lane.b32.xlu0 %v4297, 118
        %v5760 = vpop.permute.xlu0 %5759
        %5761 = vrot.lane.b32.xlu0 %v4298, 118
        %v5762 = vpop.permute.xlu0 %5761
        %5763 = vrot.lane.b32.xlu0 %v4299, 118
        %v5764 = vpop.permute.xlu0 %5763
        %5765 = vrot.lane.b32.xlu0 %v4300, 118
        %v5766 = vpop.permute.xlu0 %5765
        %5767 = vrot.lane.b32.xlu0 %v4301, 118
        %v5768 = vpop.permute.xlu0 %5767
        %5769 = vrot.lane.b32.xlu0 %v4302, 118
        %v5770 = vpop.permute.xlu0 %5769
        %5771 = vrot.lane.b32.xlu0 %v4303, 118
        %v5772 = vpop.permute.xlu0 %5771
        %5773 = vrot.lane.b32.xlu0 %v4304, 118
        %v5774 = vpop.permute.xlu0 %5773
        %v5805 = vadd.f32 %v5655, %v5716
        %v5806 = vadd.f32 %v5656, %v5718
        %v5807 = vadd.f32 %v5657, %v5720
        %v5808 = vadd.f32 %v5658, %v5722
        %v5809 = vadd.f32 %v5659, %v5724
        %v5810 = vadd.f32 %v5660, %v5726
        %v5811 = vadd.f32 %v5661, %v5728
        %v5812 = vadd.f32 %v5662, %v5730
        %v5813 = vadd.f32 %v5663, %v5732
        %v5814 = vadd.f32 %v5664, %v5734
        %v5815 = vadd.f32 %v5665, %v5736
        %v5816 = vadd.f32 %v5666, %v5738
        %v5817 = vadd.f32 %v5667, %v5740
        %v5818 = vadd.f32 %v5668, %v5742
        %v5819 = vadd.f32 %v5669, %v5744
        %v5820 = vadd.f32 %v5670, %v5746
        %v5821 = vadd.f32 %v5671, %v5748
        %v5822 = vadd.f32 %v5672, %v5750
        %v5823 = vadd.f32 %v5673, %v5752
        %v5824 = vadd.f32 %v5674, %v5754
        %v5825 = vadd.f32 %v5675, %v5756
        %v5826 = vadd.f32 %v5676, %v5758
        %v5827 = vadd.f32 %v5677, %v5760
        %v5828 = vadd.f32 %v5678, %v5762
        %v5829 = vadd.f32 %v5679, %v5764
        %v5830 = vadd.f32 %v5680, %v5766
        %v5831 = vadd.f32 %v5681, %v5768
        %v5832 = vadd.f32 %v5682, %v5770
        %v5833 = vadd.f32 %v5683, %v5772
        %v5834 = vadd.f32 %v5684, %v5774
        %v5835 = vmul.f32 %v5805, %v5805
        %v5836 = vmul.f32 %v5806, %v5806
        %v5837 = vmul.f32 %v5807, %v5807
        %v5838 = vmul.f32 %v5808, %v5808
        %v5839 = vmul.f32 %v5809, %v5809
        %v5840 = vmul.f32 %v5810, %v5810
        %v5841 = vmul.f32 %v5811, %v5811
        %v5842 = vmul.f32 %v5812, %v5812
        %v5843 = vmul.f32 %v5813, %v5813
        %v5844 = vmul.f32 %v5814, %v5814
        %v5845 = vmul.f32 %v5815, %v5815
        %v5846 = vmul.f32 %v5816, %v5816
        %v5847 = vmul.f32 %v5805, %v5811
        %v5848 = vmul.f32 %v5806, %v5812
        %v5849 = vmul.f32 %v5807, %v5813
        %v5850 = vmul.f32 %v5808, %v5814
        %v5851 = vmul.f32 %v5809, %v5815
        %v5852 = vmul.f32 %v5810, %v5816
        %v5853 = vsub.f32 %v5817, %v5835
        %v5854 = vsub.f32 %v5818, %v5836
        %v5855 = vsub.f32 %v5819, %v5837
        %v5856 = vsub.f32 %v5820, %v5838
        %v5857 = vsub.f32 %v5821, %v5839
        %v5858 = vsub.f32 %v5822, %v5840
        %v5859 = vsub.f32 %v5823, %v5841
        %v5860 = vsub.f32 %v5824, %v5842
        %v5861 = vsub.f32 %v5825, %v5843
        %v5862 = vsub.f32 %v5826, %v5844
        %v5863 = vsub.f32 %v5827, %v5845
        %v5864 = vsub.f32 %v5828, %v5846
        %v5865 = vsub.f32 %v5829, %v5847
        %v5866 = vsub.f32 %v5830, %v5848
        %v5867 = vsub.f32 %v5831, %v5849
        %v5868 = vsub.f32 %v5832, %v5850
        %v5869 = vsub.f32 %v5833, %v5851
        %v5870 = vsub.f32 %v5834, %v5852
        %v5871 = vmul.f32 %v5847, 2.0
        %v5872 = vmul.f32 %v5848, 2.0
        %v5873 = vmul.f32 %v5849, 2.0
        %v5874 = vmul.f32 %v5850, 2.0
        %v5875 = vmul.f32 %v5851, 2.0
        %v5876 = vmul.f32 %v5852, 2.0
        %v5877 = vadd.f32 %v5871, 0.0004
        %v5878 = vadd.f32 %v5872, 0.0004
        %v5879 = vadd.f32 %v5873, 0.0004
        %v5880 = vadd.f32 %v5874, 0.0004
        %v5881 = vadd.f32 %v5875, 0.0004
        %v5882 = vadd.f32 %v5876, 0.0004
        %v5883 = vmul.f32 %v5865, 2.0
        %v5884 = vmul.f32 %v5866, 2.0
        %v5885 = vmul.f32 %v5867, 2.0
        %v5886 = vmul.f32 %v5868, 2.0
        %v5887 = vmul.f32 %v5869, 2.0
        %v5888 = vmul.f32 %v5870, 2.0
        %v5889 = vadd.f32 %v5883, 0.0036
        %v5890 = vadd.f32 %v5884, 0.0036
        %v5891 = vadd.f32 %v5885, 0.0036
        %v5892 = vadd.f32 %v5886, 0.0036
        %v5893 = vadd.f32 %v5887, 0.0036
        %v5894 = vadd.f32 %v5888, 0.0036
        %v5895 = vmul.f32 %v5877, %v5889
        %v5896 = vmul.f32 %v5878, %v5890
        %v5897 = vmul.f32 %v5879, %v5891
        %v5898 = vmul.f32 %v5880, %v5892
        %v5899 = vmul.f32 %v5881, %v5893
        %v5900 = vmul.f32 %v5882, %v5894
        %v5901 = vadd.f32 %v5835, %v5841
        %v5902 = vadd.f32 %v5836, %v5842
        %v5903 = vadd.f32 %v5837, %v5843
        %v5904 = vadd.f32 %v5838, %v5844
        %v5905 = vadd.f32 %v5839, %v5845
        %v5906 = vadd.f32 %v5840, %v5846
        %v5907 = vadd.f32 %v5901, 0.0004
        %v5908 = vadd.f32 %v5902, 0.0004
        %v5909 = vadd.f32 %v5903, 0.0004
        %v5910 = vadd.f32 %v5904, 0.0004
        %v5911 = vadd.f32 %v5905, 0.0004
        %v5912 = vadd.f32 %v5906, 0.0004
        %v5913 = vadd.f32 %v5853, %v5859
        %v5914 = vadd.f32 %v5854, %v5860
        %v5915 = vadd.f32 %v5855, %v5861
        %v5916 = vadd.f32 %v5856, %v5862
        %v5917 = vadd.f32 %v5857, %v5863
        %v5918 = vadd.f32 %v5858, %v5864
        %v5919 = vadd.f32 %v5913, 0.0036
        %v5920 = vadd.f32 %v5914, 0.0036
        %v5921 = vadd.f32 %v5915, 0.0036
        %v5922 = vadd.f32 %v5916, 0.0036
        %v5923 = vadd.f32 %v5917, 0.0036
        %v5924 = vadd.f32 %v5918, 0.0036
        %v5925 = vmul.f32 %v5907, %v5919
        %v5926 = vmul.f32 %v5908, %v5920
        %v5927 = vmul.f32 %v5909, %v5921
        %v5928 = vmul.f32 %v5910, %v5922
        %v5929 = vmul.f32 %v5911, %v5923
        %v5930 = vmul.f32 %v5912, %v5924
        %v5931 = vrcp.pop %v5925
        %v5932 = vmul.f32 %v5895, %v5931
        %v5933 = vrcp.pop %v5926
        %v5934 = vmul.f32 %v5896, %v5933
        %v5935 = vrcp.pop %v5927
        %v5936 = vmul.f32 %v5897, %v5935
        %v5937 = vrcp.pop %v5928
        %v5938 = vmul.f32 %v5898, %v5937
        %v5939 = vrcp.pop %v5929
        %v5940 = vmul.f32 %v5899, %v5939
        %v5941 = vrcp.pop %v5930
        %v5942 = vmul.f32 %v5900, %v5941
        %vm5943 = vcmask 963584
        %v5944 = vsel %vm5943, %v5932, 0.0
        %v5945 = vsel %vm5943, %v5934, 0.0
        %v5946 = vadd.f32 %v5944, %v5945
        %v5947 = vsel %vm5943, %v5936, 0.0
        %v5948 = vadd.f32 %v5946, %v5947
        %v5949 = vsel %vm5943, %v5938, 0.0
        %v5950 = vadd.f32 %v5948, %v5949
        %v5951 = vsel %vm5943, %v5940, 0.0
        %v5952 = vadd.f32 %v5950, %v5951
        %v5953 = vsel %vm5943, %v5942, 0.0
        %v5954 = vadd.f32 %v5952, %v5953
        %5955 = vadd.xlane.f32.xlu0 %v5954
        %v5956 = vpop.xlane.xlu0 %5955
        %v5957 = vrot.slane %v5956, 4
        %v5958 = vadd.f32 %v5956, %v5957
        %v5959 = vrot.slane %v5958, 2
        %v5960 = vadd.f32 %v5958, %v5959
        %v5961 = vrot.slane %v5960, 1
        %v5962 = vadd.f32 %v5960, %v5961
        %s5963 = vtos %v5962
        %v5964 = vlaneseq
        %v5965 = vshrl.u32 %v5964, 7
        %vm5966 = vcmp.eq.s32.totalorder %v5965, 0
        %v5967 = vstv %s369
        %v5968 = vsel %vm5966, %v5967, 0.0
        %vm5969 = vcmp.eq.s32.totalorder %v5965, 1
        %v5970 = vstv %s467
        %v5971 = vsel %vm5969, %v5970, 0.0
        %v5972 = vadd.f32 %v5968, %v5971
        %vm5973 = vcmp.eq.s32.totalorder %v5965, 2
        %v5974 = vstv %s813
        %v5975 = vsel %vm5973, %v5974, 0.0
        %v5976 = vadd.f32 %v5972, %v5975
        %vm5977 = vcmp.eq.s32.totalorder %v5965, 3
        %v5978 = vstv %s1174
        %v5979 = vsel %vm5977, %v5978, 0.0
        %v5980 = vadd.f32 %v5976, %v5979
        %vm5981 = vcmp.eq.s32.totalorder %v5965, 4
        %v5982 = vstv %s5963
        %v5983 = vsel %vm5981, %v5982, 0.0
        %v5984 = vadd.f32 %v5980, %v5983
        %5985 = vst [vmem:[%s201] sm:$0xff] %v5984
        %s5986 = sand.u32 %s82, 1
        %s5987 = scalar_lea.sflag [#allocation4], %s5986
        %s5988 = sand.u32 %s82, 1
        %s5989 = smul.addr %s5988, 8
        %s5990 = scalar_lea.vmem [#allocation7], %s5989
        // Predicated region
        $region37: #{tpu_custom_call.1} parent=27 // pred_check
          %p5991 = pneg %p92
        $region38: #{tpu_custom_call.1} parent=27 // pred_check_branch
          %5993 = sbr.rel (%p5991) target = $region40
        $region39: #{tpu_custom_call.1} parent=27 // pred_region
          %s5995 = ssub.s32 128, 128
          %5996 = vsyncadd %s5987, %s5995
          %s5997 = smul.addr %s22, 128
          %s5998 = scalar_lea.hbm %s2, %s5997
          %s6000 = sshll.u32 %s5990, 4
          %s6001 = int_to_ptr.vmem [resolvable:$true] %s6000
          %6003 = dma.vmem_to_hbm [thread:$0]  %s6001, 128, %s5998, %s5987
        $region40: #{tpu_custom_call.1} parent=27 // pred_fallthru
          _
      $region28: #{tpu_custom_call.1} parent=5 // pred_fallthru
        _
      %p6004 = scmp.le.s32.totalorder 2, %s17
      // Predicated region
      $region41: #{tpu_custom_call.1} parent=5 // pred_check
        %p6005 = pneg %p6004
      $region42: #{tpu_custom_call.1} parent=5 // pred_check_branch
        %6007 = sbr.rel (%p6005) target = $region44
      $region43: #{tpu_custom_call.1} parent=5 // pred_region
        %s6008 = ssub.s32 %s17, 2
        // Predicated region
        $region45: #{tpu_custom_call.1} parent=43 // pred_check
          %p6009 = pneg %p98
        $region46: #{tpu_custom_call.1} parent=43 // pred_check_branch
          %6011 = sbr.rel (%p6009) target = $region48
        $region47: #{tpu_custom_call.1} parent=43 // pred_region
          %s6012 = sand.u32 %s83, 1
          %s6013 = scalar_lea.sflag [#allocation4], %s6012
          %s6014 = sand.u32 %s83, 1
          %s6015 = smul.addr %s6014, 8
          %s6016 = scalar_lea.vmem [#allocation7], %s6015
          %6017 = dma.done %s6013, 128
        $region48: #{tpu_custom_call.1} parent=43 // pred_fallthru
          _
      $region44: #{tpu_custom_call.1} parent=5 // pred_fallthru
        _
    $region6: #{tpu_custom_call.1} parent=1 // loop_footer
      %s21 = sadd.s32 1, %s17
    $region7: #{tpu_custom_call.1} parent=1 // loop_footer_branch
      %16 = sbr.rel target = $region3
    $region8: #{tpu_custom_call.1} parent=1 // loop_exit
      _
    %6018 = vsyncpa [#allocation3], 1
    %s6019 = scalar_lea.sflag [#allocation3], 1
    %6020 = vsyncpa %s6019, 1
    %6021 = vsyncpa [#allocation6], 1
    %s6022 = scalar_lea.sflag [#allocation6], 1
    %6023 = vsyncpa %s6022, 1
    %6024 = vsyncpa [#allocation4], 1
    %s6025 = scalar_lea.sflag [#allocation4], 1
    %6026 = vsyncpa %s6025, 1

</llo_original>
